<compile_context>
chip_gen: v7x
topology: tpu7x:2x2x1
jax: 0.10.0
libtpu: 0.0.40
codegen_flags: <defaults>
</compile_context>

<pallas_src>
import jax
import jax.numpy as jnp
from jax import lax
from jax.experimental import pallas as pl
from jax.experimental.pallas import tpu as pltpu

LEAKY_SLOPE = 0.01
BN_EPS = 1e-5
_VMEM_LIMIT = 32 * 1024 * 1024      # explicit scoped-VMEM cap (v7x has only 64 MiB / TC)


def _leaky_relu(x):
    return jnp.where(x > 0, x, LEAKY_SLOPE * x)


def _choose_tile_h(H, requested=None, *, row_bytes=1, budget_bytes=8 << 20):
    """Largest divisor of H whose (double-buffered in+out) row tile fits the VMEM budget."""
    if requested is None:
        requested = max(1, budget_bytes // max(int(row_bytes), 1))
    requested = int(max(1, min(requested, H)))
    for t in range(requested, 0, -1):
        if H % t == 0:
            return t
    return 1


# ---------------------------------------------------------------------------
# Fused DepthwiseSeparableConv layer:
#   depthwise 3x3 + BN + LeakyReLU  ->  pointwise 1x1 + BN + LeakyReLU
# ---------------------------------------------------------------------------
def fused_dwsep_layer(x, dw_w, dw_sc, dw_sh, pw_w, pw_sc, pw_sh, *, tile_h=None):
    """x: (N, H, W, Cin) f32 NHWC -> (N, H, W, Cout) f32 NHWC.

    dw_w: (Cin, 3, 3) depthwise taps (PyTorch layout); dw_sc/dw_sh: (Cin,) fused BN.
    pw_w: (Cin, Cout) pointwise weight;                 pw_sc/pw_sh: (Cout,) fused BN.
    """
    N, H, W, Cin = x.shape
    Cout = pw_w.shape[1]
    row_bytes = 4 * W * (Cin + Cout) * 4          # f32 in+out rows, double buffered
    th = _choose_tile_h(H, tile_h, row_bytes=row_bytes)
    n_tiles = H // th

    # Channels-on-lanes parameter layout (VMEM rows, no 2-D SMEM tables).
    wdw = jnp.transpose(dw_w.reshape(Cin, 9), (1, 0)).astype(jnp.float32)   # (9, Cin)
    dwsc = dw_sc.reshape(1, Cin).astype(jnp.float32)
    dwsh = dw_sh.reshape(1, Cin).astype(jnp.float32)
    wpw = pw_w.astype(jnp.bfloat16)                                         # MXU operand
    pwsc = pw_sc.reshape(1, Cout).astype(jnp.float32)
    pwsh = pw_sh.reshape(1, Cout).astype(jnp.float32)

    def kernel(top_ref, mid_ref, bot_ref, wdw_ref, dwsc_ref, dwsh_ref,
               wpw_ref, pwsc_ref, pwsh_ref, o_ref):
        i = pl.program_id(1)
        # 1-px zero padding: halo rows arrive edge-clamped from HBM; zero them at H edges.
        top = jnp.where(i == 0, 0.0, top_ref[...])                        # (1, W, Cin)
        bot = jnp.where(i == pl.num_programs(1) - 1, 0.0, bot_ref[...])   # (1, W, Cin)
        xh = jnp.concatenate([top, mid_ref[...], bot], axis=0)            # (th+2, W, Cin)
        zcol = jnp.zeros((th + 2, 1, Cin), jnp.float32)
        xp = jnp.concatenate([zcol, xh, zcol], axis=1)                    # (th+2, W+2, Cin)

        # Depthwise 3x3: nine shifted VPU FMAs, channels dense on lanes.
        acc = jnp.zeros((th, W, Cin), jnp.float32)
        for ky in range(3):
            for kx in range(3):
                k = ky * 3 + kx
                acc = acc + xp[ky:ky + th, kx:kx + W, :] * wdw_ref[k:k + 1, :]
        y = _leaky_relu(acc * dwsc_ref[...] + dwsh_ref[...])

        # Pointwise 1x1 on the MXU: bf16 operands, f32 accumulation; epilogue in f32.
        y2 = y.reshape(th * W, Cin).astype(jnp.bfloat16)
        z = jnp.dot(y2, wpw_ref[...], preferred_element_type=jnp.float32)
        z = _leaky_relu(z * pwsc_ref[...] + pwsh_ref[...])
        o_ref[...] = z.reshape(th, W, Cout)

    const_map = lambda n, i: (0, 0)
    flops = 2 * N * H * W * Cin * (9 + Cout) + 6 * N * H * W * (Cin + Cout)
    bytes_accessed = (4 * N * H * W * (Cin + Cout)
                      + wdw.size * 4 + wpw.size * 2 + 4 * 4 * (Cin + Cout))

    return pl.pallas_call(
        kernel,
        out_shape=jax.ShapeDtypeStruct((N, H, W, Cout), jnp.float32),
        grid=(N, n_tiles),
        in_specs=[
            # clamped top halo row (zero-masked in kernel when i == 0)
            pl.BlockSpec((None, 1, W, Cin),
                         lambda n, i: (n, jnp.maximum(i * th - 1, 0), 0, 0)),
            # main row tile
            pl.BlockSpec((None, th, W, Cin), lambda n, i: (n, i, 0, 0)),
            # clamped bottom halo row (zero-masked in kernel when i == last)
            pl.BlockSpec((None, 1, W, Cin),
                         lambda n, i: (n, jnp.minimum((i + 1) * th, H - 1), 0, 0)),
            pl.BlockSpec((9, Cin), const_map),       # depthwise taps
            pl.BlockSpec((1, Cin), const_map),       # dw BN scale
            pl.BlockSpec((1, Cin), const_map),       # dw BN shift
            pl.BlockSpec((Cin, Cout), const_map),    # pointwise weight (bf16)
            pl.BlockSpec((1, Cout), const_map),      # pw BN scale
            pl.BlockSpec((1, Cout), const_map),      # pw BN shift
        ],
        out_specs=pl.BlockSpec((None, th, W, Cout), lambda n, i: (n, i, 0, 0)),
        compiler_params=pltpu.CompilerParams(
            dimension_semantics=("parallel", "parallel"),
            vmem_limit_bytes=_VMEM_LIMIT),
        cost_estimate=pl.CostEstimate(flops=flops, transcendentals=0,
                                      bytes_accessed=bytes_accessed),
    )(x, x, x, wdw, dwsc, dwsh, wpw, pwsc, pwsh)


# ---------------------------------------------------------------------------
# Bilinear x2 upsample (align_corners=False), channels-last, VPU only.
# ---------------------------------------------------------------------------
def bilinear_upsample_x2_nhwc(x, *, tile_h=None):
    """x: (N, H, W, C) f32 -> (N, 2H, 2W, C) f32.

    out[2q]   = 0.25*x[q-1] + 0.75*x[q]  (edge clamped); same blend along W.
    out[2q+1] = 0.75*x[q]   + 0.25*x[q+1]
    """
    N, H, W, C = x.shape
    row_bytes = 4 * W * C * 5 * 2
    th = _choose_tile_h(H, tile_h, row_bytes=row_bytes)
    n_tiles = H // th

    def kernel(top_ref, mid_ref, bot_ref, o_ref):
        xh = jnp.concatenate([top_ref[...], mid_ref[...], bot_ref[...]], axis=0)
        prev_r, cur_r, next_r = xh[0:th], xh[1:th + 1], xh[2:th + 2]
        row_e = 0.25 * prev_r + 0.75 * cur_r            # output rows 2q
        row_o = 0.75 * cur_r + 0.25 * next_r            # output rows 2q+1

        def col_blend(a):                               # (th, W, C) -> (th, W, 2C)
            left = jnp.concatenate([a[:, :1, :], a[:, :-1, :]], axis=1)   # clamped shift
            right = jnp.concatenate([a[:, 1:, :], a[:, -1:, :]], axis=1)
            col_e = 0.25 * left + 0.75 * a              # output cols 2w
            col_o = 0.75 * a + 0.25 * right             # output cols 2w+1
            return jnp.concatenate([col_e, col_o], axis=-1)   # lanes packed as (s, c)

        o_ref[:, 0, :, :] = col_blend(row_e)
        o_ref[:, 1, :, :] = col_blend(row_o)

    flops = 8 * N * H * W * C * 4
    bytes_accessed = 4 * N * H * W * C * 5

    packed = pl.pallas_call(
        kernel,
        # (n, q, r, w, s*C+c) is the row-major-contiguous packing of (n, 2q+r, 2w+s, c).
        out_shape=jax.ShapeDtypeStruct((N, H, 2, W, 2 * C), jnp.float32),
        grid=(N, n_tiles),
        in_specs=[
            pl.BlockSpec((None, 1, W, C),
                         lambda n, i: (n, jnp.maximum(i * th - 1, 0), 0, 0)),
            pl.BlockSpec((None, th, W, C), lambda n, i: (n, i, 0, 0)),
            pl.BlockSpec((None, 1, W, C),
                         lambda n, i: (n, jnp.minimum((i + 1) * th, H - 1), 0, 0)),
        ],
        out_specs=pl.BlockSpec((None, th, 2, W, 2 * C),
                               lambda n, i: (n, i, 0, 0, 0)),
        compiler_params=pltpu.CompilerParams(
            dimension_semantics=("parallel", "parallel"),
            vmem_limit_bytes=_VMEM_LIMIT),
        cost_estimate=pl.CostEstimate(flops=flops, transcendentals=0,
                                      bytes_accessed=bytes_accessed),
    )(x, x, x)
    # Free (metadata-only) reinterpretation to the interleaved spatial layout.
    return packed.reshape(N, 2 * H, 2 * W, C)


# ---------------------------------------------------------------------------
# Parameters (deterministic, synthetic), full MC forward, pure-JAX reference.
# ---------------------------------------------------------------------------
def _fuse_bn(gamma, beta, mean, var, eps=BN_EPS):
    scale = gamma / jnp.sqrt(var + eps)
    shift = beta - mean * scale
    return scale, shift


def make_mc_params(key, in_channels, out_channels):
    params = []
    cin = in_channels
    for _ in range(2):
        keys = jax.random.split(key, 9)
        key = keys[0]
        dw_w = 0.1 * jax.random.normal(keys[1], (cin, 3, 3), jnp.float32)
        dw_g = 1.0 + 0.1 * jax.random.normal(keys[2], (cin,), jnp.float32)
        dw_b = 0.1 * jax.random.normal(keys[3], (cin,), jnp.float32)
        dw_m = 0.1 * jax.random.normal(keys[4], (cin,), jnp.float32)
        dw_v = jax.random.uniform(keys[5], (cin,), jnp.float32, 0.5, 1.5)
        dw_sc, dw_sh = _fuse_bn(dw_g, dw_b, dw_m, dw_v)
        pw_w = 0.1 * jax.random.normal(keys[6], (cin, out_channels), jnp.float32)
        pw_g = 1.0 + 0.1 * jax.random.normal(keys[7], (out_channels,), jnp.float32)
        pw_b = 0.1 * jax.random.normal(keys[8], (out_channels,), jnp.float32)
        pw_sc, pw_sh = _fuse_bn(pw_g, pw_b,
                                jnp.zeros((out_channels,), jnp.float32),
                                jnp.ones((out_channels,), jnp.float32))
        params.append(dict(dw_w=dw_w, dw_sc=dw_sc, dw_sh=dw_sh,
                           pw_w=pw_w, pw_sc=pw_sc, pw_sh=pw_sh))
        cin = out_channels
    return params


def mc_forward(x, params, *, tile_h=None):
    """x: (N, C_in, H, W) f32 NCHW -> (N, C_out, 2H, 2W) f32 NCHW (PyTorch-compatible API)."""
    y = jnp.transpose(x, (0, 2, 3, 1))             # NCHW -> NHWC: single boundary layout pass
    for layer in params:
        y = fused_dwsep_layer(y, layer["dw_w"], layer["dw_sc"], layer["dw_sh"],
                              layer["pw_w"], layer["pw_sc"], layer["pw_sh"],
                              tile_h=tile_h)
    up = bilinear_upsample_x2_nhwc(y, tile_h=tile_h)
    return jnp.transpose(up, (0, 3, 1, 2))         # NHWC -> NCHW at the boundary


def _upsample_matrix(n):
    """(2n, n) matrix matching F.interpolate(scale=2, bilinear, align_corners=False)."""
    p = jnp.arange(2 * n)
    src = (p.astype(jnp.float32) + 0.5) / 2.0 - 0.5
    i0 = jnp.floor(src)
    frac = src - i0
    i0i = jnp.clip(i0.astype(jnp.int32), 0, n - 1)
    i1i = jnp.clip(i0.astype(jnp.int32) + 1, 0, n - 1)
    A = jnp.zeros((2 * n, n), jnp.float32)
    A = A.at[p, i0i].add(1.0 - frac)
    A = A.at[p, i1i].add(frac)
    return A


def mc_reference(x, params):
    """Pure-JAX (XLA) reference for the MC forward pass (NCHW, f32)."""
    for layer in params:
        C = x.shape[1]
        y = lax.conv_general_dilated(
            x, layer["dw_w"].reshape(C, 1, 3, 3), window_strides=(1, 1),
            padding=((1, 1), (1, 1)), feature_group_count=C,
            dimension_numbers=("NCHW", "OIHW", "NCHW"),
            precision=lax.Precision.HIGHEST)
        y = y * layer["dw_sc"].reshape(1, C, 1, 1) + layer["dw_sh"].reshape(1, C, 1, 1)
        y = _leaky_relu(y)
        Co = layer["pw_w"].shape[1]
        z = jnp.einsum("nchw,co->nohw", y, layer["pw_w"],
                       precision=lax.Precision.HIGHEST)
        z = z * layer["pw_sc"].reshape(1, Co, 1, 1) + layer["pw_sh"].reshape(1, Co, 1, 1)
        x = _leaky_relu(z)
    _, _, H, W = x.shape
    A_H = _upsample_matrix(H)
    A_W = _upsample_matrix(W)
    return jnp.einsum("ph,qw,nchw->ncpq", A_H, A_W, x, precision=lax.Precision.HIGHEST)


if __name__ == "__main__":
    key = jax.random.PRNGKey(0)
    k_in, k_par = jax.random.split(key)

    N, C_IN, C_OUT, H, W = 2, 4, 8, 16, 16
    x = jax.random.normal(k_in, (N, C_IN, H, W), jnp.float32)
    params = make_mc_params(k_par, C_IN, C_OUT)

    # tile_h=8 exercises the multi-row-tile + halo path and the parallel grid at toy size.
    fwd = jax.jit(lambda inp: mc_forward(inp, params, tile_h=8))
    out = jax.block_until_ready(fwd(x))

    assert out.shape == (N, C_OUT, 2 * H, 2 * W)
    assert out.dtype == jnp.float32
    assert bool(jnp.all(jnp.isfinite(out)))

    # Pure-JAX reference check (kernel uses bf16 MXU operands -> loose tolerance).
    ref = jax.block_until_ready(mc_reference(x, params))
    assert bool(jnp.allclose(out, ref, rtol=2e-2, atol=2e-2)), (
        f"max abs err {float(jnp.max(jnp.abs(out - ref)))}")

    print("KERNEL_OK")
</pallas_src>

<mosaic_0001>
module attributes {stable_mosaic.version = 11 : i64} {
  func.func @kernel(%arg0: i32, %arg1: i32, %arg2: memref<1x1x16x8xf32, #tpu.memory_space<vmem>>, %arg3: memref<1x8x16x8xf32, #tpu.memory_space<vmem>>, %arg4: memref<1x1x16x8xf32, #tpu.memory_space<vmem>>, %arg5: memref<1x8x2x16x16xf32, #tpu.memory_space<vmem>>) attributes {dimension_semantics = [#tpu.dimension_semantics<parallel>, #tpu.dimension_semantics<parallel>], iteration_bounds = array<i64: 2, 2>, scalar_prefetch = 0 : i64, scratch_operands = 0 : i64, tpu.core_type = #tpu.core_type<tc>, window_params = [{transform_indices = @transform_0, window_bounds = array<i64: 1, 1, 16, 8>}, {transform_indices = @transform_1, window_bounds = array<i64: 1, 8, 16, 8>}, {transform_indices = @transform_2, window_bounds = array<i64: 1, 1, 16, 8>}, {transform_indices = @transform_3, window_bounds = array<i64: 1, 8, 2, 16, 16>}]} {
    %c0 = arith.constant 0 : index
    %c0_0 = arith.constant 0 : index
    %c0_1 = arith.constant 0 : index
    %c0_2 = arith.constant 0 : index
    %0 = vector.load %arg2[%c0, %c0_0, %c0_1, %c0_2] : memref<1x1x16x8xf32, #tpu.memory_space<vmem>>, vector<1x1x16x8xf32>
    %1 = vector.shape_cast %0 : vector<1x1x16x8xf32> to vector<1x16x8xf32>
    %c0_3 = arith.constant 0 : index
    %c0_4 = arith.constant 0 : index
    %c0_5 = arith.constant 0 : index
    %c0_6 = arith.constant 0 : index
    %2 = vector.load %arg3[%c0_3, %c0_4, %c0_5, %c0_6] : memref<1x8x16x8xf32, #tpu.memory_space<vmem>>, vector<1x8x16x8xf32>
    %3 = vector.shape_cast %2 : vector<1x8x16x8xf32> to vector<8x16x8xf32>
    %c0_7 = arith.constant 0 : index
    %c0_8 = arith.constant 0 : index
    %c0_9 = arith.constant 0 : index
    %c0_10 = arith.constant 0 : index
    %4 = vector.load %arg4[%c0_7, %c0_8, %c0_9, %c0_10] : memref<1x1x16x8xf32, #tpu.memory_space<vmem>>, vector<1x1x16x8xf32>
    %5 = vector.shape_cast %4 : vector<1x1x16x8xf32> to vector<1x16x8xf32>
    %6 = tpu.concatenate %1, %3, %5 in 0 : vector<1x16x8xf32>, vector<8x16x8xf32>, vector<1x16x8xf32> -> vector<10x16x8xf32>
    %7 = vector.extract_strided_slice %6 {offsets = [0, 0, 0], sizes = [8, 16, 8], strides = [1, 1, 1]} : vector<10x16x8xf32> to vector<8x16x8xf32>
    %8 = vector.extract_strided_slice %6 {offsets = [1, 0, 0], sizes = [8, 16, 8], strides = [1, 1, 1]} : vector<10x16x8xf32> to vector<8x16x8xf32>
    %9 = vector.extract_strided_slice %6 {offsets = [2, 0, 0], sizes = [8, 16, 8], strides = [1, 1, 1]} : vector<10x16x8xf32> to vector<8x16x8xf32>
    %cst = arith.constant 2.500000e-01 : f32
    %10 = vector.broadcast %cst : f32 to vector<8x16x8xf32>
    %11 = arith.mulf %10, %7 : vector<8x16x8xf32>
    %cst_11 = arith.constant 7.500000e-01 : f32
    %12 = vector.broadcast %cst_11 : f32 to vector<8x16x8xf32>
    %13 = arith.mulf %12, %8 : vector<8x16x8xf32>
    %14 = arith.addf %11, %13 : vector<8x16x8xf32>
    %cst_12 = arith.constant 7.500000e-01 : f32
    %15 = vector.broadcast %cst_12 : f32 to vector<8x16x8xf32>
    %16 = arith.mulf %15, %8 : vector<8x16x8xf32>
    %cst_13 = arith.constant 2.500000e-01 : f32
    %17 = vector.broadcast %cst_13 : f32 to vector<8x16x8xf32>
    %18 = arith.mulf %17, %9 : vector<8x16x8xf32>
    %19 = arith.addf %16, %18 : vector<8x16x8xf32>
    %20 = vector.extract_strided_slice %14 {offsets = [0, 0, 0], sizes = [8, 1, 8], strides = [1, 1, 1]} : vector<8x16x8xf32> to vector<8x1x8xf32>
    %21 = vector.extract_strided_slice %14 {offsets = [0, 0, 0], sizes = [8, 15, 8], strides = [1, 1, 1]} : vector<8x16x8xf32> to vector<8x15x8xf32>
    %22 = tpu.concatenate %20, %21 in 1 : vector<8x1x8xf32>, vector<8x15x8xf32> -> vector<8x16x8xf32>
    %23 = vector.extract_strided_slice %14 {offsets = [0, 1, 0], sizes = [8, 15, 8], strides = [1, 1, 1]} : vector<8x16x8xf32> to vector<8x15x8xf32>
    %24 = vector.extract_strided_slice %14 {offsets = [0, 15, 0], sizes = [8, 1, 8], strides = [1, 1, 1]} : vector<8x16x8xf32> to vector<8x1x8xf32>
    %25 = tpu.concatenate %23, %24 in 1 : vector<8x15x8xf32>, vector<8x1x8xf32> -> vector<8x16x8xf32>
    %cst_14 = arith.constant 2.500000e-01 : f32
    %26 = vector.broadcast %cst_14 : f32 to vector<8x16x8xf32>
    %27 = arith.mulf %26, %22 : vector<8x16x8xf32>
    %cst_15 = arith.constant 7.500000e-01 : f32
    %28 = vector.broadcast %cst_15 : f32 to vector<8x16x8xf32>
    %29 = arith.mulf %28, %14 : vector<8x16x8xf32>
    %30 = arith.addf %27, %29 : vector<8x16x8xf32>
    %cst_16 = arith.constant 7.500000e-01 : f32
    %31 = vector.broadcast %cst_16 : f32 to vector<8x16x8xf32>
    %32 = arith.mulf %31, %14 : vector<8x16x8xf32>
    %cst_17 = arith.constant 2.500000e-01 : f32
    %33 = vector.broadcast %cst_17 : f32 to vector<8x16x8xf32>
    %34 = arith.mulf %33, %25 : vector<8x16x8xf32>
    %35 = arith.addf %32, %34 : vector<8x16x8xf32>
    %36 = tpu.concatenate %30, %35 in 2 : vector<8x16x8xf32>, vector<8x16x8xf32> -> vector<8x16x16xf32>
    %c0_18 = arith.constant 0 : index
    %c0_19 = arith.constant 0 : index
    %c0_20 = arith.constant 0 : index
    %c0_21 = arith.constant 0 : index
    %c0_22 = arith.constant 0 : index
    %37 = vector.load %arg5[%c0_18, %c0_19, %c0_20, %c0_21, %c0_22] : memref<1x8x2x16x16xf32, #tpu.memory_space<vmem>>, vector<1x8x1x16x16xf32>
    %38 = vector.shape_cast %37 : vector<1x8x1x16x16xf32> to vector<8x16x16xf32>
    %39 = vector.shape_cast %36 : vector<8x16x16xf32> to vector<1x8x1x16x16xf32>
    tpu.vector_store %arg5[%c0_18, %c0_19, %c0_20, %c0_21, %c0_22], %39 {strides = array<i32>} : memref<1x8x2x16x16xf32, #tpu.memory_space<vmem>>, vector<1x8x1x16x16xf32>,
    %40 = vector.extract_strided_slice %19 {offsets = [0, 0, 0], sizes = [8, 1, 8], strides = [1, 1, 1]} : vector<8x16x8xf32> to vector<8x1x8xf32>
    %41 = vector.extract_strided_slice %19 {offsets = [0, 0, 0], sizes = [8, 15, 8], strides = [1, 1, 1]} : vector<8x16x8xf32> to vector<8x15x8xf32>
    %42 = tpu.concatenate %40, %41 in 1 : vector<8x1x8xf32>, vector<8x15x8xf32> -> vector<8x16x8xf32>
    %43 = vector.extract_strided_slice %19 {offsets = [0, 1, 0], sizes = [8, 15, 8], strides = [1, 1, 1]} : vector<8x16x8xf32> to vector<8x15x8xf32>
    %44 = vector.extract_strided_slice %19 {offsets = [0, 15, 0], sizes = [8, 1, 8], strides = [1, 1, 1]} : vector<8x16x8xf32> to vector<8x1x8xf32>
    %45 = tpu.concatenate %43, %44 in 1 : vector<8x15x8xf32>, vector<8x1x8xf32> -> vector<8x16x8xf32>
    %cst_23 = arith.constant 2.500000e-01 : f32
    %46 = vector.broadcast %cst_23 : f32 to vector<8x16x8xf32>
    %47 = arith.mulf %46, %42 : vector<8x16x8xf32>
    %cst_24 = arith.constant 7.500000e-01 : f32
    %48 = vector.broadcast %cst_24 : f32 to vector<8x16x8xf32>
    %49 = arith.mulf %48, %19 : vector<8x16x8xf32>
    %50 = arith.addf %47, %49 : vector<8x16x8xf32>
    %cst_25 = arith.constant 7.500000e-01 : f32
    %51 = vector.broadcast %cst_25 : f32 to vector<8x16x8xf32>
    %52 = arith.mulf %51, %19 : vector<8x16x8xf32>
    %cst_26 = arith.constant 2.500000e-01 : f32
    %53 = vector.broadcast %cst_26 : f32 to vector<8x16x8xf32>
    %54 = arith.mulf %53, %45 : vector<8x16x8xf32>
    %55 = arith.addf %52, %54 : vector<8x16x8xf32>
    %56 = tpu.concatenate %50, %55 in 2 : vector<8x16x8xf32>, vector<8x16x8xf32> -> vector<8x16x16xf32>
    %c0_27 = arith.constant 0 : index
    %c0_28 = arith.constant 0 : index
    %c1 = arith.constant 1 : index
    %c0_29 = arith.constant 0 : index
    %c0_30 = arith.constant 0 : index
    %57 = vector.load %arg5[%c0_27, %c0_28, %c1, %c0_29, %c0_30] : memref<1x8x2x16x16xf32, #tpu.memory_space<vmem>>, vector<1x8x1x16x16xf32>
    %58 = vector.shape_cast %57 : vector<1x8x1x16x16xf32> to vector<8x16x16xf32>
    %59 = vector.shape_cast %56 : vector<8x16x16xf32> to vector<1x8x1x16x16xf32>
    tpu.vector_store %arg5[%c0_27, %c0_28, %c1, %c0_29, %c0_30], %59 {strides = array<i32>} : memref<1x8x2x16x16xf32, #tpu.memory_space<vmem>>, vector<1x8x1x16x16xf32>,
    return
  }
  func.func @transform_0(%arg0: i32, %arg1: i32) -> (i32, i32, i32, i32) {
    %c8_i32 = arith.constant 8 : i32
    %0 = arith.muli %arg1, %c8_i32 : i32
    %c1_i32 = arith.constant 1 : i32
    %1 = arith.subi %0, %c1_i32 : i32
    %c0_i32 = arith.constant 0 : i32
    %2 = arith.maxsi %1, %c0_i32 : i32
    %c0_i32_0 = arith.constant 0 : i32
    %c0_i32_1 = arith.constant 0 : i32
    %c0_i32_2 = arith.constant 0 : i32
    return %arg0, %2, %c0_i32_0, %c0_i32_1 : i32, i32, i32, i32
  }
  func.func @transform_1(%arg0: i32, %arg1: i32) -> (i32, i32, i32, i32) {
    %c0_i32 = arith.constant 0 : i32
    %c0_i32_0 = arith.constant 0 : i32
    %c0_i32_1 = arith.constant 0 : i32
    return %arg0, %arg1, %c0_i32, %c0_i32_0 : i32, i32, i32, i32
  }
  func.func @transform_2(%arg0: i32, %arg1: i32) -> (i32, i32, i32, i32) {
    %c1_i32 = arith.constant 1 : i32
    %0 = arith.addi %arg1, %c1_i32 : i32
    %c8_i32 = arith.constant 8 : i32
    %1 = arith.muli %0, %c8_i32 : i32
    %c15_i32 = arith.constant 15 : i32
    %2 = arith.minsi %1, %c15_i32 : i32
    %c0_i32 = arith.constant 0 : i32
    %c0_i32_0 = arith.constant 0 : i32
    %c0_i32_1 = arith.constant 0 : i32
    return %arg0, %2, %c0_i32, %c0_i32_0 : i32, i32, i32, i32
  }
  func.func @transform_3(%arg0: i32, %arg1: i32) -> (i32, i32, i32, i32, i32) {
    %c0_i32 = arith.constant 0 : i32
    %c0_i32_0 = arith.constant 0 : i32
    %c0_i32_1 = arith.constant 0 : i32
    %c0_i32_2 = arith.constant 0 : i32
    return %arg0, %arg1, %c0_i32, %c0_i32_0, %c0_i32_1 : i32, i32, i32, i32, i32
  }
}

module attributes {stable_mosaic.version = 11 : i64} {
  func.func @kernel(%arg0: i32, %arg1: i32, %arg2: memref<1x1x16x8xf32, #tpu.memory_space<vmem>>, %arg3: memref<1x8x16x8xf32, #tpu.memory_space<vmem>>, %arg4: memref<1x1x16x8xf32, #tpu.memory_space<vmem>>, %arg5: memref<9x8xf32, #tpu.memory_space<vmem>>, %arg6: memref<1x8xf32, #tpu.memory_space<vmem>>, %arg7: memref<1x8xf32, #tpu.memory_space<vmem>>, %arg8: memref<8x8xbf16, #tpu.memory_space<vmem>>, %arg9: memref<1x8xf32, #tpu.memory_space<vmem>>, %arg10: memref<1x8xf32, #tpu.memory_space<vmem>>, %arg11: memref<1x8x16x8xf32, #tpu.memory_space<vmem>>) attributes {dimension_semantics = [#tpu.dimension_semantics<parallel>, #tpu.dimension_semantics<parallel>], iteration_bounds = array<i64: 2, 2>, scalar_prefetch = 0 : i64, scratch_operands = 0 : i64, tpu.core_type = #tpu.core_type<tc>, window_params = [{transform_indices = @transform_0, window_bounds = array<i64: 1, 1, 16, 8>}, {transform_indices = @transform_1, window_bounds = array<i64: 1, 8, 16, 8>}, {transform_indices = @transform_2, window_bounds = array<i64: 1, 1, 16, 8>}, {pipeline_mode = #tpu.pipeline_mode<synchronous>, transform_indices = @transform_3, window_bounds = array<i64: 9, 8>}, {pipeline_mode = #tpu.pipeline_mode<synchronous>, transform_indices = @transform_4, window_bounds = array<i64: 1, 8>}, {pipeline_mode = #tpu.pipeline_mode<synchronous>, transform_indices = @transform_5, window_bounds = array<i64: 1, 8>}, {pipeline_mode = #tpu.pipeline_mode<synchronous>, transform_indices = @transform_6, window_bounds = array<i64: 8, 8>}, {pipeline_mode = #tpu.pipeline_mode<synchronous>, transform_indices = @transform_7, window_bounds = array<i64: 1, 8>}, {pipeline_mode = #tpu.pipeline_mode<synchronous>, transform_indices = @transform_8, window_bounds = array<i64: 1, 8>}, {transform_indices = @transform_9, window_bounds = array<i64: 1, 8, 16, 8>}]} {
    %c0_i32 = arith.constant 0 : i32
    %0 = arith.cmpi eq, %arg1, %c0_i32 : i32
    %c0 = arith.constant 0 : index
    %c0_0 = arith.constant 0 : index
    %c0_1 = arith.constant 0 : index
    %c0_2 = arith.constant 0 : index
    %1 = vector.load %arg2[%c0, %c0_0, %c0_1, %c0_2] : memref<1x1x16x8xf32, #tpu.memory_space<vmem>>, vector<1x1x16x8xf32>
    %2 = vector.shape_cast %1 : vector<1x1x16x8xf32> to vector<1x16x8xf32>
    %cst = arith.constant 0.000000e+00 : f32
    %3 = vector.broadcast %cst : f32 to vector<1x16x8xf32>
    %4 = arith.select %0, %3, %2 : vector<1x16x8xf32>
    %c1_i32 = arith.constant 1 : i32
    %5 = arith.cmpi eq, %arg1, %c1_i32 : i32
    %c0_3 = arith.constant 0 : index
    %c0_4 = arith.constant 0 : index
    %c0_5 = arith.constant 0 : index
    %c0_6 = arith.constant 0 : index
    %6 = vector.load %arg4[%c0_3, %c0_4, %c0_5, %c0_6] : memref<1x1x16x8xf32, #tpu.memory_space<vmem>>, vector<1x1x16x8xf32>
    %7 = vector.shape_cast %6 : vector<1x1x16x8xf32> to vector<1x16x8xf32>
    %cst_7 = arith.constant 0.000000e+00 : f32
    %8 = vector.broadcast %cst_7 : f32 to vector<1x16x8xf32>
    %9 = arith.select %5, %8, %7 : vector<1x16x8xf32>
    %c0_8 = arith.constant 0 : index
    %c0_9 = arith.constant 0 : index
    %c0_10 = arith.constant 0 : index
    %c0_11 = arith.constant 0 : index
    %10 = vector.load %arg3[%c0_8, %c0_9, %c0_10, %c0_11] : memref<1x8x16x8xf32, #tpu.memory_space<vmem>>, vector<1x8x16x8xf32>
    %11 = vector.shape_cast %10 : vector<1x8x16x8xf32> to vector<8x16x8xf32>
    %12 = tpu.concatenate %4, %11, %9 in 0 : vector<1x16x8xf32>, vector<8x16x8xf32>, vector<1x16x8xf32> -> vector<10x16x8xf32>
    %cst_12 = arith.constant 0.000000e+00 : f32
    %13 = vector.broadcast %cst_12 : f32 to vector<10x1x8xf32>
    %14 = tpu.concatenate %13, %12, %13 in 1 : vector<10x1x8xf32>, vector<10x16x8xf32>, vector<10x1x8xf32> -> vector<10x18x8xf32>
    %cst_13 = arith.constant 0.000000e+00 : f32
    %15 = vector.broadcast %cst_13 : f32 to vector<8x16x8xf32>
    %16 = vector.extract_strided_slice %14 {offsets = [0, 0, 0], sizes = [8, 16, 8], strides = [1, 1, 1]} : vector<10x18x8xf32> to vector<8x16x8xf32>
    %c0_14 = arith.constant 0 : index
    %c0_15 = arith.constant 0 : index
    %17 = vector.load %arg5[%c0_14, %c0_15] : memref<9x8xf32, #tpu.memory_space<vmem>>, vector<1x8xf32>
    %18 = vector.shape_cast %17 : vector<1x8xf32> to vector<1x1x8xf32>
    %19 = vector.broadcast %18 : vector<1x1x8xf32> to vector<8x16x8xf32>
    %20 = arith.mulf %16, %19 : vector<8x16x8xf32>
    %21 = arith.addf %15, %20 : vector<8x16x8xf32>
    %22 = vector.extract_strided_slice %14 {offsets = [0, 1, 0], sizes = [8, 16, 8], strides = [1, 1, 1]} : vector<10x18x8xf32> to vector<8x16x8xf32>
    %c1 = arith.constant 1 : index
    %c0_16 = arith.constant 0 : index
    %23 = vector.load %arg5[%c1, %c0_16] : memref<9x8xf32, #tpu.memory_space<vmem>>, vector<1x8xf32>
    %24 = vector.shape_cast %23 : vector<1x8xf32> to vector<1x1x8xf32>
    %25 = vector.broadcast %24 : vector<1x1x8xf32> to vector<8x16x8xf32>
    %26 = arith.mulf %22, %25 : vector<8x16x8xf32>
    %27 = arith.addf %21, %26 : vector<8x16x8xf32>
    %28 = vector.extract_strided_slice %14 {offsets = [0, 2, 0], sizes = [8, 16, 8], strides = [1, 1, 1]} : vector<10x18x8xf32> to vector<8x16x8xf32>
    %c2 = arith.constant 2 : index
    %c0_17 = arith.constant 0 : index
    %29 = vector.load %arg5[%c2, %c0_17] : memref<9x8xf32, #tpu.memory_space<vmem>>, vector<1x8xf32>
    %30 = vector.shape_cast %29 : vector<1x8xf32> to vector<1x1x8xf32>
    %31 = vector.broadcast %30 : vector<1x1x8xf32> to vector<8x16x8xf32>
    %32 = arith.mulf %28, %31 : vector<8x16x8xf32>
    %33 = arith.addf %27, %32 : vector<8x16x8xf32>
    %34 = vector.extract_strided_slice %14 {offsets = [1, 0, 0], sizes = [8, 16, 8], strides = [1, 1, 1]} : vector<10x18x8xf32> to vector<8x16x8xf32>
    %c3 = arith.constant 3 : index
    %c0_18 = arith.constant 0 : index
    %35 = vector.load %arg5[%c3, %c0_18] : memref<9x8xf32, #tpu.memory_space<vmem>>, vector<1x8xf32>
    %36 = vector.shape_cast %35 : vector<1x8xf32> to vector<1x1x8xf32>
    %37 = vector.broadcast %36 : vector<1x1x8xf32> to vector<8x16x8xf32>
    %38 = arith.mulf %34, %37 : vector<8x16x8xf32>
    %39 = arith.addf %33, %38 : vector<8x16x8xf32>
    %40 = vector.extract_strided_slice %14 {offsets = [1, 1, 0], sizes = [8, 16, 8], strides = [1, 1, 1]} : vector<10x18x8xf32> to vector<8x16x8xf32>
    %c4 = arith.constant 4 : index
    %c0_19 = arith.constant 0 : index
    %41 = vector.load %arg5[%c4, %c0_19] : memref<9x8xf32, #tpu.memory_space<vmem>>, vector<1x8xf32>
    %42 = vector.shape_cast %41 : vector<1x8xf32> to vector<1x1x8xf32>
    %43 = vector.broadcast %42 : vector<1x1x8xf32> to vector<8x16x8xf32>
    %44 = arith.mulf %40, %43 : vector<8x16x8xf32>
    %45 = arith.addf %39, %44 : vector<8x16x8xf32>
    %46 = vector.extract_strided_slice %14 {offsets = [1, 2, 0], sizes = [8, 16, 8], strides = [1, 1, 1]} : vector<10x18x8xf32> to vector<8x16x8xf32>
    %c5 = arith.constant 5 : index
    %c0_20 = arith.constant 0 : index
    %47 = vector.load %arg5[%c5, %c0_20] : memref<9x8xf32, #tpu.memory_space<vmem>>, vector<1x8xf32>
    %48 = vector.shape_cast %47 : vector<1x8xf32> to vector<1x1x8xf32>
    %49 = vector.broadcast %48 : vector<1x1x8xf32> to vector<8x16x8xf32>
    %50 = arith.mulf %46, %49 : vector<8x16x8xf32>
    %51 = arith.addf %45, %50 : vector<8x16x8xf32>
    %52 = vector.extract_strided_slice %14 {offsets = [2, 0, 0], sizes = [8, 16, 8], strides = [1, 1, 1]} : vector<10x18x8xf32> to vector<8x16x8xf32>
    %c6 = arith.constant 6 : index
    %c0_21 = arith.constant 0 : index
    %53 = vector.load %arg5[%c6, %c0_21] : memref<9x8xf32, #tpu.memory_space<vmem>>, vector<1x8xf32>
    %54 = vector.shape_cast %53 : vector<1x8xf32> to vector<1x1x8xf32>
    %55 = vector.broadcast %54 : vector<1x1x8xf32> to vector<8x16x8xf32>
    %56 = arith.mulf %52, %55 : vector<8x16x8xf32>
    %57 = arith.addf %51, %56 : vector<8x16x8xf32>
    %58 = vector.extract_strided_slice %14 {offsets = [2, 1, 0], sizes = [8, 16, 8], strides = [1, 1, 1]} : vector<10x18x8xf32> to vector<8x16x8xf32>
    %c7 = arith.constant 7 : index
    %c0_22 = arith.constant 0 : index
    %59 = vector.load %arg5[%c7, %c0_22] : memref<9x8xf32, #tpu.memory_space<vmem>>, vector<1x8xf32>
    %60 = vector.shape_cast %59 : vector<1x8xf32> to vector<1x1x8xf32>
    %61 = vector.broadcast %60 : vector<1x1x8xf32> to vector<8x16x8xf32>
    %62 = arith.mulf %58, %61 : vector<8x16x8xf32>
    %63 = arith.addf %57, %62 : vector<8x16x8xf32>
    %64 = vector.extract_strided_slice %14 {offsets = [2, 2, 0], sizes = [8, 16, 8], strides = [1, 1, 1]} : vector<10x18x8xf32> to vector<8x16x8xf32>
    %c8 = arith.constant 8 : index
    %c0_23 = arith.constant 0 : index
    %65 = vector.load %arg5[%c8, %c0_23] : memref<9x8xf32, #tpu.memory_space<vmem>>, vector<1x8xf32>
    %66 = vector.shape_cast %65 : vector<1x8xf32> to vector<1x1x8xf32>
    %67 = vector.broadcast %66 : vector<1x1x8xf32> to vector<8x16x8xf32>
    %68 = arith.mulf %64, %67 : vector<8x16x8xf32>
    %69 = arith.addf %63, %68 : vector<8x16x8xf32>
    %c0_24 = arith.constant 0 : index
    %c0_25 = arith.constant 0 : index
    %70 = vector.load %arg6[%c0_24, %c0_25] : memref<1x8xf32, #tpu.memory_space<vmem>>, vector<1x8xf32>
    %71 = vector.shape_cast %70 : vector<1x8xf32> to vector<1x1x8xf32>
    %72 = vector.broadcast %71 : vector<1x1x8xf32> to vector<8x16x8xf32>
    %73 = arith.mulf %69, %72 : vector<8x16x8xf32>
    %c0_26 = arith.constant 0 : index
    %c0_27 = arith.constant 0 : index
    %74 = vector.load %arg7[%c0_26, %c0_27] : memref<1x8xf32, #tpu.memory_space<vmem>>, vector<1x8xf32>
    %75 = vector.shape_cast %74 : vector<1x8xf32> to vector<1x1x8xf32>
    %76 = vector.broadcast %75 : vector<1x1x8xf32> to vector<8x16x8xf32>
    %77 = arith.addf %73, %76 : vector<8x16x8xf32>
    %cst_28 = arith.constant 0.000000e+00 : f32
    %78 = vector.broadcast %cst_28 : f32 to vector<8x16x8xf32>
    %79 = arith.cmpf ogt, %77, %78 : vector<8x16x8xf32>
    %cst_29 = arith.constant 0.00999999977 : f32
    %80 = vector.broadcast %cst_29 : f32 to vector<8x16x8xf32>
    %81 = arith.mulf %80, %77 : vector<8x16x8xf32>
    %82 = arith.select %79, %77, %81 : vector<8x16x8xi1>, vector<8x16x8xf32>
    %83 = vector.shape_cast %82 : vector<8x16x8xf32> to vector<128x8xf32>
    %84 = arith.truncf %83 : vector<128x8xf32> to vector<128x8xbf16>
    %c0_30 = arith.constant 0 : index
    %c0_31 = arith.constant 0 : index
    %85 = vector.load %arg8[%c0_30, %c0_31] : memref<8x8xbf16, #tpu.memory_space<vmem>>, vector<8x8xbf16>
    %cst_32 = arith.constant dense<0.000000e+00> : vector<128x8xf32>
    %86 = tpu.matmul %84, %85, %cst_32 {dimension_numbers = #tpu.dot_dimension_numbers<[1], [0], [0], [1], [0, 0, 1, 1], [], []>} : vector<128x8xbf16>, vector<8x8xbf16>, vector<128x8xf32> -> vector<128x8xf32>
    %c0_33 = arith.constant 0 : index
    %c0_34 = arith.constant 0 : index
    %87 = vector.load %arg9[%c0_33, %c0_34] : memref<1x8xf32, #tpu.memory_space<vmem>>, vector<1x8xf32>
    %88 = vector.broadcast %87 : vector<1x8xf32> to vector<128x8xf32>
    %89 = arith.mulf %86, %88 : vector<128x8xf32>
    %c0_35 = arith.constant 0 : index
    %c0_36 = arith.constant 0 : index
    %90 = vector.load %arg10[%c0_35, %c0_36] : memref<1x8xf32, #tpu.memory_space<vmem>>, vector<1x8xf32>
    %91 = vector.broadcast %90 : vector<1x8xf32> to vector<128x8xf32>
    %92 = arith.addf %89, %91 : vector<128x8xf32>
    %cst_37 = arith.constant 0.000000e+00 : f32
    %93 = vector.broadcast %cst_37 : f32 to vector<128x8xf32>
    %94 = arith.cmpf ogt, %92, %93 : vector<128x8xf32>
    %cst_38 = arith.constant 0.00999999977 : f32
    %95 = vector.broadcast %cst_38 : f32 to vector<128x8xf32>
    %96 = arith.mulf %95, %92 : vector<128x8xf32>
    %97 = arith.select %94, %92, %96 : vector<128x8xi1>, vector<128x8xf32>
    %98 = vector.shape_cast %97 : vector<128x8xf32> to vector<8x16x8xf32>
    %c0_39 = arith.constant 0 : index
    %c0_40 = arith.constant 0 : index
    %c0_41 = arith.constant 0 : index
    %c0_42 = arith.constant 0 : index
    %99 = vector.load %arg11[%c0_39, %c0_40, %c0_41, %c0_42] : memref<1x8x16x8xf32, #tpu.memory_space<vmem>>, vector<1x8x16x8xf32>
    %100 = vector.shape_cast %99 : vector<1x8x16x8xf32> to vector<8x16x8xf32>
    %101 = vector.shape_cast %98 : vector<8x16x8xf32> to vector<1x8x16x8xf32>
    tpu.vector_store %arg11[%c0_39, %c0_40, %c0_41, %c0_42], %101 {strides = array<i32>} : memref<1x8x16x8xf32, #tpu.memory_space<vmem>>, vector<1x8x16x8xf32>,
    return
  }
  func.func @transform_0(%arg0: i32, %arg1: i32) -> (i32, i32, i32, i32) {
    %c8_i32 = arith.constant 8 : i32
    %0 = arith.muli %arg1, %c8_i32 : i32
    %c1_i32 = arith.constant 1 : i32
    %1 = arith.subi %0, %c1_i32 : i32
    %c0_i32 = arith.constant 0 : i32
    %2 = arith.maxsi %1, %c0_i32 : i32
    %c0_i32_0 = arith.constant 0 : i32
    %c0_i32_1 = arith.constant 0 : i32
    %c0_i32_2 = arith.constant 0 : i32
    return %arg0, %2, %c0_i32_0, %c0_i32_1 : i32, i32, i32, i32
  }
  func.func @transform_1(%arg0: i32, %arg1: i32) -> (i32, i32, i32, i32) {
    %c0_i32 = arith.constant 0 : i32
    %c0_i32_0 = arith.constant 0 : i32
    %c0_i32_1 = arith.constant 0 : i32
    return %arg0, %arg1, %c0_i32, %c0_i32_0 : i32, i32, i32, i32
  }
  func.func @transform_2(%arg0: i32, %arg1: i32) -> (i32, i32, i32, i32) {
    %c1_i32 = arith.constant 1 : i32
    %0 = arith.addi %arg1, %c1_i32 : i32
    %c8_i32 = arith.constant 8 : i32
    %1 = arith.muli %0, %c8_i32 : i32
    %c15_i32 = arith.constant 15 : i32
    %2 = arith.minsi %1, %c15_i32 : i32
    %c0_i32 = arith.constant 0 : i32
    %c0_i32_0 = arith.constant 0 : i32
    %c0_i32_1 = arith.constant 0 : i32
    return %arg0, %2, %c0_i32, %c0_i32_0 : i32, i32, i32, i32
  }
  func.func @transform_3(%arg0: i32, %arg1: i32) -> (i32, i32) {
    %c0_i32 = arith.constant 0 : i32
    %c0_i32_0 = arith.constant 0 : i32
    %c0_i32_1 = arith.constant 0 : i32
    return %c0_i32, %c0_i32_0 : i32, i32
  }
  func.func @transform_4(%arg0: i32, %arg1: i32) -> (i32, i32) {
    %c0_i32 = arith.constant 0 : i32
    %c0_i32_0 = arith.constant 0 : i32
    %c0_i32_1 = arith.constant 0 : i32
    return %c0_i32, %c0_i32_0 : i32, i32
  }
  func.func @transform_5(%arg0: i32, %arg1: i32) -> (i32, i32) {
    %c0_i32 = arith.constant 0 : i32
    %c0_i32_0 = arith.constant 0 : i32
    %c0_i32_1 = arith.constant 0 : i32
    return %c0_i32, %c0_i32_0 : i32, i32
  }
  func.func @transform_6(%arg0: i32, %arg1: i32) -> (i32, i32) {
    %c0_i32 = arith.constant 0 : i32
    %c0_i32_0 = arith.constant 0 : i32
    %c0_i32_1 = arith.constant 0 : i32
    return %c0_i32, %c0_i32_0 : i32, i32
  }
  func.func @transform_7(%arg0: i32, %arg1: i32) -> (i32, i32) {
    %c0_i32 = arith.constant 0 : i32
    %c0_i32_0 = arith.constant 0 : i32
    %c0_i32_1 = arith.constant 0 : i32
    return %c0_i32, %c0_i32_0 : i32, i32
  }
  func.func @transform_8(%arg0: i32, %arg1: i32) -> (i32, i32) {
    %c0_i32 = arith.constant 0 : i32
    %c0_i32_0 = arith.constant 0 : i32
    %c0_i32_1 = arith.constant 0 : i32
    return %c0_i32, %c0_i32_0 : i32, i32
  }
  func.func @transform_9(%arg0: i32, %arg1: i32) -> (i32, i32, i32, i32) {
    %c0_i32 = arith.constant 0 : i32
    %c0_i32_0 = arith.constant 0 : i32
    %c0_i32_1 = arith.constant 0 : i32
    return %arg0, %arg1, %c0_i32, %c0_i32_0 : i32, i32, i32, i32
  }
}

module attributes {stable_mosaic.version = 11 : i64} {
  func.func @kernel(%arg0: i32, %arg1: i32, %arg2: memref<1x1x16x4xf32, #tpu.memory_space<vmem>>, %arg3: memref<1x8x16x4xf32, #tpu.memory_space<vmem>>, %arg4: memref<1x1x16x4xf32, #tpu.memory_space<vmem>>, %arg5: memref<9x4xf32, #tpu.memory_space<vmem>>, %arg6: memref<1x4xf32, #tpu.memory_space<vmem>>, %arg7: memref<1x4xf32, #tpu.memory_space<vmem>>, %arg8: memref<4x8xbf16, #tpu.memory_space<vmem>>, %arg9: memref<1x8xf32, #tpu.memory_space<vmem>>, %arg10: memref<1x8xf32, #tpu.memory_space<vmem>>, %arg11: memref<1x8x16x8xf32, #tpu.memory_space<vmem>>) attributes {dimension_semantics = [#tpu.dimension_semantics<parallel>, #tpu.dimension_semantics<parallel>], iteration_bounds = array<i64: 2, 2>, scalar_prefetch = 0 : i64, scratch_operands = 0 : i64, tpu.core_type = #tpu.core_type<tc>, window_params = [{transform_indices = @transform_0, window_bounds = array<i64: 1, 1, 16, 4>}, {transform_indices = @transform_1, window_bounds = array<i64: 1, 8, 16, 4>}, {transform_indices = @transform_2, window_bounds = array<i64: 1, 1, 16, 4>}, {pipeline_mode = #tpu.pipeline_mode<synchronous>, transform_indices = @transform_3, window_bounds = array<i64: 9, 4>}, {pipeline_mode = #tpu.pipeline_mode<synchronous>, transform_indices = @transform_4, window_bounds = array<i64: 1, 4>}, {pipeline_mode = #tpu.pipeline_mode<synchronous>, transform_indices = @transform_5, window_bounds = array<i64: 1, 4>}, {pipeline_mode = #tpu.pipeline_mode<synchronous>, transform_indices = @transform_6, window_bounds = array<i64: 4, 8>}, {pipeline_mode = #tpu.pipeline_mode<synchronous>, transform_indices = @transform_7, window_bounds = array<i64: 1, 8>}, {pipeline_mode = #tpu.pipeline_mode<synchronous>, transform_indices = @transform_8, window_bounds = array<i64: 1, 8>}, {transform_indices = @transform_9, window_bounds = array<i64: 1, 8, 16, 8>}]} {
    %c0_i32 = arith.constant 0 : i32
    %0 = arith.cmpi eq, %arg1, %c0_i32 : i32
    %c0 = arith.constant 0 : index
    %c0_0 = arith.constant 0 : index
    %c0_1 = arith.constant 0 : index
    %c0_2 = arith.constant 0 : index
    %1 = vector.load %arg2[%c0, %c0_0, %c0_1, %c0_2] : memref<1x1x16x4xf32, #tpu.memory_space<vmem>>, vector<1x1x16x4xf32>
    %2 = vector.shape_cast %1 : vector<1x1x16x4xf32> to vector<1x16x4xf32>
    %cst = arith.constant 0.000000e+00 : f32
    %3 = vector.broadcast %cst : f32 to vector<1x16x4xf32>
    %4 = arith.select %0, %3, %2 : vector<1x16x4xf32>
    %c1_i32 = arith.constant 1 : i32
    %5 = arith.cmpi eq, %arg1, %c1_i32 : i32
    %c0_3 = arith.constant 0 : index
    %c0_4 = arith.constant 0 : index
    %c0_5 = arith.constant 0 : index
    %c0_6 = arith.constant 0 : index
    %6 = vector.load %arg4[%c0_3, %c0_4, %c0_5, %c0_6] : memref<1x1x16x4xf32, #tpu.memory_space<vmem>>, vector<1x1x16x4xf32>
    %7 = vector.shape_cast %6 : vector<1x1x16x4xf32> to vector<1x16x4xf32>
    %cst_7 = arith.constant 0.000000e+00 : f32
    %8 = vector.broadcast %cst_7 : f32 to vector<1x16x4xf32>
    %9 = arith.select %5, %8, %7 : vector<1x16x4xf32>
    %c0_8 = arith.constant 0 : index
    %c0_9 = arith.constant 0 : index
    %c0_10 = arith.constant 0 : index
    %c0_11 = arith.constant 0 : index
    %10 = vector.load %arg3[%c0_8, %c0_9, %c0_10, %c0_11] : memref<1x8x16x4xf32, #tpu.memory_space<vmem>>, vector<1x8x16x4xf32>
    %11 = vector.shape_cast %10 : vector<1x8x16x4xf32> to vector<8x16x4xf32>
    %12 = tpu.concatenate %4, %11, %9 in 0 : vector<1x16x4xf32>, vector<8x16x4xf32>, vector<1x16x4xf32> -> vector<10x16x4xf32>
    %cst_12 = arith.constant 0.000000e+00 : f32
    %13 = vector.broadcast %cst_12 : f32 to vector<10x1x4xf32>
    %14 = tpu.concatenate %13, %12, %13 in 1 : vector<10x1x4xf32>, vector<10x16x4xf32>, vector<10x1x4xf32> -> vector<10x18x4xf32>
    %cst_13 = arith.constant 0.000000e+00 : f32
    %15 = vector.broadcast %cst_13 : f32 to vector<8x16x4xf32>
    %16 = vector.extract_strided_slice %14 {offsets = [0, 0, 0], sizes = [8, 16, 4], strides = [1, 1, 1]} : vector<10x18x4xf32> to vector<8x16x4xf32>
    %c0_14 = arith.constant 0 : index
    %c0_15 = arith.constant 0 : index
    %17 = vector.load %arg5[%c0_14, %c0_15] : memref<9x4xf32, #tpu.memory_space<vmem>>, vector<1x4xf32>
    %18 = vector.shape_cast %17 : vector<1x4xf32> to vector<1x1x4xf32>
    %19 = vector.broadcast %18 : vector<1x1x4xf32> to vector<8x16x4xf32>
    %20 = arith.mulf %16, %19 : vector<8x16x4xf32>
    %21 = arith.addf %15, %20 : vector<8x16x4xf32>
    %22 = vector.extract_strided_slice %14 {offsets = [0, 1, 0], sizes = [8, 16, 4], strides = [1, 1, 1]} : vector<10x18x4xf32> to vector<8x16x4xf32>
    %c1 = arith.constant 1 : index
    %c0_16 = arith.constant 0 : index
    %23 = vector.load %arg5[%c1, %c0_16] : memref<9x4xf32, #tpu.memory_space<vmem>>, vector<1x4xf32>
    %24 = vector.shape_cast %23 : vector<1x4xf32> to vector<1x1x4xf32>
    %25 = vector.broadcast %24 : vector<1x1x4xf32> to vector<8x16x4xf32>
    %26 = arith.mulf %22, %25 : vector<8x16x4xf32>
    %27 = arith.addf %21, %26 : vector<8x16x4xf32>
    %28 = vector.extract_strided_slice %14 {offsets = [0, 2, 0], sizes = [8, 16, 4], strides = [1, 1, 1]} : vector<10x18x4xf32> to vector<8x16x4xf32>
    %c2 = arith.constant 2 : index
    %c0_17 = arith.constant 0 : index
    %29 = vector.load %arg5[%c2, %c0_17] : memref<9x4xf32, #tpu.memory_space<vmem>>, vector<1x4xf32>
    %30 = vector.shape_cast %29 : vector<1x4xf32> to vector<1x1x4xf32>
    %31 = vector.broadcast %30 : vector<1x1x4xf32> to vector<8x16x4xf32>
    %32 = arith.mulf %28, %31 : vector<8x16x4xf32>
    %33 = arith.addf %27, %32 : vector<8x16x4xf32>
    %34 = vector.extract_strided_slice %14 {offsets = [1, 0, 0], sizes = [8, 16, 4], strides = [1, 1, 1]} : vector<10x18x4xf32> to vector<8x16x4xf32>
    %c3 = arith.constant 3 : index
    %c0_18 = arith.constant 0 : index
    %35 = vector.load %arg5[%c3, %c0_18] : memref<9x4xf32, #tpu.memory_space<vmem>>, vector<1x4xf32>
    %36 = vector.shape_cast %35 : vector<1x4xf32> to vector<1x1x4xf32>
    %37 = vector.broadcast %36 : vector<1x1x4xf32> to vector<8x16x4xf32>
    %38 = arith.mulf %34, %37 : vector<8x16x4xf32>
    %39 = arith.addf %33, %38 : vector<8x16x4xf32>
    %40 = vector.extract_strided_slice %14 {offsets = [1, 1, 0], sizes = [8, 16, 4], strides = [1, 1, 1]} : vector<10x18x4xf32> to vector<8x16x4xf32>
    %c4 = arith.constant 4 : index
    %c0_19 = arith.constant 0 : index
    %41 = vector.load %arg5[%c4, %c0_19] : memref<9x4xf32, #tpu.memory_space<vmem>>, vector<1x4xf32>
    %42 = vector.shape_cast %41 : vector<1x4xf32> to vector<1x1x4xf32>
    %43 = vector.broadcast %42 : vector<1x1x4xf32> to vector<8x16x4xf32>
    %44 = arith.mulf %40, %43 : vector<8x16x4xf32>
    %45 = arith.addf %39, %44 : vector<8x16x4xf32>
    %46 = vector.extract_strided_slice %14 {offsets = [1, 2, 0], sizes = [8, 16, 4], strides = [1, 1, 1]} : vector<10x18x4xf32> to vector<8x16x4xf32>
    %c5 = arith.constant 5 : index
    %c0_20 = arith.constant 0 : index
    %47 = vector.load %arg5[%c5, %c0_20] : memref<9x4xf32, #tpu.memory_space<vmem>>, vector<1x4xf32>
    %48 = vector.shape_cast %47 : vector<1x4xf32> to vector<1x1x4xf32>
    %49 = vector.broadcast %48 : vector<1x1x4xf32> to vector<8x16x4xf32>
    %50 = arith.mulf %46, %49 : vector<8x16x4xf32>
    %51 = arith.addf %45, %50 : vector<8x16x4xf32>
    %52 = vector.extract_strided_slice %14 {offsets = [2, 0, 0], sizes = [8, 16, 4], strides = [1, 1, 1]} : vector<10x18x4xf32> to vector<8x16x4xf32>
    %c6 = arith.constant 6 : index
    %c0_21 = arith.constant 0 : index
    %53 = vector.load %arg5[%c6, %c0_21] : memref<9x4xf32, #tpu.memory_space<vmem>>, vector<1x4xf32>
    %54 = vector.shape_cast %53 : vector<1x4xf32> to vector<1x1x4xf32>
    %55 = vector.broadcast %54 : vector<1x1x4xf32> to vector<8x16x4xf32>
    %56 = arith.mulf %52, %55 : vector<8x16x4xf32>
    %57 = arith.addf %51, %56 : vector<8x16x4xf32>
    %58 = vector.extract_strided_slice %14 {offsets = [2, 1, 0], sizes = [8, 16, 4], strides = [1, 1, 1]} : vector<10x18x4xf32> to vector<8x16x4xf32>
    %c7 = arith.constant 7 : index
    %c0_22 = arith.constant 0 : index
    %59 = vector.load %arg5[%c7, %c0_22] : memref<9x4xf32, #tpu.memory_space<vmem>>, vector<1x4xf32>
    %60 = vector.shape_cast %59 : vector<1x4xf32> to vector<1x1x4xf32>
    %61 = vector.broadcast %60 : vector<1x1x4xf32> to vector<8x16x4xf32>
    %62 = arith.mulf %58, %61 : vector<8x16x4xf32>
    %63 = arith.addf %57, %62 : vector<8x16x4xf32>
    %64 = vector.extract_strided_slice %14 {offsets = [2, 2, 0], sizes = [8, 16, 4], strides = [1, 1, 1]} : vector<10x18x4xf32> to vector<8x16x4xf32>
    %c8 = arith.constant 8 : index
    %c0_23 = arith.constant 0 : index
    %65 = vector.load %arg5[%c8, %c0_23] : memref<9x4xf32, #tpu.memory_space<vmem>>, vector<1x4xf32>
    %66 = vector.shape_cast %65 : vector<1x4xf32> to vector<1x1x4xf32>
    %67 = vector.broadcast %66 : vector<1x1x4xf32> to vector<8x16x4xf32>
    %68 = arith.mulf %64, %67 : vector<8x16x4xf32>
    %69 = arith.addf %63, %68 : vector<8x16x4xf32>
    %c0_24 = arith.constant 0 : index
    %c0_25 = arith.constant 0 : index
    %70 = vector.load %arg6[%c0_24, %c0_25] : memref<1x4xf32, #tpu.memory_space<vmem>>, vector<1x4xf32>
    %71 = vector.shape_cast %70 : vector<1x4xf32> to vector<1x1x4xf32>
    %72 = vector.broadcast %71 : vector<1x1x4xf32> to vector<8x16x4xf32>
    %73 = arith.mulf %69, %72 : vector<8x16x4xf32>
    %c0_26 = arith.constant 0 : index
    %c0_27 = arith.constant 0 : index
    %74 = vector.load %arg7[%c0_26, %c0_27] : memref<1x4xf32, #tpu.memory_space<vmem>>, vector<1x4xf32>
    %75 = vector.shape_cast %74 : vector<1x4xf32> to vector<1x1x4xf32>
    %76 = vector.broadcast %75 : vector<1x1x4xf32> to vector<8x16x4xf32>
    %77 = arith.addf %73, %76 : vector<8x16x4xf32>
    %cst_28 = arith.constant 0.000000e+00 : f32
    %78 = vector.broadcast %cst_28 : f32 to vector<8x16x4xf32>
    %79 = arith.cmpf ogt, %77, %78 : vector<8x16x4xf32>
    %cst_29 = arith.constant 0.00999999977 : f32
    %80 = vector.broadcast %cst_29 : f32 to vector<8x16x4xf32>
    %81 = arith.mulf %80, %77 : vector<8x16x4xf32>
    %82 = arith.select %79, %77, %81 : vector<8x16x4xi1>, vector<8x16x4xf32>
    %83 = vector.shape_cast %82 : vector<8x16x4xf32> to vector<128x4xf32>
    %84 = arith.truncf %83 : vector<128x4xf32> to vector<128x4xbf16>
    %c0_30 = arith.constant 0 : index
    %c0_31 = arith.constant 0 : index
    %85 = vector.load %arg8[%c0_30, %c0_31] : memref<4x8xbf16, #tpu.memory_space<vmem>>, vector<4x8xbf16>
    %cst_32 = arith.constant dense<0.000000e+00> : vector<128x8xf32>
    %86 = tpu.matmul %84, %85, %cst_32 {dimension_numbers = #tpu.dot_dimension_numbers<[1], [0], [0], [1], [0, 0, 1, 1], [], []>} : vector<128x4xbf16>, vector<4x8xbf16>, vector<128x8xf32> -> vector<128x8xf32>
    %c0_33 = arith.constant 0 : index
    %c0_34 = arith.constant 0 : index
    %87 = vector.load %arg9[%c0_33, %c0_34] : memref<1x8xf32, #tpu.memory_space<vmem>>, vector<1x8xf32>
    %88 = vector.broadcast %87 : vector<1x8xf32> to vector<128x8xf32>
    %89 = arith.mulf %86, %88 : vector<128x8xf32>
    %c0_35 = arith.constant 0 : index
    %c0_36 = arith.constant 0 : index
    %90 = vector.load %arg10[%c0_35, %c0_36] : memref<1x8xf32, #tpu.memory_space<vmem>>, vector<1x8xf32>
    %91 = vector.broadcast %90 : vector<1x8xf32> to vector<128x8xf32>
    %92 = arith.addf %89, %91 : vector<128x8xf32>
    %cst_37 = arith.constant 0.000000e+00 : f32
    %93 = vector.broadcast %cst_37 : f32 to vector<128x8xf32>
    %94 = arith.cmpf ogt, %92, %93 : vector<128x8xf32>
    %cst_38 = arith.constant 0.00999999977 : f32
    %95 = vector.broadcast %cst_38 : f32 to vector<128x8xf32>
    %96 = arith.mulf %95, %92 : vector<128x8xf32>
    %97 = arith.select %94, %92, %96 : vector<128x8xi1>, vector<128x8xf32>
    %98 = vector.shape_cast %97 : vector<128x8xf32> to vector<8x16x8xf32>
    %c0_39 = arith.constant 0 : index
    %c0_40 = arith.constant 0 : index
    %c0_41 = arith.constant 0 : index
    %c0_42 = arith.constant 0 : index
    %99 = vector.load %arg11[%c0_39, %c0_40, %c0_41, %c0_42] : memref<1x8x16x8xf32, #tpu.memory_space<vmem>>, vector<1x8x16x8xf32>
    %100 = vector.shape_cast %99 : vector<1x8x16x8xf32> to vector<8x16x8xf32>
    %101 = vector.shape_cast %98 : vector<8x16x8xf32> to vector<1x8x16x8xf32>
    tpu.vector_store %arg11[%c0_39, %c0_40, %c0_41, %c0_42], %101 {strides = array<i32>} : memref<1x8x16x8xf32, #tpu.memory_space<vmem>>, vector<1x8x16x8xf32>,
    return
  }
  func.func @transform_0(%arg0: i32, %arg1: i32) -> (i32, i32, i32, i32) {
    %c8_i32 = arith.constant 8 : i32
    %0 = arith.muli %arg1, %c8_i32 : i32
    %c1_i32 = arith.constant 1 : i32
    %1 = arith.subi %0, %c1_i32 : i32
    %c0_i32 = arith.constant 0 : i32
    %2 = arith.maxsi %1, %c0_i32 : i32
    %c0_i32_0 = arith.constant 0 : i32
    %c0_i32_1 = arith.constant 0 : i32
    %c0_i32_2 = arith.constant 0 : i32
    return %arg0, %2, %c0_i32_0, %c0_i32_1 : i32, i32, i32, i32
  }
  func.func @transform_1(%arg0: i32, %arg1: i32) -> (i32, i32, i32, i32) {
    %c0_i32 = arith.constant 0 : i32
    %c0_i32_0 = arith.constant 0 : i32
    %c0_i32_1 = arith.constant 0 : i32
    return %arg0, %arg1, %c0_i32, %c0_i32_0 : i32, i32, i32, i32
  }
  func.func @transform_2(%arg0: i32, %arg1: i32) -> (i32, i32, i32, i32) {
    %c1_i32 = arith.constant 1 : i32
    %0 = arith.addi %arg1, %c1_i32 : i32
    %c8_i32 = arith.constant 8 : i32
    %1 = arith.muli %0, %c8_i32 : i32
    %c15_i32 = arith.constant 15 : i32
    %2 = arith.minsi %1, %c15_i32 : i32
    %c0_i32 = arith.constant 0 : i32
    %c0_i32_0 = arith.constant 0 : i32
    %c0_i32_1 = arith.constant 0 : i32
    return %arg0, %2, %c0_i32, %c0_i32_0 : i32, i32, i32, i32
  }
  func.func @transform_3(%arg0: i32, %arg1: i32) -> (i32, i32) {
    %c0_i32 = arith.constant 0 : i32
    %c0_i32_0 = arith.constant 0 : i32
    %c0_i32_1 = arith.constant 0 : i32
    return %c0_i32, %c0_i32_0 : i32, i32
  }
  func.func @transform_4(%arg0: i32, %arg1: i32) -> (i32, i32) {
    %c0_i32 = arith.constant 0 : i32
    %c0_i32_0 = arith.constant 0 : i32
    %c0_i32_1 = arith.constant 0 : i32
    return %c0_i32, %c0_i32_0 : i32, i32
  }
  func.func @transform_5(%arg0: i32, %arg1: i32) -> (i32, i32) {
    %c0_i32 = arith.constant 0 : i32
    %c0_i32_0 = arith.constant 0 : i32
    %c0_i32_1 = arith.constant 0 : i32
    return %c0_i32, %c0_i32_0 : i32, i32
  }
  func.func @transform_6(%arg0: i32, %arg1: i32) -> (i32, i32) {
    %c0_i32 = arith.constant 0 : i32
    %c0_i32_0 = arith.constant 0 : i32
    %c0_i32_1 = arith.constant 0 : i32
    return %c0_i32, %c0_i32_0 : i32, i32
  }
  func.func @transform_7(%arg0: i32, %arg1: i32) -> (i32, i32) {
    %c0_i32 = arith.constant 0 : i32
    %c0_i32_0 = arith.constant 0 : i32
    %c0_i32_1 = arith.constant 0 : i32
    return %c0_i32, %c0_i32_0 : i32, i32
  }
  func.func @transform_8(%arg0: i32, %arg1: i32) -> (i32, i32) {
    %c0_i32 = arith.constant 0 : i32
    %c0_i32_0 = arith.constant 0 : i32
    %c0_i32_1 = arith.constant 0 : i32
    return %c0_i32, %c0_i32_0 : i32, i32
  }
  func.func @transform_9(%arg0: i32, %arg1: i32) -> (i32, i32, i32, i32) {
    %c0_i32 = arith.constant 0 : i32
    %c0_i32_0 = arith.constant 0 : i32
    %c0_i32_1 = arith.constant 0 : i32
    return %arg0, %arg1, %c0_i32, %c0_i32_0 : i32, i32, i32, i32
  }
}

</mosaic_0001>

<llo_original>
// kernel: _lambda_.5
$region0: #{_lambda_.5}
  #allocation0 [shape = 'u32[]', space=smem, size = 0x4, offset = 0x4, fixed_abs, tag = 'smem constant byte address 0x4 - core index']
  #allocation1 [shape = 'u32[144,128]{1,0:T(1,128)}', space=vmem, size = 0x12000, scoped, tag = 'internal scratch']
  %s0 = inlined_call_operand.vmem [shape: f32[2,16,16,8], index: 0, kind: input, shape index: {}, may-alias: {0,1,2}]
  %s1 = inlined_call_operand.vmem [shape: f32[2,16,16,8], index: 1, kind: input, shape index: {}, may-alias: {0,1,2}]
  %s2 = inlined_call_operand.vmem [shape: f32[2,16,16,8], index: 2, kind: input, shape index: {}, may-alias: {0,1,2}]
  %s3 = inlined_call_operand.vmem [shape: f32[2,16,2,16,16], index: 3, kind: output, shape index: {}]
  %s4 = sld [smem:[#allocation0]]
  $region45: #{_lambda_.5} parent=0
    _
  %s6 = ssub.s32 1, %s4
  %s7 = scalar_select 0, %s6, %s4
  loop: start=0, step=1, limit=6
  $region2: #{_lambda_.5} parent=0 // loop_pre_header
    _
  $region3: #{_lambda_.5} parent=0 // loop_header
    %s9 = sphi 0, %s13
    %p10 = scmp.ge.s32.totalorder %s9, 6
    %s16 = sphi 0, %s28
    %s17 = sphi 0, %s24
    %s18 = sphi 0, %s16
    %s19 = sphi 0, %s17
    %s20 = sphi 0, %s18
    %s21 = sphi 0, %s19
    %s41 = sphi 0, %s43
    %s44 = sphi 0, %s41
    %s45 = sphi 0, %s44
    %s61 = sphi 0, %s45
    %s69 = sphi 0, %s71
    %s72 = sphi 0, %s69
    %s73 = sphi 0, %s72
    %s89 = sphi 0, %s73
    %s105 = sphi 0, %s107
    %s108 = sphi 0, %s105
    %s109 = sphi 0, %s108
    %s125 = sphi 0, %s109
    %s133 = sphi 0, %s135
    %s136 = sphi 0, %s133
    %s137 = sphi 0, %s136
    %s153 = sphi 0, %s137
  $region4: #{_lambda_.5} parent=0 // loop_header_branch
    %12 = sbr.rel (%p10) target = $region8
  $region5: #{_lambda_.5} parent=0 // loop_body
    %s14 = ssub.s32 %s9, 1
    %s15 = ssub.s32 %s9, 2
    %s22 = sadd.s32 1, %s17
    %p23 = scmp.ge.s32.totalorder %s22, 2
    %s24 = scalar_select %p23, 0, %s22
    %s25 = sadd.s32 1, %s16
    %s26 = scalar_select %p23, %s25, %s16
    %p27 = scmp.ge.s32.totalorder %s26, 2
    %s28 = scalar_select %p27, 0, %s26
    %s29 = smul.u32 %s17, 8
    %s30 = ssub.s32 %s29, 1
    %p31 = scmp.gt.s32.totalorder %s30, 0
    %s32 = scalar_select %p31, %s30, 0
    %s33 = smul.u32 %s24, 8
    %s34 = ssub.s32 %s33, 1
    %p35 = scmp.gt.s32.totalorder %s34, 0
    %s36 = scalar_select %p35, %s34, 0
    %s37 = ssub.s32 %s16, %s28
    %s38 = ssub.s32 %s32, %s36
    %s39 = sor.u32 %s37, %s38
    %p40 = scmp.eq.s32.totalorder %s39, 0
    %s42 = sadd.s32 %s41, 1
    %s43 = scalar_select %p40, %s41, %s42
    %p46 = pneg %p40
    %p47 = scmp.eq.s32.totalorder %s9, 3
    %p48 = por %p46, %p47
    %p49 = scmp.ne.s32.totalorder %s41, %s44
    %p50 = scmp.eq.s32.totalorder %s9, 0
    %p51 = por %p49, %p50
    %p52 = scmp.ne.s32.totalorder %s41, %s44
    %p53 = scmp.eq.s32.totalorder %s14, 3
    %p54 = por %p52, %p53
    %p55 = scmp.ne.s32.totalorder %s44, %s45
    %p56 = scmp.eq.s32.totalorder %s14, 0
    %p57 = por %p55, %p56
    %p58 = scmp.ne.s32.totalorder %s44, %s45
    %p59 = scmp.eq.s32.totalorder %s15, 3
    %p60 = por %p58, %p59
    %p62 = scmp.ne.s32.totalorder %s45, %s61
    %p63 = scmp.eq.s32.totalorder %s15, 0
    %p64 = por %p62, %p63
    %s65 = ssub.s32 %s16, %s28
    %s66 = ssub.s32 %s17, %s24
    %s67 = sor.u32 %s65, %s66
    %p68 = scmp.eq.s32.totalorder %s67, 0
    %s70 = sadd.s32 %s69, 1
    %s71 = scalar_select %p68, %s69, %s70
    %p74 = pneg %p68
    %p75 = scmp.eq.s32.totalorder %s9, 3
    %p76 = por %p74, %p75
    %p77 = scmp.ne.s32.totalorder %s69, %s72
    %p78 = scmp.eq.s32.totalorder %s9, 0
    %p79 = por %p77, %p78
    %p80 = scmp.ne.s32.totalorder %s69, %s72
    %p81 = scmp.eq.s32.totalorder %s14, 3
    %p82 = por %p80, %p81
    %p83 = scmp.ne.s32.totalorder %s72, %s73
    %p84 = scmp.eq.s32.totalorder %s14, 0
    %p85 = por %p83, %p84
    %p86 = scmp.ne.s32.totalorder %s72, %s73
    %p87 = scmp.eq.s32.totalorder %s15, 3
    %p88 = por %p86, %p87
    %p90 = scmp.ne.s32.totalorder %s73, %s89
    %p91 = scmp.eq.s32.totalorder %s15, 0
    %p92 = por %p90, %p91
    %s93 = sadd.s32 %s17, 1
    %s94 = smul.u32 %s93, 8
    %p95 = scmp.lt.s32.totalorder %s94, 15
    %s96 = scalar_select %p95, %s94, 15
    %s97 = sadd.s32 %s24, 1
    %s98 = smul.u32 %s97, 8
    %p99 = scmp.lt.s32.totalorder %s98, 15
    %s100 = scalar_select %p99, %s98, 15
    %s101 = ssub.s32 %s16, %s28
    %s102 = ssub.s32 %s96, %s100
    %s103 = sor.u32 %s101, %s102
    %p104 = scmp.eq.s32.totalorder %s103, 0
    %s106 = sadd.s32 %s105, 1
    %s107 = scalar_select %p104, %s105, %s106
    %p110 = pneg %p104
    %p111 = scmp.eq.s32.totalorder %s9, 3
    %p112 = por %p110, %p111
    %p113 = scmp.ne.s32.totalorder %s105, %s108
    %p114 = scmp.eq.s32.totalorder %s9, 0
    %p115 = por %p113, %p114
    %p116 = scmp.ne.s32.totalorder %s105, %s108
    %p117 = scmp.eq.s32.totalorder %s14, 3
    %p118 = por %p116, %p117
    %p119 = scmp.ne.s32.totalorder %s108, %s109
    %p120 = scmp.eq.s32.totalorder %s14, 0
    %p121 = por %p119, %p120
    %p122 = scmp.ne.s32.totalorder %s108, %s109
    %p123 = scmp.eq.s32.totalorder %s15, 3
    %p124 = por %p122, %p123
    %p126 = scmp.ne.s32.totalorder %s109, %s125
    %p127 = scmp.eq.s32.totalorder %s15, 0
    %p128 = por %p126, %p127
    %s129 = ssub.s32 %s16, %s28
    %s130 = ssub.s32 %s17, %s24
    %s131 = sor.u32 %s129, %s130
    %p132 = scmp.eq.s32.totalorder %s131, 0
    %s134 = sadd.s32 %s133, 1
    %s135 = scalar_select %p132, %s133, %s134
    %p138 = pneg %p132
    %p139 = scmp.eq.s32.totalorder %s9, 3
    %p140 = por %p138, %p139
    %p141 = scmp.ne.s32.totalorder %s133, %s136
    %p142 = scmp.eq.s32.totalorder %s9, 0
    %p143 = por %p141, %p142
    %p144 = scmp.ne.s32.totalorder %s133, %s136
    %p145 = scmp.eq.s32.totalorder %s14, 3
    %p146 = por %p144, %p145
    %p147 = scmp.ne.s32.totalorder %s136, %s137
    %p148 = scmp.eq.s32.totalorder %s14, 0
    %p149 = por %p147, %p148
    %p150 = scmp.ne.s32.totalorder %s136, %s137
    %p151 = scmp.eq.s32.totalorder %s15, 3
    %p152 = por %p150, %p151
    %p154 = scmp.ne.s32.totalorder %s137, %s153
    %p155 = scmp.eq.s32.totalorder %s15, 0
    %p156 = por %p154, %p155
    %p157 = scmp.le.s32.totalorder 1, %s9
    %p158 = scmp.lt.s32.totalorder %s9, 5
    %p159 = pnand %p157, %p158
    %p160 = pneg %p159
    // Predicated region
    $region9: #{_lambda_.5} parent=5 // pred_check
      _
    $region10: #{_lambda_.5} parent=5 // pred_check_branch
      %162 = sbr.rel (%p159) target = $region12
    $region11: #{_lambda_.5} parent=5 // pred_region
      %s163 = ssub.s32 %s9, 1
    $region12: #{_lambda_.5} parent=5 // pred_fallthru
      _
    %p164 = scmp.lt.s32.totalorder %s9, 4
    // Predicated region
    $region13: #{_lambda_.5} parent=5 // pred_check
      %p165 = pneg %p164
    $region14: #{_lambda_.5} parent=5 // pred_check_branch
      %167 = sbr.rel (%p165) target = $region16
    $region15: #{_lambda_.5} parent=5 // pred_region
      // Predicated region
      $region17: #{_lambda_.5} parent=15 // pred_check
        %p168 = pneg %p51
      $region18: #{_lambda_.5} parent=15 // pred_check_branch
        %170 = sbr.rel (%p168) target = $region20
      $region19: #{_lambda_.5} parent=15 // pred_region
        %s171 = smul.u32 %s17, 8
        %s172 = ssub.s32 %s171, 1
        %p173 = scmp.gt.s32.totalorder %s172, 0
        %s174 = scalar_select %p173, %s172, 0
        %p175 = scmp.lt.s32.totalorder %s16, 1
        %s176 = scalar_select %p175, %s16, 1
        %p177 = scmp.lt.s32.totalorder %s174, 15
        %s178 = scalar_select %p177, %s174, 15
        %s179 = smul.addr %s178, 2
        %s180 = smul.addr %s176, 32
        %s181 = sadd.s32 %s179, %s180
        %s182 = smul.addr %s181, 8
        %s183 = scalar_lea.vmem %s0, %s182
        %s184 = smul.u32 %s17, 8
        %s185 = ssub.s32 %s184, 1
        %p186 = scmp.gt.s32.totalorder %s185, 0
        %s187 = scalar_select %p186, %s185, 0
      $region20: #{_lambda_.5} parent=15 // pred_fallthru
        _
      // Predicated region
      $region21: #{_lambda_.5} parent=15 // pred_check
        %p188 = pneg %p79
      $region22: #{_lambda_.5} parent=15 // pred_check_branch
        %190 = sbr.rel (%p188) target = $region24
      $region23: #{_lambda_.5} parent=15 // pred_region
        %s191 = smul.u32 8, %s17
        %p192 = scmp.lt.s32.totalorder %s16, 1
        %s193 = scalar_select %p192, %s16, 1
        %p194 = scmp.lt.s32.totalorder %s191, 15
        %s195 = scalar_select %p194, %s191, 15
        %s196 = smul.addr %s195, 2
        %s197 = smul.addr %s193, 32
        %s198 = sadd.s32 %s196, %s197
        %s199 = smul.addr %s198, 8
        %s200 = scalar_lea.vmem %s1, %s199
        %s201 = smul.u32 8, %s17
      $region24: #{_lambda_.5} parent=15 // pred_fallthru
        _
      // Predicated region
      $region25: #{_lambda_.5} parent=15 // pred_check
        %p202 = pneg %p115
      $region26: #{_lambda_.5} parent=15 // pred_check_branch
        %204 = sbr.rel (%p202) target = $region28
      $region27: #{_lambda_.5} parent=15 // pred_region
        %s205 = sadd.s32 %s17, 1
        %s206 = smul.u32 %s205, 8
        %p207 = scmp.lt.s32.totalorder %s206, 15
        %s208 = scalar_select %p207, %s206, 15
        %p209 = scmp.lt.s32.totalorder %s16, 1
        %s210 = scalar_select %p209, %s16, 1
        %p211 = scmp.lt.s32.totalorder %s208, 15
        %s212 = scalar_select %p211, %s208, 15
        %s213 = smul.addr %s212, 2
        %s214 = smul.addr %s210, 32
        %s215 = sadd.s32 %s213, %s214
        %s216 = smul.addr %s215, 8
        %s217 = scalar_lea.vmem %s2, %s216
        %s218 = sadd.s32 %s17, 1
        %s219 = smul.u32 %s218, 8
        %p220 = scmp.lt.s32.totalorder %s219, 15
        %s221 = scalar_select %p220, %s219, 15
      $region28: #{_lambda_.5} parent=15 // pred_fallthru
        _
    $region16: #{_lambda_.5} parent=5 // pred_fallthru
      _
    %p222 = scmp.le.s32.totalorder 1, %s9
    %p223 = scmp.lt.s32.totalorder %s9, 5
    %p224 = pnand %p222, %p223
    %p225 = pneg %p224
    // Predicated region
    $region29: #{_lambda_.5} parent=5 // pred_check
      _
    $region30: #{_lambda_.5} parent=5 // pred_check_branch
      %227 = sbr.rel (%p224) target = $region32
    $region31: #{_lambda_.5} parent=5 // pred_region
      %s228 = ssub.s32 %s9, 1
      %s229 = smul.u32 %s19, 8
      %s230 = ssub.s32 %s229, 1
      %p231 = scmp.gt.s32.totalorder %s230, 0
      %s232 = scalar_select %p231, %s230, 0
      %p233 = scmp.lt.s32.totalorder %s18, 1
      %s234 = scalar_select %p233, %s18, 1
      %p235 = scmp.lt.s32.totalorder %s232, 15
      %s236 = scalar_select %p235, %s232, 15
      %s237 = smul.addr %s236, 2
      %s238 = smul.addr %s234, 32
      %s239 = sadd.s32 %s237, %s238
      %s240 = smul.addr %s239, 8
      %s241 = scalar_lea.vmem %s0, %s240
      %p242 = pneg %p57
      %p243 = pneg %p54
      %s244 = smul.u32 8, %s19
      %p245 = scmp.lt.s32.totalorder %s18, 1
      %s246 = scalar_select %p245, %s18, 1
      %p247 = scmp.lt.s32.totalorder %s244, 15
      %s248 = scalar_select %p247, %s244, 15
      %s249 = smul.addr %s248, 2
      %s250 = smul.addr %s246, 32
      %s251 = sadd.s32 %s249, %s250
      %s252 = smul.addr %s251, 8
      %s253 = scalar_lea.vmem %s1, %s252
      %p254 = pneg %p85
      %p255 = pneg %p82
      %s256 = sadd.s32 %s19, 1
      %s257 = smul.u32 %s256, 8
      %p258 = scmp.lt.s32.totalorder %s257, 15
      %s259 = scalar_select %p258, %s257, 15
      %p260 = scmp.lt.s32.totalorder %s18, 1
      %s261 = scalar_select %p260, %s18, 1
      %p262 = scmp.lt.s32.totalorder %s259, 15
      %s263 = scalar_select %p262, %s259, 15
      %s264 = smul.addr %s263, 2
      %s265 = smul.addr %s261, 32
      %s266 = sadd.s32 %s264, %s265
      %s267 = smul.addr %s266, 8
      %s268 = scalar_lea.vmem %s2, %s267
      %p269 = pneg %p121
      %p270 = pneg %p118
      %p271 = pneg %p149
      %p272 = pneg %p146
      %s273 = smul.u32 8, %s19
      %p274 = scmp.lt.s32.totalorder %s18, 1
      %s275 = scalar_select %p274, %s18, 1
      %p276 = scmp.lt.s32.totalorder %s273, 15
      %s277 = scalar_select %p276, %s273, 15
      %s278 = smul.addr %s277, 4
      %s279 = smul.addr %s275, 64
      %s280 = sadd.s32 %s278, %s279
      %s281 = smul.addr %s280, 8
      %s282 = scalar_lea.vmem %s3, %s281
      %s283 = smul.u32 %s19, 8
      %s284 = ssub.s32 %s283, 1
      %p285 = scmp.gt.s32.totalorder %s284, 0
      %s286 = scalar_select %p285, %s284, 0
      %p287 = scmp.lt.s32.totalorder %s18, 1
      %s288 = scalar_select %p287, %s18, 1
      %p289 = scmp.lt.s32.totalorder %s286, 15
      %s290 = scalar_select %p289, %s286, 15
      %s291 = smul.addr %s290, 2
      %s292 = smul.addr %s288, 32
      %s293 = sadd.s32 %s291, %s292
      %s294 = smul.addr %s293, 8
      %s295 = scalar_lea.vmem %s0, %s294
      %s296 = smul.u32 %s19, 8
      %s297 = ssub.s32 %s296, 1
      %p298 = scmp.gt.s32.totalorder %s297, 0
      %s299 = scalar_select %p298, %s297, 0
      %s300 = smul.u32 8, %s19
      %p301 = scmp.lt.s32.totalorder %s18, 1
      %s302 = scalar_select %p301, %s18, 1
      %p303 = scmp.lt.s32.totalorder %s300, 15
      %s304 = scalar_select %p303, %s300, 15
      %s305 = smul.addr %s304, 2
      %s306 = smul.addr %s302, 32
      %s307 = sadd.s32 %s305, %s306
      %s308 = smul.addr %s307, 8
      %s309 = scalar_lea.vmem %s1, %s308
      %s310 = smul.u32 8, %s19
      %s311 = sadd.s32 %s19, 1
      %s312 = smul.u32 %s311, 8
      %p313 = scmp.lt.s32.totalorder %s312, 15
      %s314 = scalar_select %p313, %s312, 15
      %p315 = scmp.lt.s32.totalorder %s18, 1
      %s316 = scalar_select %p315, %s18, 1
      %p317 = scmp.lt.s32.totalorder %s314, 15
      %s318 = scalar_select %p317, %s314, 15
      %s319 = smul.addr %s318, 2
      %s320 = smul.addr %s316, 32
      %s321 = sadd.s32 %s319, %s320
      %s322 = smul.addr %s321, 8
      %s323 = scalar_lea.vmem %s2, %s322
      %s324 = sadd.s32 %s19, 1
      %s325 = smul.u32 %s324, 8
      %p326 = scmp.lt.s32.totalorder %s325, 15
      %s327 = scalar_select %p326, %s325, 15
      %s328 = smul.u32 8, %s19
      %p329 = scmp.lt.s32.totalorder %s18, 1
      %s330 = scalar_select %p329, %s18, 1
      %p331 = scmp.lt.s32.totalorder %s328, 15
      %s332 = scalar_select %p331, %s328, 15
      %s333 = smul.addr %s332, 4
      %s334 = smul.addr %s330, 64
      %s335 = sadd.s32 %s333, %s334
      %s336 = smul.addr %s335, 8
      %s337 = scalar_lea.vmem %s3, %s336
      %s338 = smul.u32 8, %s19
      %v339 = vld [vmem:[%s295] sm:$0xff]
      %v340 = vld [vmem:[%s295 + $0x8] sm:$0xff]
      %v341 = vld [vmem:[%s309] sm:$0xff]
      %v342 = vld [vmem:[%s309 + $0x8] sm:$0xff]
      %v343 = vld [vmem:[%s309 + $0x10] sm:$0xff]
      %v344 = vld [vmem:[%s309 + $0x18] sm:$0xff]
      %v345 = vld [vmem:[%s309 + $0x20] sm:$0xff]
      %v346 = vld [vmem:[%s309 + $0x28] sm:$0xff]
      %v347 = vld [vmem:[%s309 + $0x30] sm:$0xff]
      %v348 = vld [vmem:[%s309 + $0x38] sm:$0xff]
      %v349 = vld [vmem:[%s309 + $0x40] sm:$0xff]
      %v350 = vld [vmem:[%s309 + $0x48] sm:$0xff]
      %v351 = vld [vmem:[%s309 + $0x50] sm:$0xff]
      %v352 = vld [vmem:[%s309 + $0x58] sm:$0xff]
      %v353 = vld [vmem:[%s309 + $0x60] sm:$0xff]
      %v354 = vld [vmem:[%s309 + $0x68] sm:$0xff]
      %v355 = vld [vmem:[%s309 + $0x70] sm:$0xff]
      %v356 = vld [vmem:[%s309 + $0x78] sm:$0xff]
      %v357 = vld [vmem:[%s323] sm:$0xff]
      %v358 = vld [vmem:[%s323 + $0x8] sm:$0xff]
      %v359 = vmul.f32 %v339, 0.25
      %v360 = vmul.f32 %v340, 0.25
      %v361 = vmul.f32 %v341, 0.25
      %v362 = vmul.f32 %v342, 0.25
      %v363 = vmul.f32 %v343, 0.25
      %v364 = vmul.f32 %v344, 0.25
      %v365 = vmul.f32 %v345, 0.25
      %v366 = vmul.f32 %v346, 0.25
      %v367 = vmul.f32 %v347, 0.25
      %v368 = vmul.f32 %v348, 0.25
      %v369 = vmul.f32 %v349, 0.25
      %v370 = vmul.f32 %v350, 0.25
      %v371 = vmul.f32 %v351, 0.25
      %v372 = vmul.f32 %v352, 0.25
      %v373 = vmul.f32 %v353, 0.25
      %v374 = vmul.f32 %v354, 0.25
      %v375 = vmul.f32 %v341, 0.75
      %v376 = vmul.f32 %v342, 0.75
      %v377 = vmul.f32 %v343, 0.75
      %v378 = vmul.f32 %v344, 0.75
      %v379 = vmul.f32 %v345, 0.75
      %v380 = vmul.f32 %v346, 0.75
      %v381 = vmul.f32 %v347, 0.75
      %v382 = vmul.f32 %v348, 0.75
      %v383 = vmul.f32 %v349, 0.75
      %v384 = vmul.f32 %v350, 0.75
      %v385 = vmul.f32 %v351, 0.75
      %v386 = vmul.f32 %v352, 0.75
      %v387 = vmul.f32 %v353, 0.75
      %v388 = vmul.f32 %v354, 0.75
      %v389 = vmul.f32 %v355, 0.75
      %v390 = vmul.f32 %v356, 0.75
      %v391 = vadd.f32 %v359, %v375
      %v392 = vadd.f32 %v360, %v376
      %v393 = vadd.f32 %v361, %v377
      %v394 = vadd.f32 %v362, %v378
      %v395 = vadd.f32 %v363, %v379
      %v396 = vadd.f32 %v364, %v380
      %v397 = vadd.f32 %v365, %v381
      %v398 = vadd.f32 %v366, %v382
      %v399 = vadd.f32 %v367, %v383
      %v400 = vadd.f32 %v368, %v384
      %v401 = vadd.f32 %v369, %v385
      %v402 = vadd.f32 %v370, %v386
      %v403 = vadd.f32 %v371, %v387
      %v404 = vadd.f32 %v372, %v388
      %v405 = vadd.f32 %v373, %v389
      %v406 = vadd.f32 %v374, %v390
      %v407 = vmul.f32 %v355, 0.25
      %v408 = vmul.f32 %v356, 0.25
      %v409 = vmul.f32 %v357, 0.25
      %v410 = vmul.f32 %v358, 0.25
      %v411 = vadd.f32 %v375, %v363
      %v412 = vadd.f32 %v376, %v364
      %v413 = vadd.f32 %v377, %v365
      %v414 = vadd.f32 %v378, %v366
      %v415 = vadd.f32 %v379, %v367
      %v416 = vadd.f32 %v380, %v368
      %v417 = vadd.f32 %v381, %v369
      %v418 = vadd.f32 %v382, %v370
      %v419 = vadd.f32 %v383, %v371
      %v420 = vadd.f32 %v384, %v372
      %v421 = vadd.f32 %v385, %v373
      %v422 = vadd.f32 %v386, %v374
      %v423 = vadd.f32 %v387, %v407
      %v424 = vadd.f32 %v388, %v408
      %v425 = vadd.f32 %v389, %v409
      %v426 = vadd.f32 %v390, %v410
      %vm443 = vcmask 1040384
      %v444 = vrot.slane %v391, 7
      %v445 = vrot.slane %v392, 7
      %v446 = vsel %vm443, %v444, %v445
      %v447 = vrot.slane %v393, 7
      %v448 = vrot.slane %v394, 7
      %v449 = vsel %vm443, %v447, %v448
      %v450 = vrot.slane %v395, 7
      %v451 = vrot.slane %v396, 7
      %v452 = vsel %vm443, %v450, %v451
      %v453 = vrot.slane %v397, 7
      %v454 = vrot.slane %v398, 7
      %v455 = vsel %vm443, %v453, %v454
      %v456 = vrot.slane %v399, 7
      %v457 = vrot.slane %v400, 7
      %v458 = vsel %vm443, %v456, %v457
      %v459 = vrot.slane %v401, 7
      %v460 = vrot.slane %v402, 7
      %v461 = vsel %vm443, %v459, %v460
      %v462 = vrot.slane %v403, 7
      %v463 = vrot.slane %v404, 7
      %v464 = vsel %vm443, %v462, %v463
      %v465 = vrot.slane %v405, 7
      %v466 = vrot.slane %v406, 7
      %v467 = vsel %vm443, %v465, %v466
      %v484 = vsel %vm443, %v391, %v444
      %v485 = vsel %vm443, %v393, %v447
      %v486 = vsel %vm443, %v395, %v450
      %v487 = vsel %vm443, %v397, %v453
      %v488 = vsel %vm443, %v399, %v456
      %v489 = vsel %vm443, %v401, %v459
      %v490 = vsel %vm443, %v403, %v462
      %v491 = vsel %vm443, %v405, %v465
      %vm492 = vcmask 1046528
      %v493 = vrot.slane %v391, 1
      %v494 = vrot.slane %v392, 1
      %v495 = vsel %vm492, %v493, %v494
      %v496 = vrot.slane %v393, 1
      %v497 = vrot.slane %v394, 1
      %v498 = vsel %vm492, %v496, %v497
      %v499 = vrot.slane %v395, 1
      %v500 = vrot.slane %v396, 1
      %v501 = vsel %vm492, %v499, %v500
      %v502 = vrot.slane %v397, 1
      %v503 = vrot.slane %v398, 1
      %v504 = vsel %vm492, %v502, %v503
      %v505 = vrot.slane %v399, 1
      %v506 = vrot.slane %v400, 1
      %v507 = vsel %vm492, %v505, %v506
      %v508 = vrot.slane %v401, 1
      %v509 = vrot.slane %v402, 1
      %v510 = vsel %vm492, %v508, %v509
      %v511 = vrot.slane %v403, 1
      %v512 = vrot.slane %v404, 1
      %v513 = vsel %vm492, %v511, %v512
      %v514 = vrot.slane %v405, 1
      %v515 = vrot.slane %v406, 1
      %v516 = vsel %vm492, %v514, %v515
      %v533 = vsel %vm492, %v494, %v392
      %v534 = vsel %vm492, %v497, %v394
      %v535 = vsel %vm492, %v500, %v396
      %v536 = vsel %vm492, %v503, %v398
      %v537 = vsel %vm492, %v506, %v400
      %v538 = vsel %vm492, %v509, %v402
      %v539 = vsel %vm492, %v512, %v404
      %v540 = vsel %vm492, %v515, %v406
      %v541 = vmul.f32 %v484, 0.25
      %v542 = vmul.f32 %v446, 0.25
      %v543 = vmul.f32 %v485, 0.25
      %v544 = vmul.f32 %v449, 0.25
      %v545 = vmul.f32 %v486, 0.25
      %v546 = vmul.f32 %v452, 0.25
      %v547 = vmul.f32 %v487, 0.25
      %v548 = vmul.f32 %v455, 0.25
      %v549 = vmul.f32 %v488, 0.25
      %v550 = vmul.f32 %v458, 0.25
      %v551 = vmul.f32 %v489, 0.25
      %v552 = vmul.f32 %v461, 0.25
      %v553 = vmul.f32 %v490, 0.25
      %v554 = vmul.f32 %v464, 0.25
      %v555 = vmul.f32 %v491, 0.25
      %v556 = vmul.f32 %v467, 0.25
      %v557 = vmul.f32 %v391, 0.75
      %v558 = vmul.f32 %v392, 0.75
      %v559 = vmul.f32 %v393, 0.75
      %v560 = vmul.f32 %v394, 0.75
      %v561 = vmul.f32 %v395, 0.75
      %v562 = vmul.f32 %v396, 0.75
      %v563 = vmul.f32 %v397, 0.75
      %v564 = vmul.f32 %v398, 0.75
      %v565 = vmul.f32 %v399, 0.75
      %v566 = vmul.f32 %v400, 0.75
      %v567 = vmul.f32 %v401, 0.75
      %v568 = vmul.f32 %v402, 0.75
      %v569 = vmul.f32 %v403, 0.75
      %v570 = vmul.f32 %v404, 0.75
      %v571 = vmul.f32 %v405, 0.75
      %v572 = vmul.f32 %v406, 0.75
      %v573 = vadd.f32 %v541, %v557
      %v574 = vadd.f32 %v542, %v558
      %v575 = vadd.f32 %v543, %v559
      %v576 = vadd.f32 %v544, %v560
      %v577 = vadd.f32 %v545, %v561
      %v578 = vadd.f32 %v546, %v562
      %v579 = vadd.f32 %v547, %v563
      %v580 = vadd.f32 %v548, %v564
      %v581 = vadd.f32 %v549, %v565
      %v582 = vadd.f32 %v550, %v566
      %v583 = vadd.f32 %v551, %v567
      %v584 = vadd.f32 %v552, %v568
      %v585 = vadd.f32 %v553, %v569
      %v586 = vadd.f32 %v554, %v570
      %v587 = vadd.f32 %v555, %v571
      %v588 = vadd.f32 %v556, %v572
      %v589 = vmul.f32 %v495, 0.25
      %v590 = vmul.f32 %v533, 0.25
      %v591 = vmul.f32 %v498, 0.25
      %v592 = vmul.f32 %v534, 0.25
      %v593 = vmul.f32 %v501, 0.25
      %v594 = vmul.f32 %v535, 0.25
      %v595 = vmul.f32 %v504, 0.25
      %v596 = vmul.f32 %v536, 0.25
      %v597 = vmul.f32 %v507, 0.25
      %v598 = vmul.f32 %v537, 0.25
      %v599 = vmul.f32 %v510, 0.25
      %v600 = vmul.f32 %v538, 0.25
      %v601 = vmul.f32 %v513, 0.25
      %v602 = vmul.f32 %v539, 0.25
      %v603 = vmul.f32 %v516, 0.25
      %v604 = vmul.f32 %v540, 0.25
      %v605 = vadd.f32 %v557, %v589
      %v606 = vadd.f32 %v558, %v590
      %v607 = vadd.f32 %v559, %v591
      %v608 = vadd.f32 %v560, %v592
      %v609 = vadd.f32 %v561, %v593
      %v610 = vadd.f32 %v562, %v594
      %v611 = vadd.f32 %v563, %v595
      %v612 = vadd.f32 %v564, %v596
      %v613 = vadd.f32 %v565, %v597
      %v614 = vadd.f32 %v566, %v598
      %v615 = vadd.f32 %v567, %v599
      %v616 = vadd.f32 %v568, %v600
      %v617 = vadd.f32 %v569, %v601
      %v618 = vadd.f32 %v570, %v602
      %v619 = vadd.f32 %v571, %v603
      %v620 = vadd.f32 %v572, %v604
      %637 = vrot.lane.b32.xlu0 %v605, 8
      %v638 = vpop.permute.xlu0 %637
      %639 = vrot.lane.b32.xlu0 %v606, 8
      %v640 = vpop.permute.xlu0 %639
      %641 = vrot.lane.b32.xlu0 %v607, 8
      %v642 = vpop.permute.xlu0 %641
      %643 = vrot.lane.b32.xlu0 %v608, 8
      %v644 = vpop.permute.xlu0 %643
      %645 = vrot.lane.b32.xlu0 %v609, 8
      %v646 = vpop.permute.xlu0 %645
      %647 = vrot.lane.b32.xlu0 %v610, 8
      %v648 = vpop.permute.xlu0 %647
      %649 = vrot.lane.b32.xlu0 %v611, 8
      %v650 = vpop.permute.xlu0 %649
      %651 = vrot.lane.b32.xlu0 %v612, 8
      %v652 = vpop.permute.xlu0 %651
      %653 = vrot.lane.b32.xlu0 %v613, 8
      %v654 = vpop.permute.xlu0 %653
      %655 = vrot.lane.b32.xlu0 %v614, 8
      %v656 = vpop.permute.xlu0 %655
      %657 = vrot.lane.b32.xlu0 %v615, 8
      %v658 = vpop.permute.xlu0 %657
      %659 = vrot.lane.b32.xlu0 %v616, 8
      %v660 = vpop.permute.xlu0 %659
      %661 = vrot.lane.b32.xlu0 %v617, 8
      %v662 = vpop.permute.xlu0 %661
      %663 = vrot.lane.b32.xlu0 %v618, 8
      %v664 = vpop.permute.xlu0 %663
      %665 = vrot.lane.b32.xlu0 %v619, 8
      %v666 = vpop.permute.xlu0 %665
      %667 = vrot.lane.b32.xlu0 %v620, 8
      %v668 = vpop.permute.xlu0 %667
      %vm685 = vcmask 64512
      %v686 = vsel %vm685, %v573, %v638
      %v687 = vsel %vm685, %v574, %v640
      %v688 = vsel %vm685, %v575, %v642
      %v689 = vsel %vm685, %v576, %v644
      %v690 = vsel %vm685, %v577, %v646
      %v691 = vsel %vm685, %v578, %v648
      %v692 = vsel %vm685, %v579, %v650
      %v693 = vsel %vm685, %v580, %v652
      %v694 = vsel %vm685, %v581, %v654
      %v695 = vsel %vm685, %v582, %v656
      %v696 = vsel %vm685, %v583, %v658
      %v697 = vsel %vm685, %v584, %v660
      %v698 = vsel %vm685, %v585, %v662
      %v699 = vsel %vm685, %v586, %v664
      %v700 = vsel %vm685, %v587, %v666
      %v701 = vsel %vm685, %v588, %v668
      %vm702 = vcmask 130048
      %703 = vst.msk [vmem:[%s337] sm:$0xff] %vm702, %v686
      %704 = vst.msk [vmem:[%s337 + $0x8] sm:$0xff] %vm702, %v687
      %705 = vst.msk [vmem:[%s337 + $0x20] sm:$0xff] %vm702, %v688
      %706 = vst.msk [vmem:[%s337 + $0x28] sm:$0xff] %vm702, %v689
      %707 = vst.msk [vmem:[%s337 + $0x40] sm:$0xff] %vm702, %v690
      %708 = vst.msk [vmem:[%s337 + $0x48] sm:$0xff] %vm702, %v691
      %709 = vst.msk [vmem:[%s337 + $0x60] sm:$0xff] %vm702, %v692
      %710 = vst.msk [vmem:[%s337 + $0x68] sm:$0xff] %vm702, %v693
      %711 = vst.msk [vmem:[%s337 + $0x80] sm:$0xff] %vm702, %v694
      %712 = vst.msk [vmem:[%s337 + $0x88] sm:$0xff] %vm702, %v695
      %713 = vst.msk [vmem:[%s337 + $0xa0] sm:$0xff] %vm702, %v696
      %714 = vst.msk [vmem:[%s337 + $0xa8] sm:$0xff] %vm702, %v697
      %715 = vst.msk [vmem:[%s337 + $0xc0] sm:$0xff] %vm702, %v698
      %716 = vst.msk [vmem:[%s337 + $0xc8] sm:$0xff] %vm702, %v699
      %717 = vst.msk [vmem:[%s337 + $0xe0] sm:$0xff] %vm702, %v700
      %718 = vst.msk [vmem:[%s337 + $0xe8] sm:$0xff] %vm702, %v701
      %v735 = vrot.slane %v411, 7
      %v736 = vrot.slane %v412, 7
      %v737 = vsel %vm443, %v735, %v736
      %v738 = vrot.slane %v413, 7
      %v739 = vrot.slane %v414, 7
      %v740 = vsel %vm443, %v738, %v739
      %v741 = vrot.slane %v415, 7
      %v742 = vrot.slane %v416, 7
      %v743 = vsel %vm443, %v741, %v742
      %v744 = vrot.slane %v417, 7
      %v745 = vrot.slane %v418, 7
      %v746 = vsel %vm443, %v744, %v745
      %v747 = vrot.slane %v419, 7
      %v748 = vrot.slane %v420, 7
      %v749 = vsel %vm443, %v747, %v748
      %v750 = vrot.slane %v421, 7
      %v751 = vrot.slane %v422, 7
      %v752 = vsel %vm443, %v750, %v751
      %v753 = vrot.slane %v423, 7
      %v754 = vrot.slane %v424, 7
      %v755 = vsel %vm443, %v753, %v754
      %v756 = vrot.slane %v425, 7
      %v757 = vrot.slane %v426, 7
      %v758 = vsel %vm443, %v756, %v757
      %v775 = vsel %vm443, %v411, %v735
      %v776 = vsel %vm443, %v413, %v738
      %v777 = vsel %vm443, %v415, %v741
      %v778 = vsel %vm443, %v417, %v744
      %v779 = vsel %vm443, %v419, %v747
      %v780 = vsel %vm443, %v421, %v750
      %v781 = vsel %vm443, %v423, %v753
      %v782 = vsel %vm443, %v425, %v756
      %v783 = vrot.slane %v411, 1
      %v784 = vrot.slane %v412, 1
      %v785 = vsel %vm492, %v783, %v784
      %v786 = vrot.slane %v413, 1
      %v787 = vrot.slane %v414, 1
      %v788 = vsel %vm492, %v786, %v787
      %v789 = vrot.slane %v415, 1
      %v790 = vrot.slane %v416, 1
      %v791 = vsel %vm492, %v789, %v790
      %v792 = vrot.slane %v417, 1
      %v793 = vrot.slane %v418, 1
      %v794 = vsel %vm492, %v792, %v793
      %v795 = vrot.slane %v419, 1
      %v796 = vrot.slane %v420, 1
      %v797 = vsel %vm492, %v795, %v796
      %v798 = vrot.slane %v421, 1
      %v799 = vrot.slane %v422, 1
      %v800 = vsel %vm492, %v798, %v799
      %v801 = vrot.slane %v423, 1
      %v802 = vrot.slane %v424, 1
      %v803 = vsel %vm492, %v801, %v802
      %v804 = vrot.slane %v425, 1
      %v805 = vrot.slane %v426, 1
      %v806 = vsel %vm492, %v804, %v805
      %v823 = vsel %vm492, %v784, %v412
      %v824 = vsel %vm492, %v787, %v414
      %v825 = vsel %vm492, %v790, %v416
      %v826 = vsel %vm492, %v793, %v418
      %v827 = vsel %vm492, %v796, %v420
      %v828 = vsel %vm492, %v799, %v422
      %v829 = vsel %vm492, %v802, %v424
      %v830 = vsel %vm492, %v805, %v426
      %v831 = vmul.f32 %v775, 0.25
      %v832 = vmul.f32 %v737, 0.25
      %v833 = vmul.f32 %v776, 0.25
      %v834 = vmul.f32 %v740, 0.25
      %v835 = vmul.f32 %v777, 0.25
      %v836 = vmul.f32 %v743, 0.25
      %v837 = vmul.f32 %v778, 0.25
      %v838 = vmul.f32 %v746, 0.25
      %v839 = vmul.f32 %v779, 0.25
      %v840 = vmul.f32 %v749, 0.25
      %v841 = vmul.f32 %v780, 0.25
      %v842 = vmul.f32 %v752, 0.25
      %v843 = vmul.f32 %v781, 0.25
      %v844 = vmul.f32 %v755, 0.25
      %v845 = vmul.f32 %v782, 0.25
      %v846 = vmul.f32 %v758, 0.25
      %v847 = vmul.f32 %v411, 0.75
      %v848 = vmul.f32 %v412, 0.75
      %v849 = vmul.f32 %v413, 0.75
      %v850 = vmul.f32 %v414, 0.75
      %v851 = vmul.f32 %v415, 0.75
      %v852 = vmul.f32 %v416, 0.75
      %v853 = vmul.f32 %v417, 0.75
      %v854 = vmul.f32 %v418, 0.75
      %v855 = vmul.f32 %v419, 0.75
      %v856 = vmul.f32 %v420, 0.75
      %v857 = vmul.f32 %v421, 0.75
      %v858 = vmul.f32 %v422, 0.75
      %v859 = vmul.f32 %v423, 0.75
      %v860 = vmul.f32 %v424, 0.75
      %v861 = vmul.f32 %v425, 0.75
      %v862 = vmul.f32 %v426, 0.75
      %v863 = vadd.f32 %v831, %v847
      %v864 = vadd.f32 %v832, %v848
      %v865 = vadd.f32 %v833, %v849
      %v866 = vadd.f32 %v834, %v850
      %v867 = vadd.f32 %v835, %v851
      %v868 = vadd.f32 %v836, %v852
      %v869 = vadd.f32 %v837, %v853
      %v870 = vadd.f32 %v838, %v854
      %v871 = vadd.f32 %v839, %v855
      %v872 = vadd.f32 %v840, %v856
      %v873 = vadd.f32 %v841, %v857
      %v874 = vadd.f32 %v842, %v858
      %v875 = vadd.f32 %v843, %v859
      %v876 = vadd.f32 %v844, %v860
      %v877 = vadd.f32 %v845, %v861
      %v878 = vadd.f32 %v846, %v862
      %v879 = vmul.f32 %v785, 0.25
      %v880 = vmul.f32 %v823, 0.25
      %v881 = vmul.f32 %v788, 0.25
      %v882 = vmul.f32 %v824, 0.25
      %v883 = vmul.f32 %v791, 0.25
      %v884 = vmul.f32 %v825, 0.25
      %v885 = vmul.f32 %v794, 0.25
      %v886 = vmul.f32 %v826, 0.25
      %v887 = vmul.f32 %v797, 0.25
      %v888 = vmul.f32 %v827, 0.25
      %v889 = vmul.f32 %v800, 0.25
      %v890 = vmul.f32 %v828, 0.25
      %v891 = vmul.f32 %v803, 0.25
      %v892 = vmul.f32 %v829, 0.25
      %v893 = vmul.f32 %v806, 0.25
      %v894 = vmul.f32 %v830, 0.25
      %v895 = vadd.f32 %v847, %v879
      %v896 = vadd.f32 %v848, %v880
      %v897 = vadd.f32 %v849, %v881
      %v898 = vadd.f32 %v850, %v882
      %v899 = vadd.f32 %v851, %v883
      %v900 = vadd.f32 %v852, %v884
      %v901 = vadd.f32 %v853, %v885
      %v902 = vadd.f32 %v854, %v886
      %v903 = vadd.f32 %v855, %v887
      %v904 = vadd.f32 %v856, %v888
      %v905 = vadd.f32 %v857, %v889
      %v906 = vadd.f32 %v858, %v890
      %v907 = vadd.f32 %v859, %v891
      %v908 = vadd.f32 %v860, %v892
      %v909 = vadd.f32 %v861, %v893
      %v910 = vadd.f32 %v862, %v894
      %927 = vrot.lane.b32.xlu0 %v895, 8
      %v928 = vpop.permute.xlu0 %927
      %929 = vrot.lane.b32.xlu0 %v896, 8
      %v930 = vpop.permute.xlu0 %929
      %931 = vrot.lane.b32.xlu0 %v897, 8
      %v932 = vpop.permute.xlu0 %931
      %933 = vrot.lane.b32.xlu0 %v898, 8
      %v934 = vpop.permute.xlu0 %933
      %935 = vrot.lane.b32.xlu0 %v899, 8
      %v936 = vpop.permute.xlu0 %935
      %937 = vrot.lane.b32.xlu0 %v900, 8
      %v938 = vpop.permute.xlu0 %937
      %939 = vrot.lane.b32.xlu0 %v901, 8
      %v940 = vpop.permute.xlu0 %939
      %941 = vrot.lane.b32.xlu0 %v902, 8
      %v942 = vpop.permute.xlu0 %941
      %943 = vrot.lane.b32.xlu0 %v903, 8
      %v944 = vpop.permute.xlu0 %943
      %945 = vrot.lane.b32.xlu0 %v904, 8
      %v946 = vpop.permute.xlu0 %945
      %947 = vrot.lane.b32.xlu0 %v905, 8
      %v948 = vpop.permute.xlu0 %947
      %949 = vrot.lane.b32.xlu0 %v906, 8
      %v950 = vpop.permute.xlu0 %949
      %951 = vrot.lane.b32.xlu0 %v907, 8
      %v952 = vpop.permute.xlu0 %951
      %953 = vrot.lane.b32.xlu0 %v908, 8
      %v954 = vpop.permute.xlu0 %953
      %955 = vrot.lane.b32.xlu0 %v909, 8
      %v956 = vpop.permute.xlu0 %955
      %957 = vrot.lane.b32.xlu0 %v910, 8
      %v958 = vpop.permute.xlu0 %957
      %v975 = vsel %vm685, %v863, %v928
      %v976 = vsel %vm685, %v864, %v930
      %v977 = vsel %vm685, %v865, %v932
      %v978 = vsel %vm685, %v866, %v934
      %v979 = vsel %vm685, %v867, %v936
      %v980 = vsel %vm685, %v868, %v938
      %v981 = vsel %vm685, %v869, %v940
      %v982 = vsel %vm685, %v870, %v942
      %v983 = vsel %vm685, %v871, %v944
      %v984 = vsel %vm685, %v872, %v946
      %v985 = vsel %vm685, %v873, %v948
      %v986 = vsel %vm685, %v874, %v950
      %v987 = vsel %vm685, %v875, %v952
      %v988 = vsel %vm685, %v876, %v954
      %v989 = vsel %vm685, %v877, %v956
      %v990 = vsel %vm685, %v878, %v958
      %s991 = scalar_lea.vmem %s337, 16
      %992 = vst.msk [vmem:[%s991] sm:$0xff] %vm702, %v975
      %993 = vst.msk [vmem:[%s991 + $0x8] sm:$0xff] %vm702, %v976
      %994 = vst.msk [vmem:[%s991 + $0x20] sm:$0xff] %vm702, %v977
      %995 = vst.msk [vmem:[%s991 + $0x28] sm:$0xff] %vm702, %v978
      %996 = vst.msk [vmem:[%s991 + $0x40] sm:$0xff] %vm702, %v979
      %997 = vst.msk [vmem:[%s991 + $0x48] sm:$0xff] %vm702, %v980
      %998 = vst.msk [vmem:[%s991 + $0x60] sm:$0xff] %vm702, %v981
      %999 = vst.msk [vmem:[%s991 + $0x68] sm:$0xff] %vm702, %v982
      %1000 = vst.msk [vmem:[%s991 + $0x80] sm:$0xff] %vm702, %v983
      %1001 = vst.msk [vmem:[%s991 + $0x88] sm:$0xff] %vm702, %v984
      %1002 = vst.msk [vmem:[%s991 + $0xa0] sm:$0xff] %vm702, %v985
      %1003 = vst.msk [vmem:[%s991 + $0xa8] sm:$0xff] %vm702, %v986
      %1004 = vst.msk [vmem:[%s991 + $0xc0] sm:$0xff] %vm702, %v987
      %1005 = vst.msk [vmem:[%s991 + $0xc8] sm:$0xff] %vm702, %v988
      %1006 = vst.msk [vmem:[%s991 + $0xe0] sm:$0xff] %vm702, %v989
      %1007 = vst.msk [vmem:[%s991 + $0xe8] sm:$0xff] %vm702, %v990
      %s1008 = smul.u32 8, %s19
      %p1009 = scmp.lt.s32.totalorder %s18, 1
      %s1010 = scalar_select %p1009, %s18, 1
      %p1011 = scmp.lt.s32.totalorder %s1008, 15
      %s1012 = scalar_select %p1011, %s1008, 15
      %s1013 = smul.addr %s1012, 4
      %s1014 = smul.addr %s1010, 64
      %s1015 = sadd.s32 %s1013, %s1014
      %s1016 = smul.addr %s1015, 8
      %s1017 = scalar_lea.vmem %s3, %s1016
      // Predicated region
      $region33: #{_lambda_.5} parent=31 // pred_check
        %p1018 = pneg %p146
      $region34: #{_lambda_.5} parent=31 // pred_check_branch
        %1020 = sbr.rel (%p1018) target = $region36
      $region35: #{_lambda_.5} parent=31 // pred_region
        %s1021 = smul.u32 8, %s19
      $region36: #{_lambda_.5} parent=31 // pred_fallthru
        _
    $region32: #{_lambda_.5} parent=5 // pred_fallthru
      _
    %p1022 = scmp.le.s32.totalorder 2, %s9
    // Predicated region
    $region37: #{_lambda_.5} parent=5 // pred_check
      %p1023 = pneg %p1022
    $region38: #{_lambda_.5} parent=5 // pred_check_branch
      %1025 = sbr.rel (%p1023) target = $region40
    $region39: #{_lambda_.5} parent=5 // pred_region
      %s1026 = ssub.s32 %s9, 2
      // Predicated region
      $region41: #{_lambda_.5} parent=39 // pred_check
        %p1027 = pneg %p152
      $region42: #{_lambda_.5} parent=39 // pred_check_branch
        %1029 = sbr.rel (%p1027) target = $region44
      $region43: #{_lambda_.5} parent=39 // pred_region
        %s1030 = smul.u32 8, %s21
        %p1031 = scmp.lt.s32.totalorder %s20, 1
        %s1032 = scalar_select %p1031, %s20, 1
        %p1033 = scmp.lt.s32.totalorder %s1030, 15
        %s1034 = scalar_select %p1033, %s1030, 15
        %s1035 = smul.addr %s1034, 4
        %s1036 = smul.addr %s1032, 64
        %s1037 = sadd.s32 %s1035, %s1036
        %s1038 = smul.addr %s1037, 8
        %s1039 = scalar_lea.vmem %s3, %s1038
      $region44: #{_lambda_.5} parent=39 // pred_fallthru
        _
    $region40: #{_lambda_.5} parent=5 // pred_fallthru
      _
  $region6: #{_lambda_.5} parent=0 // loop_footer
    %s13 = sadd.s32 1, %s9
  $region7: #{_lambda_.5} parent=0 // loop_footer_branch
    %8 = sbr.rel target = $region3
  $region8: #{_lambda_.5} parent=0 // loop_exit
    _

// kernel: _lambda_.3
$region0: #{_lambda_.3}
  #allocation0 [shape = 'u32[]', space=smem, size = 0x4, offset = 0x4, fixed_abs, tag = 'smem constant byte address 0x4 - core index']
  #allocation1 [shape = 'u32[144,128]{1,0:T(1,128)}', space=vmem, size = 0x12000, scoped, tag = 'internal scratch']
  %s0 = inlined_call_operand.vmem [shape: f32[2,16,16,4], index: 0, kind: input, shape index: {}, may-alias: {0,1,2}]
  %s1 = inlined_call_operand.vmem [shape: f32[2,16,16,4], index: 1, kind: input, shape index: {}, may-alias: {0,1,2}]
  %s2 = inlined_call_operand.vmem [shape: f32[2,16,16,4], index: 2, kind: input, shape index: {}, may-alias: {0,1,2}]
  %s3 = inlined_call_operand.vmem [shape: f32[9,4], index: 3, kind: input, shape index: {}]
  %s4 = inlined_call_operand.vmem [shape: f32[1,4], index: 4, kind: input, shape index: {}]
  %s5 = inlined_call_operand.vmem [shape: f32[1,4], index: 5, kind: input, shape index: {}]
  %s6 = inlined_call_operand.vmem [shape: bf16[4,8], index: 6, kind: input, shape index: {}]
  %s7 = inlined_call_operand.vmem [shape: f32[1,8], index: 7, kind: input, shape index: {}]
  %s8 = inlined_call_operand.vmem [shape: f32[1,8], index: 8, kind: input, shape index: {}]
  %s9 = inlined_call_operand.vmem [shape: f32[2,16,16,8], index: 9, kind: output, shape index: {}]
  %s10 = sld [smem:[#allocation0]]
  $region69: #{_lambda_.3} parent=0
    _
  %s12 = ssub.s32 1, %s10
  %s13 = scalar_select 0, %s12, %s10
  loop: start=0, step=1, limit=6
  $region2: #{_lambda_.3} parent=0 // loop_pre_header
    _
  $region3: #{_lambda_.3} parent=0 // loop_header
    %s15 = sphi 0, %s19
    %p16 = scmp.ge.s32.totalorder %s15, 6
    %s22 = sphi 0, %s34
    %s23 = sphi 0, %s30
    %s24 = sphi 0, %s22
    %s25 = sphi 0, %s23
    %s26 = sphi 0, %s24
    %s27 = sphi 0, %s25
    %s47 = sphi 0, %s49
    %s50 = sphi 0, %s47
    %s51 = sphi 0, %s50
    %s67 = sphi 0, %s51
    %s75 = sphi 0, %s77
    %s78 = sphi 0, %s75
    %s79 = sphi 0, %s78
    %s95 = sphi 0, %s79
    %s111 = sphi 0, %s113
    %s114 = sphi 0, %s111
    %s115 = sphi 0, %s114
    %s131 = sphi 0, %s115
    %s135 = sphi 0, %s135
    %s137 = sphi 0, %s135
    %s138 = sphi 0, %s137
    %s152 = sphi 0, %s138
    %s156 = sphi 0, %s156
    %s158 = sphi 0, %s156
    %s159 = sphi 0, %s158
    %s173 = sphi 0, %s159
    %s177 = sphi 0, %s177
    %s179 = sphi 0, %s177
    %s180 = sphi 0, %s179
    %s194 = sphi 0, %s180
    %s198 = sphi 0, %s198
    %s200 = sphi 0, %s198
    %s201 = sphi 0, %s200
    %s215 = sphi 0, %s201
    %s219 = sphi 0, %s219
    %s221 = sphi 0, %s219
    %s222 = sphi 0, %s221
    %s236 = sphi 0, %s222
    %s240 = sphi 0, %s240
    %s242 = sphi 0, %s240
    %s243 = sphi 0, %s242
    %s257 = sphi 0, %s243
    %s265 = sphi 0, %s267
    %s268 = sphi 0, %s265
    %s269 = sphi 0, %s268
    %s285 = sphi 0, %s269
  $region4: #{_lambda_.3} parent=0 // loop_header_branch
    %18 = sbr.rel (%p16) target = $region8
  $region5: #{_lambda_.3} parent=0 // loop_body
    %s20 = ssub.s32 %s15, 1
    %s21 = ssub.s32 %s15, 2
    %s28 = sadd.s32 1, %s23
    %p29 = scmp.ge.s32.totalorder %s28, 2
    %s30 = scalar_select %p29, 0, %s28
    %s31 = sadd.s32 1, %s22
    %s32 = scalar_select %p29, %s31, %s22
    %p33 = scmp.ge.s32.totalorder %s32, 2
    %s34 = scalar_select %p33, 0, %s32
    %s35 = smul.u32 %s23, 8
    %s36 = ssub.s32 %s35, 1
    %p37 = scmp.gt.s32.totalorder %s36, 0
    %s38 = scalar_select %p37, %s36, 0
    %s39 = smul.u32 %s30, 8
    %s40 = ssub.s32 %s39, 1
    %p41 = scmp.gt.s32.totalorder %s40, 0
    %s42 = scalar_select %p41, %s40, 0
    %s43 = ssub.s32 %s22, %s34
    %s44 = ssub.s32 %s38, %s42
    %s45 = sor.u32 %s43, %s44
    %p46 = scmp.eq.s32.totalorder %s45, 0
    %s48 = sadd.s32 %s47, 1
    %s49 = scalar_select %p46, %s47, %s48
    %p52 = pneg %p46
    %p53 = scmp.eq.s32.totalorder %s15, 3
    %p54 = por %p52, %p53
    %p55 = scmp.ne.s32.totalorder %s47, %s50
    %p56 = scmp.eq.s32.totalorder %s15, 0
    %p57 = por %p55, %p56
    %p58 = scmp.ne.s32.totalorder %s47, %s50
    %p59 = scmp.eq.s32.totalorder %s20, 3
    %p60 = por %p58, %p59
    %p61 = scmp.ne.s32.totalorder %s50, %s51
    %p62 = scmp.eq.s32.totalorder %s20, 0
    %p63 = por %p61, %p62
    %p64 = scmp.ne.s32.totalorder %s50, %s51
    %p65 = scmp.eq.s32.totalorder %s21, 3
    %p66 = por %p64, %p65
    %p68 = scmp.ne.s32.totalorder %s51, %s67
    %p69 = scmp.eq.s32.totalorder %s21, 0
    %p70 = por %p68, %p69
    %s71 = ssub.s32 %s22, %s34
    %s72 = ssub.s32 %s23, %s30
    %s73 = sor.u32 %s71, %s72
    %p74 = scmp.eq.s32.totalorder %s73, 0
    %s76 = sadd.s32 %s75, 1
    %s77 = scalar_select %p74, %s75, %s76
    %p80 = pneg %p74
    %p81 = scmp.eq.s32.totalorder %s15, 3
    %p82 = por %p80, %p81
    %p83 = scmp.ne.s32.totalorder %s75, %s78
    %p84 = scmp.eq.s32.totalorder %s15, 0
    %p85 = por %p83, %p84
    %p86 = scmp.ne.s32.totalorder %s75, %s78
    %p87 = scmp.eq.s32.totalorder %s20, 3
    %p88 = por %p86, %p87
    %p89 = scmp.ne.s32.totalorder %s78, %s79
    %p90 = scmp.eq.s32.totalorder %s20, 0
    %p91 = por %p89, %p90
    %p92 = scmp.ne.s32.totalorder %s78, %s79
    %p93 = scmp.eq.s32.totalorder %s21, 3
    %p94 = por %p92, %p93
    %p96 = scmp.ne.s32.totalorder %s79, %s95
    %p97 = scmp.eq.s32.totalorder %s21, 0
    %p98 = por %p96, %p97
    %s99 = sadd.s32 %s23, 1
    %s100 = smul.u32 %s99, 8
    %p101 = scmp.lt.s32.totalorder %s100, 15
    %s102 = scalar_select %p101, %s100, 15
    %s103 = sadd.s32 %s30, 1
    %s104 = smul.u32 %s103, 8
    %p105 = scmp.lt.s32.totalorder %s104, 15
    %s106 = scalar_select %p105, %s104, 15
    %s107 = ssub.s32 %s22, %s34
    %s108 = ssub.s32 %s102, %s106
    %s109 = sor.u32 %s107, %s108
    %p110 = scmp.eq.s32.totalorder %s109, 0
    %s112 = sadd.s32 %s111, 1
    %s113 = scalar_select %p110, %s111, %s112
    %p116 = pneg %p110
    %p117 = scmp.eq.s32.totalorder %s15, 3
    %p118 = por %p116, %p117
    %p119 = scmp.ne.s32.totalorder %s111, %s114
    %p120 = scmp.eq.s32.totalorder %s15, 0
    %p121 = por %p119, %p120
    %p122 = scmp.ne.s32.totalorder %s111, %s114
    %p123 = scmp.eq.s32.totalorder %s20, 3
    %p124 = por %p122, %p123
    %p125 = scmp.ne.s32.totalorder %s114, %s115
    %p126 = scmp.eq.s32.totalorder %s20, 0
    %p127 = por %p125, %p126
    %p128 = scmp.ne.s32.totalorder %s114, %s115
    %p129 = scmp.eq.s32.totalorder %s21, 3
    %p130 = por %p128, %p129
    %p132 = scmp.ne.s32.totalorder %s115, %s131
    %p133 = scmp.eq.s32.totalorder %s21, 0
    %p134 = por %p132, %p133
    %s136 = sadd.s32 %s135, 1
    %p139 = scmp.eq.s32.totalorder %s15, 3
    %p140 = scmp.ne.s32.totalorder %s135, %s137
    %p141 = scmp.eq.s32.totalorder %s15, 0
    %p142 = por %p140, %p141
    %p143 = scmp.ne.s32.totalorder %s135, %s137
    %p144 = scmp.eq.s32.totalorder %s20, 3
    %p145 = por %p143, %p144
    %p146 = scmp.ne.s32.totalorder %s137, %s138
    %p147 = scmp.eq.s32.totalorder %s20, 0
    %p148 = por %p146, %p147
    %p149 = scmp.ne.s32.totalorder %s137, %s138
    %p150 = scmp.eq.s32.totalorder %s21, 3
    %p151 = por %p149, %p150
    %p153 = scmp.ne.s32.totalorder %s138, %s152
    %p154 = scmp.eq.s32.totalorder %s21, 0
    %p155 = por %p153, %p154
    %s157 = sadd.s32 %s156, 1
    %p160 = scmp.eq.s32.totalorder %s15, 3
    %p161 = scmp.ne.s32.totalorder %s156, %s158
    %p162 = scmp.eq.s32.totalorder %s15, 0
    %p163 = por %p161, %p162
    %p164 = scmp.ne.s32.totalorder %s156, %s158
    %p165 = scmp.eq.s32.totalorder %s20, 3
    %p166 = por %p164, %p165
    %p167 = scmp.ne.s32.totalorder %s158, %s159
    %p168 = scmp.eq.s32.totalorder %s20, 0
    %p169 = por %p167, %p168
    %p170 = scmp.ne.s32.totalorder %s158, %s159
    %p171 = scmp.eq.s32.totalorder %s21, 3
    %p172 = por %p170, %p171
    %p174 = scmp.ne.s32.totalorder %s159, %s173
    %p175 = scmp.eq.s32.totalorder %s21, 0
    %p176 = por %p174, %p175
    %s178 = sadd.s32 %s177, 1
    %p181 = scmp.eq.s32.totalorder %s15, 3
    %p182 = scmp.ne.s32.totalorder %s177, %s179
    %p183 = scmp.eq.s32.totalorder %s15, 0
    %p184 = por %p182, %p183
    %p185 = scmp.ne.s32.totalorder %s177, %s179
    %p186 = scmp.eq.s32.totalorder %s20, 3
    %p187 = por %p185, %p186
    %p188 = scmp.ne.s32.totalorder %s179, %s180
    %p189 = scmp.eq.s32.totalorder %s20, 0
    %p190 = por %p188, %p189
    %p191 = scmp.ne.s32.totalorder %s179, %s180
    %p192 = scmp.eq.s32.totalorder %s21, 3
    %p193 = por %p191, %p192
    %p195 = scmp.ne.s32.totalorder %s180, %s194
    %p196 = scmp.eq.s32.totalorder %s21, 0
    %p197 = por %p195, %p196
    %s199 = sadd.s32 %s198, 1
    %p202 = scmp.eq.s32.totalorder %s15, 3
    %p203 = scmp.ne.s32.totalorder %s198, %s200
    %p204 = scmp.eq.s32.totalorder %s15, 0
    %p205 = por %p203, %p204
    %p206 = scmp.ne.s32.totalorder %s198, %s200
    %p207 = scmp.eq.s32.totalorder %s20, 3
    %p208 = por %p206, %p207
    %p209 = scmp.ne.s32.totalorder %s200, %s201
    %p210 = scmp.eq.s32.totalorder %s20, 0
    %p211 = por %p209, %p210
    %p212 = scmp.ne.s32.totalorder %s200, %s201
    %p213 = scmp.eq.s32.totalorder %s21, 3
    %p214 = por %p212, %p213
    %p216 = scmp.ne.s32.totalorder %s201, %s215
    %p217 = scmp.eq.s32.totalorder %s21, 0
    %p218 = por %p216, %p217
    %s220 = sadd.s32 %s219, 1
    %p223 = scmp.eq.s32.totalorder %s15, 3
    %p224 = scmp.ne.s32.totalorder %s219, %s221
    %p225 = scmp.eq.s32.totalorder %s15, 0
    %p226 = por %p224, %p225
    %p227 = scmp.ne.s32.totalorder %s219, %s221
    %p228 = scmp.eq.s32.totalorder %s20, 3
    %p229 = por %p227, %p228
    %p230 = scmp.ne.s32.totalorder %s221, %s222
    %p231 = scmp.eq.s32.totalorder %s20, 0
    %p232 = por %p230, %p231
    %p233 = scmp.ne.s32.totalorder %s221, %s222
    %p234 = scmp.eq.s32.totalorder %s21, 3
    %p235 = por %p233, %p234
    %p237 = scmp.ne.s32.totalorder %s222, %s236
    %p238 = scmp.eq.s32.totalorder %s21, 0
    %p239 = por %p237, %p238
    %s241 = sadd.s32 %s240, 1
    %p244 = scmp.eq.s32.totalorder %s15, 3
    %p245 = scmp.ne.s32.totalorder %s240, %s242
    %p246 = scmp.eq.s32.totalorder %s15, 0
    %p247 = por %p245, %p246
    %p248 = scmp.ne.s32.totalorder %s240, %s242
    %p249 = scmp.eq.s32.totalorder %s20, 3
    %p250 = por %p248, %p249
    %p251 = scmp.ne.s32.totalorder %s242, %s243
    %p252 = scmp.eq.s32.totalorder %s20, 0
    %p253 = por %p251, %p252
    %p254 = scmp.ne.s32.totalorder %s242, %s243
    %p255 = scmp.eq.s32.totalorder %s21, 3
    %p256 = por %p254, %p255
    %p258 = scmp.ne.s32.totalorder %s243, %s257
    %p259 = scmp.eq.s32.totalorder %s21, 0
    %p260 = por %p258, %p259
    %s261 = ssub.s32 %s22, %s34
    %s262 = ssub.s32 %s23, %s30
    %s263 = sor.u32 %s261, %s262
    %p264 = scmp.eq.s32.totalorder %s263, 0
    %s266 = sadd.s32 %s265, 1
    %s267 = scalar_select %p264, %s265, %s266
    %p270 = pneg %p264
    %p271 = scmp.eq.s32.totalorder %s15, 3
    %p272 = por %p270, %p271
    %p273 = scmp.ne.s32.totalorder %s265, %s268
    %p274 = scmp.eq.s32.totalorder %s15, 0
    %p275 = por %p273, %p274
    %p276 = scmp.ne.s32.totalorder %s265, %s268
    %p277 = scmp.eq.s32.totalorder %s20, 3
    %p278 = por %p276, %p277
    %p279 = scmp.ne.s32.totalorder %s268, %s269
    %p280 = scmp.eq.s32.totalorder %s20, 0
    %p281 = por %p279, %p280
    %p282 = scmp.ne.s32.totalorder %s268, %s269
    %p283 = scmp.eq.s32.totalorder %s21, 3
    %p284 = por %p282, %p283
    %p286 = scmp.ne.s32.totalorder %s269, %s285
    %p287 = scmp.eq.s32.totalorder %s21, 0
    %p288 = por %p286, %p287
    %p289 = scmp.le.s32.totalorder 1, %s15
    %p290 = scmp.lt.s32.totalorder %s15, 5
    %p291 = pnand %p289, %p290
    %p292 = pneg %p291
    // Predicated region
    $region9: #{_lambda_.3} parent=5 // pred_check
      _
    $region10: #{_lambda_.3} parent=5 // pred_check_branch
      %294 = sbr.rel (%p291) target = $region12
    $region11: #{_lambda_.3} parent=5 // pred_region
      %s295 = ssub.s32 %s15, 1
      // Predicated region
      $region13: #{_lambda_.3} parent=11 // pred_check
        %p296 = pneg %p148
      $region14: #{_lambda_.3} parent=11 // pred_check_branch
        %298 = sbr.rel (%p296) target = $region16
      $region15: #{_lambda_.3} parent=11 // pred_region
        _
      $region16: #{_lambda_.3} parent=11 // pred_fallthru
        _
      // Predicated region
      $region17: #{_lambda_.3} parent=11 // pred_check
        %p299 = pneg %p169
      $region18: #{_lambda_.3} parent=11 // pred_check_branch
        %301 = sbr.rel (%p299) target = $region20
      $region19: #{_lambda_.3} parent=11 // pred_region
        _
      $region20: #{_lambda_.3} parent=11 // pred_fallthru
        _
      // Predicated region
      $region21: #{_lambda_.3} parent=11 // pred_check
        %p302 = pneg %p190
      $region22: #{_lambda_.3} parent=11 // pred_check_branch
        %304 = sbr.rel (%p302) target = $region24
      $region23: #{_lambda_.3} parent=11 // pred_region
        _
      $region24: #{_lambda_.3} parent=11 // pred_fallthru
        _
      // Predicated region
      $region25: #{_lambda_.3} parent=11 // pred_check
        %p305 = pneg %p211
      $region26: #{_lambda_.3} parent=11 // pred_check_branch
        %307 = sbr.rel (%p305) target = $region28
      $region27: #{_lambda_.3} parent=11 // pred_region
        _
      $region28: #{_lambda_.3} parent=11 // pred_fallthru
        _
      // Predicated region
      $region29: #{_lambda_.3} parent=11 // pred_check
        %p308 = pneg %p232
      $region30: #{_lambda_.3} parent=11 // pred_check_branch
        %310 = sbr.rel (%p308) target = $region32
      $region31: #{_lambda_.3} parent=11 // pred_region
        _
      $region32: #{_lambda_.3} parent=11 // pred_fallthru
        _
      // Predicated region
      $region33: #{_lambda_.3} parent=11 // pred_check
        %p311 = pneg %p253
      $region34: #{_lambda_.3} parent=11 // pred_check_branch
        %313 = sbr.rel (%p311) target = $region36
      $region35: #{_lambda_.3} parent=11 // pred_region
        _
      $region36: #{_lambda_.3} parent=11 // pred_fallthru
        _
    $region12: #{_lambda_.3} parent=5 // pred_fallthru
      _
    %p314 = scmp.lt.s32.totalorder %s15, 4
    // Predicated region
    $region37: #{_lambda_.3} parent=5 // pred_check
      %p315 = pneg %p314
    $region38: #{_lambda_.3} parent=5 // pred_check_branch
      %317 = sbr.rel (%p315) target = $region40
    $region39: #{_lambda_.3} parent=5 // pred_region
      // Predicated region
      $region41: #{_lambda_.3} parent=39 // pred_check
        %p318 = pneg %p57
      $region42: #{_lambda_.3} parent=39 // pred_check_branch
        %320 = sbr.rel (%p318) target = $region44
      $region43: #{_lambda_.3} parent=39 // pred_region
        %s321 = smul.u32 %s23, 8
        %s322 = ssub.s32 %s321, 1
        %p323 = scmp.gt.s32.totalorder %s322, 0
        %s324 = scalar_select %p323, %s322, 0
        %p325 = scmp.lt.s32.totalorder %s22, 1
        %s326 = scalar_select %p325, %s22, 1
        %p327 = scmp.lt.s32.totalorder %s324, 15
        %s328 = scalar_select %p327, %s324, 15
        %s329 = smul.addr %s328, 2
        %s330 = smul.addr %s326, 32
        %s331 = sadd.s32 %s329, %s330
        %s332 = smul.addr %s331, 8
        %s333 = scalar_lea.vmem %s0, %s332
        %s334 = smul.u32 %s23, 8
        %s335 = ssub.s32 %s334, 1
        %p336 = scmp.gt.s32.totalorder %s335, 0
        %s337 = scalar_select %p336, %s335, 0
      $region44: #{_lambda_.3} parent=39 // pred_fallthru
        _
      // Predicated region
      $region45: #{_lambda_.3} parent=39 // pred_check
        %p338 = pneg %p85
      $region46: #{_lambda_.3} parent=39 // pred_check_branch
        %340 = sbr.rel (%p338) target = $region48
      $region47: #{_lambda_.3} parent=39 // pred_region
        %s341 = smul.u32 8, %s23
        %p342 = scmp.lt.s32.totalorder %s22, 1
        %s343 = scalar_select %p342, %s22, 1
        %p344 = scmp.lt.s32.totalorder %s341, 15
        %s345 = scalar_select %p344, %s341, 15
        %s346 = smul.addr %s345, 2
        %s347 = smul.addr %s343, 32
        %s348 = sadd.s32 %s346, %s347
        %s349 = smul.addr %s348, 8
        %s350 = scalar_lea.vmem %s1, %s349
        %s351 = smul.u32 8, %s23
      $region48: #{_lambda_.3} parent=39 // pred_fallthru
        _
      // Predicated region
      $region49: #{_lambda_.3} parent=39 // pred_check
        %p352 = pneg %p121
      $region50: #{_lambda_.3} parent=39 // pred_check_branch
        %354 = sbr.rel (%p352) target = $region52
      $region51: #{_lambda_.3} parent=39 // pred_region
        %s355 = sadd.s32 %s23, 1
        %s356 = smul.u32 %s355, 8
        %p357 = scmp.lt.s32.totalorder %s356, 15
        %s358 = scalar_select %p357, %s356, 15
        %p359 = scmp.lt.s32.totalorder %s22, 1
        %s360 = scalar_select %p359, %s22, 1
        %p361 = scmp.lt.s32.totalorder %s358, 15
        %s362 = scalar_select %p361, %s358, 15
        %s363 = smul.addr %s362, 2
        %s364 = smul.addr %s360, 32
        %s365 = sadd.s32 %s363, %s364
        %s366 = smul.addr %s365, 8
        %s367 = scalar_lea.vmem %s2, %s366
        %s368 = sadd.s32 %s23, 1
        %s369 = smul.u32 %s368, 8
        %p370 = scmp.lt.s32.totalorder %s369, 15
        %s371 = scalar_select %p370, %s369, 15
      $region52: #{_lambda_.3} parent=39 // pred_fallthru
        _
    $region40: #{_lambda_.3} parent=5 // pred_fallthru
      _
    %p372 = scmp.le.s32.totalorder 1, %s15
    %p373 = scmp.lt.s32.totalorder %s15, 5
    %p374 = pnand %p372, %p373
    %p375 = pneg %p374
    // Predicated region
    $region53: #{_lambda_.3} parent=5 // pred_check
      _
    $region54: #{_lambda_.3} parent=5 // pred_check_branch
      %377 = sbr.rel (%p374) target = $region56
    $region55: #{_lambda_.3} parent=5 // pred_region
      %s378 = ssub.s32 %s15, 1
      %s379 = smul.u32 %s25, 8
      %s380 = ssub.s32 %s379, 1
      %p381 = scmp.gt.s32.totalorder %s380, 0
      %s382 = scalar_select %p381, %s380, 0
      %p383 = scmp.lt.s32.totalorder %s24, 1
      %s384 = scalar_select %p383, %s24, 1
      %p385 = scmp.lt.s32.totalorder %s382, 15
      %s386 = scalar_select %p385, %s382, 15
      %s387 = smul.addr %s386, 2
      %s388 = smul.addr %s384, 32
      %s389 = sadd.s32 %s387, %s388
      %s390 = smul.addr %s389, 8
      %s391 = scalar_lea.vmem %s0, %s390
      %p392 = pneg %p63
      %p393 = pneg %p60
      %s394 = smul.u32 8, %s25
      %p395 = scmp.lt.s32.totalorder %s24, 1
      %s396 = scalar_select %p395, %s24, 1
      %p397 = scmp.lt.s32.totalorder %s394, 15
      %s398 = scalar_select %p397, %s394, 15
      %s399 = smul.addr %s398, 2
      %s400 = smul.addr %s396, 32
      %s401 = sadd.s32 %s399, %s400
      %s402 = smul.addr %s401, 8
      %s403 = scalar_lea.vmem %s1, %s402
      %p404 = pneg %p91
      %p405 = pneg %p88
      %s406 = sadd.s32 %s25, 1
      %s407 = smul.u32 %s406, 8
      %p408 = scmp.lt.s32.totalorder %s407, 15
      %s409 = scalar_select %p408, %s407, 15
      %p410 = scmp.lt.s32.totalorder %s24, 1
      %s411 = scalar_select %p410, %s24, 1
      %p412 = scmp.lt.s32.totalorder %s409, 15
      %s413 = scalar_select %p412, %s409, 15
      %s414 = smul.addr %s413, 2
      %s415 = smul.addr %s411, 32
      %s416 = sadd.s32 %s414, %s415
      %s417 = smul.addr %s416, 8
      %s418 = scalar_lea.vmem %s2, %s417
      %p419 = pneg %p127
      %p420 = pneg %p124
      %p421 = pneg %p148
      %p422 = pneg %p145
      %p423 = pneg %p169
      %p424 = pneg %p166
      %p425 = pneg %p190
      %p426 = pneg %p187
      %p427 = pneg %p211
      %p428 = pneg %p208
      %p429 = pneg %p232
      %p430 = pneg %p229
      %p431 = pneg %p253
      %p432 = pneg %p250
      %p433 = pneg %p281
      %p434 = pneg %p278
      %s435 = smul.u32 8, %s25
      %p436 = scmp.lt.s32.totalorder %s24, 1
      %s437 = scalar_select %p436, %s24, 1
      %p438 = scmp.lt.s32.totalorder %s435, 15
      %s439 = scalar_select %p438, %s435, 15
      %s440 = smul.addr %s439, 2
      %s441 = smul.addr %s437, 32
      %s442 = sadd.s32 %s440, %s441
      %s443 = smul.addr %s442, 8
      %s444 = scalar_lea.vmem %s9, %s443
      %s445 = smul.u32 %s25, 8
      %s446 = ssub.s32 %s445, 1
      %p447 = scmp.gt.s32.totalorder %s446, 0
      %s448 = scalar_select %p447, %s446, 0
      %p449 = scmp.lt.s32.totalorder %s24, 1
      %s450 = scalar_select %p449, %s24, 1
      %p451 = scmp.lt.s32.totalorder %s448, 15
      %s452 = scalar_select %p451, %s448, 15
      %s453 = smul.addr %s452, 2
      %s454 = smul.addr %s450, 32
      %s455 = sadd.s32 %s453, %s454
      %s456 = smul.addr %s455, 8
      %s457 = scalar_lea.vmem %s0, %s456
      %s458 = smul.u32 %s25, 8
      %s459 = ssub.s32 %s458, 1
      %p460 = scmp.gt.s32.totalorder %s459, 0
      %s461 = scalar_select %p460, %s459, 0
      %s462 = smul.u32 8, %s25
      %p463 = scmp.lt.s32.totalorder %s24, 1
      %s464 = scalar_select %p463, %s24, 1
      %p465 = scmp.lt.s32.totalorder %s462, 15
      %s466 = scalar_select %p465, %s462, 15
      %s467 = smul.addr %s466, 2
      %s468 = smul.addr %s464, 32
      %s469 = sadd.s32 %s467, %s468
      %s470 = smul.addr %s469, 8
      %s471 = scalar_lea.vmem %s1, %s470
      %s472 = smul.u32 8, %s25
      %s473 = sadd.s32 %s25, 1
      %s474 = smul.u32 %s473, 8
      %p475 = scmp.lt.s32.totalorder %s474, 15
      %s476 = scalar_select %p475, %s474, 15
      %p477 = scmp.lt.s32.totalorder %s24, 1
      %s478 = scalar_select %p477, %s24, 1
      %p479 = scmp.lt.s32.totalorder %s476, 15
      %s480 = scalar_select %p479, %s476, 15
      %s481 = smul.addr %s480, 2
      %s482 = smul.addr %s478, 32
      %s483 = sadd.s32 %s481, %s482
      %s484 = smul.addr %s483, 8
      %s485 = scalar_lea.vmem %s2, %s484
      %s486 = sadd.s32 %s25, 1
      %s487 = smul.u32 %s486, 8
      %p488 = scmp.lt.s32.totalorder %s487, 15
      %s489 = scalar_select %p488, %s487, 15
      %s490 = smul.u32 8, %s25
      %p491 = scmp.lt.s32.totalorder %s24, 1
      %s492 = scalar_select %p491, %s24, 1
      %p493 = scmp.lt.s32.totalorder %s490, 15
      %s494 = scalar_select %p493, %s490, 15
      %s495 = smul.addr %s494, 2
      %s496 = smul.addr %s492, 32
      %s497 = sadd.s32 %s495, %s496
      %s498 = smul.addr %s497, 8
      %s499 = scalar_lea.vmem %s9, %s498
      %s500 = smul.u32 8, %s25
      %p502 = scmp.eq.s32.totalorder %s25, 0
      %v503 = vld [vmem:[%s457] sm:$0xff]
      %v504 = vld [vmem:[%s457 + $0x8] sm:$0xff]
      %s505 = scalar_select %p502, 1, 0
      %v506 = vstv %s505
      %vm507 = vcmp.eq.s32.totalorder %v506, 1
      %v508 = vsel %vm507, 0.0, %v503
      %v509 = vsel %vm507, 0.0, %v504
      %p510 = scmp.eq.s32.totalorder %s25, 1
      %v511 = vld [vmem:[%s485] sm:$0xff]
      %v512 = vld [vmem:[%s485 + $0x8] sm:$0xff]
      %s513 = scalar_select %p510, 1, 0
      %v514 = vstv %s513
      %vm515 = vcmp.eq.s32.totalorder %v514, 1
      %v516 = vsel %vm515, 0.0, %v511
      %v517 = vsel %vm515, 0.0, %v512
      %v518 = vld [vmem:[%s471] sm:$0xff]
      %v519 = vld [vmem:[%s471 + $0x8] sm:$0xff]
      %v520 = vld [vmem:[%s471 + $0x10] sm:$0xff]
      %v521 = vld [vmem:[%s471 + $0x18] sm:$0xff]
      %v522 = vld [vmem:[%s471 + $0x20] sm:$0xff]
      %v523 = vld [vmem:[%s471 + $0x28] sm:$0xff]
      %v524 = vld [vmem:[%s471 + $0x30] sm:$0xff]
      %v525 = vld [vmem:[%s471 + $0x38] sm:$0xff]
      %v526 = vld [vmem:[%s471 + $0x40] sm:$0xff]
      %v527 = vld [vmem:[%s471 + $0x48] sm:$0xff]
      %v528 = vld [vmem:[%s471 + $0x50] sm:$0xff]
      %v529 = vld [vmem:[%s471 + $0x58] sm:$0xff]
      %v530 = vld [vmem:[%s471 + $0x60] sm:$0xff]
      %v531 = vld [vmem:[%s471 + $0x68] sm:$0xff]
      %v532 = vld [vmem:[%s471 + $0x70] sm:$0xff]
      %v533 = vld [vmem:[%s471 + $0x78] sm:$0xff]
      %vm554 = vcmask 1040384
      %v555 = vrot.slane %v508, 7
      %v556 = vrot.slane %v509, 7
      %v557 = vsel %vm554, %v555, %v556
      %v558 = vrot.slane %v518, 7
      %v559 = vrot.slane %v519, 7
      %v560 = vsel %vm554, %v558, %v559
      %v561 = vrot.slane %v520, 7
      %v562 = vrot.slane %v521, 7
      %v563 = vsel %vm554, %v561, %v562
      %v564 = vrot.slane %v522, 7
      %v565 = vrot.slane %v523, 7
      %v566 = vsel %vm554, %v564, %v565
      %v567 = vrot.slane %v524, 7
      %v568 = vrot.slane %v525, 7
      %v569 = vsel %vm554, %v567, %v568
      %v570 = vrot.slane %v526, 7
      %v571 = vrot.slane %v527, 7
      %v572 = vsel %vm554, %v570, %v571
      %v573 = vrot.slane %v528, 7
      %v574 = vrot.slane %v529, 7
      %v575 = vsel %vm554, %v573, %v574
      %v576 = vrot.slane %v530, 7
      %v577 = vrot.slane %v531, 7
      %v578 = vsel %vm554, %v576, %v577
      %v579 = vrot.slane %v532, 7
      %v580 = vrot.slane %v533, 7
      %v581 = vsel %vm554, %v579, %v580
      %v582 = vrot.slane %v516, 7
      %v583 = vrot.slane %v517, 7
      %v584 = vsel %vm554, %v582, %v583
      %v615 = vsel %vm554, 0.0, %v555
      %v616 = vsel %vm554, 0.0, %v558
      %v617 = vsel %vm554, 0.0, %v561
      %v618 = vsel %vm554, 0.0, %v564
      %v619 = vsel %vm554, 0.0, %v567
      %v620 = vsel %vm554, 0.0, %v570
      %v621 = vsel %vm554, 0.0, %v573
      %v622 = vsel %vm554, 0.0, %v576
      %v623 = vsel %vm554, 0.0, %v579
      %v624 = vsel %vm554, 0.0, %v582
      %v625 = vsel %vm554, %v556, 0.0
      %v626 = vsel %vm554, %v559, 0.0
      %v627 = vsel %vm554, %v562, 0.0
      %v628 = vsel %vm554, %v565, 0.0
      %v629 = vsel %vm554, %v568, 0.0
      %v630 = vsel %vm554, %v571, 0.0
      %v631 = vsel %vm554, %v574, 0.0
      %v632 = vsel %vm554, %v577, 0.0
      %v633 = vsel %vm554, %v580, 0.0
      %v634 = vsel %vm554, %v583, 0.0
      %v635 = vld [vmem:[%s3] sm:$0x1]
      %v636 = vlaneseq
      %v637 = vshrl.u32 %v636, 7
      %v638 = vsub.s32 0, %v637
      %v639 = vrot.slane %v635, %v638
      %v640 = vmul.f32 %v615, %v639
      %v641 = vmul.f32 %v557, %v639
      %v642 = vmul.f32 %v616, %v639
      %v643 = vmul.f32 %v560, %v639
      %v644 = vmul.f32 %v617, %v639
      %v645 = vmul.f32 %v563, %v639
      %v646 = vmul.f32 %v618, %v639
      %v647 = vmul.f32 %v566, %v639
      %v648 = vmul.f32 %v619, %v639
      %v649 = vmul.f32 %v569, %v639
      %v650 = vmul.f32 %v620, %v639
      %v651 = vmul.f32 %v572, %v639
      %v652 = vmul.f32 %v621, %v639
      %v653 = vmul.f32 %v575, %v639
      %v654 = vmul.f32 %v622, %v639
      %v655 = vmul.f32 %v578, %v639
      %v656 = vadd.f32 %v640, 0.0
      %v657 = vadd.f32 %v641, 0.0
      %v658 = vadd.f32 %v642, 0.0
      %v659 = vadd.f32 %v643, 0.0
      %v660 = vadd.f32 %v644, 0.0
      %v661 = vadd.f32 %v645, 0.0
      %v662 = vadd.f32 %v646, 0.0
      %v663 = vadd.f32 %v647, 0.0
      %v664 = vadd.f32 %v648, 0.0
      %v665 = vadd.f32 %v649, 0.0
      %v666 = vadd.f32 %v650, 0.0
      %v667 = vadd.f32 %v651, 0.0
      %v668 = vadd.f32 %v652, 0.0
      %v669 = vadd.f32 %v653, 0.0
      %v670 = vadd.f32 %v654, 0.0
      %v671 = vadd.f32 %v655, 0.0
      %v672 = vld [vmem:[%s3 + $0x1] sm:$0x1]
      %v673 = vlaneseq
      %v674 = vshrl.u32 %v673, 7
      %v675 = vsub.s32 0, %v674
      %v676 = vrot.slane %v672, %v675
      %v677 = vmul.f32 %v615, %v676
      %v678 = vmul.f32 %v557, %v676
      %v679 = vmul.f32 %v625, %v676
      %v680 = vmul.f32 %v616, %v676
      %v681 = vmul.f32 %v560, %v676
      %v682 = vmul.f32 %v626, %v676
      %v683 = vmul.f32 %v617, %v676
      %v684 = vmul.f32 %v563, %v676
      %v685 = vmul.f32 %v627, %v676
      %v686 = vmul.f32 %v618, %v676
      %v687 = vmul.f32 %v566, %v676
      %v688 = vmul.f32 %v628, %v676
      %v689 = vmul.f32 %v619, %v676
      %v690 = vmul.f32 %v569, %v676
      %v691 = vmul.f32 %v629, %v676
      %v692 = vmul.f32 %v620, %v676
      %v693 = vmul.f32 %v572, %v676
      %v694 = vmul.f32 %v630, %v676
      %v695 = vmul.f32 %v621, %v676
      %v696 = vmul.f32 %v575, %v676
      %v697 = vmul.f32 %v631, %v676
      %v698 = vmul.f32 %v622, %v676
      %v699 = vmul.f32 %v578, %v676
      %v700 = vmul.f32 %v632, %v676
      %vm725 = vcmask 1046528
      %v726 = vrot.slane %v677, 1
      %v727 = vrot.slane %v678, 1
      %v728 = vsel %vm725, %v726, %v727
      %v729 = vrot.slane %v679, 1
      %v730 = vsel %vm725, %v727, %v729
      %v731 = vrot.slane %v680, 1
      %v732 = vrot.slane %v681, 1
      %v733 = vsel %vm725, %v731, %v732
      %v734 = vrot.slane %v682, 1
      %v735 = vsel %vm725, %v732, %v734
      %v736 = vrot.slane %v683, 1
      %v737 = vrot.slane %v684, 1
      %v738 = vsel %vm725, %v736, %v737
      %v739 = vrot.slane %v685, 1
      %v740 = vsel %vm725, %v737, %v739
      %v741 = vrot.slane %v686, 1
      %v742 = vrot.slane %v687, 1
      %v743 = vsel %vm725, %v741, %v742
      %v744 = vrot.slane %v688, 1
      %v745 = vsel %vm725, %v742, %v744
      %v746 = vrot.slane %v689, 1
      %v747 = vrot.slane %v690, 1
      %v748 = vsel %vm725, %v746, %v747
      %v749 = vrot.slane %v691, 1
      %v750 = vsel %vm725, %v747, %v749
      %v751 = vrot.slane %v692, 1
      %v752 = vrot.slane %v693, 1
      %v753 = vsel %vm725, %v751, %v752
      %v754 = vrot.slane %v694, 1
      %v755 = vsel %vm725, %v752, %v754
      %v756 = vrot.slane %v695, 1
      %v757 = vrot.slane %v696, 1
      %v758 = vsel %vm725, %v756, %v757
      %v759 = vrot.slane %v697, 1
      %v760 = vsel %vm725, %v757, %v759
      %v761 = vrot.slane %v698, 1
      %v762 = vrot.slane %v699, 1
      %v763 = vsel %vm725, %v761, %v762
      %v764 = vrot.slane %v700, 1
      %v765 = vsel %vm725, %v762, %v764
      %v782 = vadd.f32 %v656, %v728
      %v783 = vadd.f32 %v657, %v730
      %v784 = vadd.f32 %v658, %v733
      %v785 = vadd.f32 %v659, %v735
      %v786 = vadd.f32 %v660, %v738
      %v787 = vadd.f32 %v661, %v740
      %v788 = vadd.f32 %v662, %v743
      %v789 = vadd.f32 %v663, %v745
      %v790 = vadd.f32 %v664, %v748
      %v791 = vadd.f32 %v665, %v750
      %v792 = vadd.f32 %v666, %v753
      %v793 = vadd.f32 %v667, %v755
      %v794 = vadd.f32 %v668, %v758
      %v795 = vadd.f32 %v669, %v760
      %v796 = vadd.f32 %v670, %v763
      %v797 = vadd.f32 %v671, %v765
      %v798 = vld [vmem:[%s3 + $0x2] sm:$0x1]
      %v799 = vlaneseq
      %v800 = vshrl.u32 %v799, 7
      %v801 = vsub.s32 0, %v800
      %v802 = vrot.slane %v798, %v801
      %v803 = vmul.f32 %v615, %v802
      %v804 = vmul.f32 %v557, %v802
      %v805 = vmul.f32 %v625, %v802
      %v806 = vmul.f32 %v616, %v802
      %v807 = vmul.f32 %v560, %v802
      %v808 = vmul.f32 %v626, %v802
      %v809 = vmul.f32 %v617, %v802
      %v810 = vmul.f32 %v563, %v802
      %v811 = vmul.f32 %v627, %v802
      %v812 = vmul.f32 %v618, %v802
      %v813 = vmul.f32 %v566, %v802
      %v814 = vmul.f32 %v628, %v802
      %v815 = vmul.f32 %v619, %v802
      %v816 = vmul.f32 %v569, %v802
      %v817 = vmul.f32 %v629, %v802
      %v818 = vmul.f32 %v620, %v802
      %v819 = vmul.f32 %v572, %v802
      %v820 = vmul.f32 %v630, %v802
      %v821 = vmul.f32 %v621, %v802
      %v822 = vmul.f32 %v575, %v802
      %v823 = vmul.f32 %v631, %v802
      %v824 = vmul.f32 %v622, %v802
      %v825 = vmul.f32 %v578, %v802
      %v826 = vmul.f32 %v632, %v802
      %vm851 = vcmask 1045504
      %v852 = vrot.slane %v803, 2
      %v853 = vrot.slane %v804, 2
      %v854 = vsel %vm851, %v852, %v853
      %v855 = vrot.slane %v805, 2
      %v856 = vsel %vm851, %v853, %v855
      %v857 = vrot.slane %v806, 2
      %v858 = vrot.slane %v807, 2
      %v859 = vsel %vm851, %v857, %v858
      %v860 = vrot.slane %v808, 2
      %v861 = vsel %vm851, %v858, %v860
      %v862 = vrot.slane %v809, 2
      %v863 = vrot.slane %v810, 2
      %v864 = vsel %vm851, %v862, %v863
      %v865 = vrot.slane %v811, 2
      %v866 = vsel %vm851, %v863, %v865
      %v867 = vrot.slane %v812, 2
      %v868 = vrot.slane %v813, 2
      %v869 = vsel %vm851, %v867, %v868
      %v870 = vrot.slane %v814, 2
      %v871 = vsel %vm851, %v868, %v870
      %v872 = vrot.slane %v815, 2
      %v873 = vrot.slane %v816, 2
      %v874 = vsel %vm851, %v872, %v873
      %v875 = vrot.slane %v817, 2
      %v876 = vsel %vm851, %v873, %v875
      %v877 = vrot.slane %v818, 2
      %v878 = vrot.slane %v819, 2
      %v879 = vsel %vm851, %v877, %v878
      %v880 = vrot.slane %v820, 2
      %v881 = vsel %vm851, %v878, %v880
      %v882 = vrot.slane %v821, 2
      %v883 = vrot.slane %v822, 2
      %v884 = vsel %vm851, %v882, %v883
      %v885 = vrot.slane %v823, 2
      %v886 = vsel %vm851, %v883, %v885
      %v887 = vrot.slane %v824, 2
      %v888 = vrot.slane %v825, 2
      %v889 = vsel %vm851, %v887, %v888
      %v890 = vrot.slane %v826, 2
      %v891 = vsel %vm851, %v888, %v890
      %v908 = vadd.f32 %v782, %v854
      %v909 = vadd.f32 %v783, %v856
      %v910 = vadd.f32 %v784, %v859
      %v911 = vadd.f32 %v785, %v861
      %v912 = vadd.f32 %v786, %v864
      %v913 = vadd.f32 %v787, %v866
      %v914 = vadd.f32 %v788, %v869
      %v915 = vadd.f32 %v789, %v871
      %v916 = vadd.f32 %v790, %v874
      %v917 = vadd.f32 %v791, %v876
      %v918 = vadd.f32 %v792, %v879
      %v919 = vadd.f32 %v793, %v881
      %v920 = vadd.f32 %v794, %v884
      %v921 = vadd.f32 %v795, %v886
      %v922 = vadd.f32 %v796, %v889
      %v923 = vadd.f32 %v797, %v891
      %v924 = vld [vmem:[%s3 + $0x3] sm:$0x1]
      %v925 = vlaneseq
      %v926 = vshrl.u32 %v925, 7
      %v927 = vsub.s32 0, %v926
      %v928 = vrot.slane %v924, %v927
      %v929 = vmul.f32 %v616, %v928
      %v930 = vmul.f32 %v560, %v928
      %v931 = vmul.f32 %v617, %v928
      %v932 = vmul.f32 %v563, %v928
      %v933 = vmul.f32 %v618, %v928
      %v934 = vmul.f32 %v566, %v928
      %v935 = vmul.f32 %v619, %v928
      %v936 = vmul.f32 %v569, %v928
      %v937 = vmul.f32 %v620, %v928
      %v938 = vmul.f32 %v572, %v928
      %v939 = vmul.f32 %v621, %v928
      %v940 = vmul.f32 %v575, %v928
      %v941 = vmul.f32 %v622, %v928
      %v942 = vmul.f32 %v578, %v928
      %v943 = vmul.f32 %v623, %v928
      %v944 = vmul.f32 %v581, %v928
      %v945 = vadd.f32 %v908, %v929
      %v946 = vadd.f32 %v909, %v930
      %v947 = vadd.f32 %v910, %v931
      %v948 = vadd.f32 %v911, %v932
      %v949 = vadd.f32 %v912, %v933
      %v950 = vadd.f32 %v913, %v934
      %v951 = vadd.f32 %v914, %v935
      %v952 = vadd.f32 %v915, %v936
      %v953 = vadd.f32 %v916, %v937
      %v954 = vadd.f32 %v917, %v938
      %v955 = vadd.f32 %v918, %v939
      %v956 = vadd.f32 %v919, %v940
      %v957 = vadd.f32 %v920, %v941
      %v958 = vadd.f32 %v921, %v942
      %v959 = vadd.f32 %v922, %v943
      %v960 = vadd.f32 %v923, %v944
      %v961 = vld [vmem:[%s3 + $0x4] sm:$0x1]
      %v962 = vlaneseq
      %v963 = vshrl.u32 %v962, 7
      %v964 = vsub.s32 0, %v963
      %v965 = vrot.slane %v961, %v964
      %v966 = vmul.f32 %v616, %v965
      %v967 = vmul.f32 %v560, %v965
      %v968 = vmul.f32 %v626, %v965
      %v969 = vmul.f32 %v617, %v965
      %v970 = vmul.f32 %v563, %v965
      %v971 = vmul.f32 %v627, %v965
      %v972 = vmul.f32 %v618, %v965
      %v973 = vmul.f32 %v566, %v965
      %v974 = vmul.f32 %v628, %v965
      %v975 = vmul.f32 %v619, %v965
      %v976 = vmul.f32 %v569, %v965
      %v977 = vmul.f32 %v629, %v965
      %v978 = vmul.f32 %v620, %v965
      %v979 = vmul.f32 %v572, %v965
      %v980 = vmul.f32 %v630, %v965
      %v981 = vmul.f32 %v621, %v965
      %v982 = vmul.f32 %v575, %v965
      %v983 = vmul.f32 %v631, %v965
      %v984 = vmul.f32 %v622, %v965
      %v985 = vmul.f32 %v578, %v965
      %v986 = vmul.f32 %v632, %v965
      %v987 = vmul.f32 %v623, %v965
      %v988 = vmul.f32 %v581, %v965
      %v989 = vmul.f32 %v633, %v965
      %v1014 = vrot.slane %v966, 1
      %v1015 = vrot.slane %v967, 1
      %v1016 = vsel %vm725, %v1014, %v1015
      %v1017 = vrot.slane %v968, 1
      %v1018 = vsel %vm725, %v1015, %v1017
      %v1019 = vrot.slane %v969, 1
      %v1020 = vrot.slane %v970, 1
      %v1021 = vsel %vm725, %v1019, %v1020
      %v1022 = vrot.slane %v971, 1
      %v1023 = vsel %vm725, %v1020, %v1022
      %v1024 = vrot.slane %v972, 1
      %v1025 = vrot.slane %v973, 1
      %v1026 = vsel %vm725, %v1024, %v1025
      %v1027 = vrot.slane %v974, 1
      %v1028 = vsel %vm725, %v1025, %v1027
      %v1029 = vrot.slane %v975, 1
      %v1030 = vrot.slane %v976, 1
      %v1031 = vsel %vm725, %v1029, %v1030
      %v1032 = vrot.slane %v977, 1
      %v1033 = vsel %vm725, %v1030, %v1032
      %v1034 = vrot.slane %v978, 1
      %v1035 = vrot.slane %v979, 1
      %v1036 = vsel %vm725, %v1034, %v1035
      %v1037 = vrot.slane %v980, 1
      %v1038 = vsel %vm725, %v1035, %v1037
      %v1039 = vrot.slane %v981, 1
      %v1040 = vrot.slane %v982, 1
      %v1041 = vsel %vm725, %v1039, %v1040
      %v1042 = vrot.slane %v983, 1
      %v1043 = vsel %vm725, %v1040, %v1042
      %v1044 = vrot.slane %v984, 1
      %v1045 = vrot.slane %v985, 1
      %v1046 = vsel %vm725, %v1044, %v1045
      %v1047 = vrot.slane %v986, 1
      %v1048 = vsel %vm725, %v1045, %v1047
      %v1049 = vrot.slane %v987, 1
      %v1050 = vrot.slane %v988, 1
      %v1051 = vsel %vm725, %v1049, %v1050
      %v1052 = vrot.slane %v989, 1
      %v1053 = vsel %vm725, %v1050, %v1052
      %v1070 = vadd.f32 %v945, %v1016
      %v1071 = vadd.f32 %v946, %v1018
      %v1072 = vadd.f32 %v947, %v1021
      %v1073 = vadd.f32 %v948, %v1023
      %v1074 = vadd.f32 %v949, %v1026
      %v1075 = vadd.f32 %v950, %v1028
      %v1076 = vadd.f32 %v951, %v1031
      %v1077 = vadd.f32 %v952, %v1033
      %v1078 = vadd.f32 %v953, %v1036
      %v1079 = vadd.f32 %v954, %v1038
      %v1080 = vadd.f32 %v955, %v1041
      %v1081 = vadd.f32 %v956, %v1043
      %v1082 = vadd.f32 %v957, %v1046
      %v1083 = vadd.f32 %v958, %v1048
      %v1084 = vadd.f32 %v959, %v1051
      %v1085 = vadd.f32 %v960, %v1053
      %v1086 = vld [vmem:[%s3 + $0x5] sm:$0x1]
      %v1087 = vlaneseq
      %v1088 = vshrl.u32 %v1087, 7
      %v1089 = vsub.s32 0, %v1088
      %v1090 = vrot.slane %v1086, %v1089
      %v1091 = vmul.f32 %v616, %v1090
      %v1092 = vmul.f32 %v560, %v1090
      %v1093 = vmul.f32 %v626, %v1090
      %v1094 = vmul.f32 %v617, %v1090
      %v1095 = vmul.f32 %v563, %v1090
      %v1096 = vmul.f32 %v627, %v1090
      %v1097 = vmul.f32 %v618, %v1090
      %v1098 = vmul.f32 %v566, %v1090
      %v1099 = vmul.f32 %v628, %v1090
      %v1100 = vmul.f32 %v619, %v1090
      %v1101 = vmul.f32 %v569, %v1090
      %v1102 = vmul.f32 %v629, %v1090
      %v1103 = vmul.f32 %v620, %v1090
      %v1104 = vmul.f32 %v572, %v1090
      %v1105 = vmul.f32 %v630, %v1090
      %v1106 = vmul.f32 %v621, %v1090
      %v1107 = vmul.f32 %v575, %v1090
      %v1108 = vmul.f32 %v631, %v1090
      %v1109 = vmul.f32 %v622, %v1090
      %v1110 = vmul.f32 %v578, %v1090
      %v1111 = vmul.f32 %v632, %v1090
      %v1112 = vmul.f32 %v623, %v1090
      %v1113 = vmul.f32 %v581, %v1090
      %v1114 = vmul.f32 %v633, %v1090
      %v1139 = vrot.slane %v1091, 2
      %v1140 = vrot.slane %v1092, 2
      %v1141 = vsel %vm851, %v1139, %v1140
      %v1142 = vrot.slane %v1093, 2
      %v1143 = vsel %vm851, %v1140, %v1142
      %v1144 = vrot.slane %v1094, 2
      %v1145 = vrot.slane %v1095, 2
      %v1146 = vsel %vm851, %v1144, %v1145
      %v1147 = vrot.slane %v1096, 2
      %v1148 = vsel %vm851, %v1145, %v1147
      %v1149 = vrot.slane %v1097, 2
      %v1150 = vrot.slane %v1098, 2
      %v1151 = vsel %vm851, %v1149, %v1150
      %v1152 = vrot.slane %v1099, 2
      %v1153 = vsel %vm851, %v1150, %v1152
      %v1154 = vrot.slane %v1100, 2
      %v1155 = vrot.slane %v1101, 2
      %v1156 = vsel %vm851, %v1154, %v1155
      %v1157 = vrot.slane %v1102, 2
      %v1158 = vsel %vm851, %v1155, %v1157
      %v1159 = vrot.slane %v1103, 2
      %v1160 = vrot.slane %v1104, 2
      %v1161 = vsel %vm851, %v1159, %v1160
      %v1162 = vrot.slane %v1105, 2
      %v1163 = vsel %vm851, %v1160, %v1162
      %v1164 = vrot.slane %v1106, 2
      %v1165 = vrot.slane %v1107, 2
      %v1166 = vsel %vm851, %v1164, %v1165
      %v1167 = vrot.slane %v1108, 2
      %v1168 = vsel %vm851, %v1165, %v1167
      %v1169 = vrot.slane %v1109, 2
      %v1170 = vrot.slane %v1110, 2
      %v1171 = vsel %vm851, %v1169, %v1170
      %v1172 = vrot.slane %v1111, 2
      %v1173 = vsel %vm851, %v1170, %v1172
      %v1174 = vrot.slane %v1112, 2
      %v1175 = vrot.slane %v1113, 2
      %v1176 = vsel %vm851, %v1174, %v1175
      %v1177 = vrot.slane %v1114, 2
      %v1178 = vsel %vm851, %v1175, %v1177
      %v1195 = vadd.f32 %v1070, %v1141
      %v1196 = vadd.f32 %v1071, %v1143
      %v1197 = vadd.f32 %v1072, %v1146
      %v1198 = vadd.f32 %v1073, %v1148
      %v1199 = vadd.f32 %v1074, %v1151
      %v1200 = vadd.f32 %v1075, %v1153
      %v1201 = vadd.f32 %v1076, %v1156
      %v1202 = vadd.f32 %v1077, %v1158
      %v1203 = vadd.f32 %v1078, %v1161
      %v1204 = vadd.f32 %v1079, %v1163
      %v1205 = vadd.f32 %v1080, %v1166
      %v1206 = vadd.f32 %v1081, %v1168
      %v1207 = vadd.f32 %v1082, %v1171
      %v1208 = vadd.f32 %v1083, %v1173
      %v1209 = vadd.f32 %v1084, %v1176
      %v1210 = vadd.f32 %v1085, %v1178
      %v1211 = vld [vmem:[%s3 + $0x6] sm:$0x1]
      %v1212 = vlaneseq
      %v1213 = vshrl.u32 %v1212, 7
      %v1214 = vsub.s32 0, %v1213
      %v1215 = vrot.slane %v1211, %v1214
      %v1216 = vmul.f32 %v617, %v1215
      %v1217 = vmul.f32 %v563, %v1215
      %v1218 = vmul.f32 %v618, %v1215
      %v1219 = vmul.f32 %v566, %v1215
      %v1220 = vmul.f32 %v619, %v1215
      %v1221 = vmul.f32 %v569, %v1215
      %v1222 = vmul.f32 %v620, %v1215
      %v1223 = vmul.f32 %v572, %v1215
      %v1224 = vmul.f32 %v621, %v1215
      %v1225 = vmul.f32 %v575, %v1215
      %v1226 = vmul.f32 %v622, %v1215
      %v1227 = vmul.f32 %v578, %v1215
      %v1228 = vmul.f32 %v623, %v1215
      %v1229 = vmul.f32 %v581, %v1215
      %v1230 = vmul.f32 %v624, %v1215
      %v1231 = vmul.f32 %v584, %v1215
      %v1232 = vadd.f32 %v1195, %v1216
      %v1233 = vadd.f32 %v1196, %v1217
      %v1234 = vadd.f32 %v1197, %v1218
      %v1235 = vadd.f32 %v1198, %v1219
      %v1236 = vadd.f32 %v1199, %v1220
      %v1237 = vadd.f32 %v1200, %v1221
      %v1238 = vadd.f32 %v1201, %v1222
      %v1239 = vadd.f32 %v1202, %v1223
      %v1240 = vadd.f32 %v1203, %v1224
      %v1241 = vadd.f32 %v1204, %v1225
      %v1242 = vadd.f32 %v1205, %v1226
      %v1243 = vadd.f32 %v1206, %v1227
      %v1244 = vadd.f32 %v1207, %v1228
      %v1245 = vadd.f32 %v1208, %v1229
      %v1246 = vadd.f32 %v1209, %v1230
      %v1247 = vadd.f32 %v1210, %v1231
      %v1248 = vld [vmem:[%s3 + $0x7] sm:$0x1]
      %v1249 = vlaneseq
      %v1250 = vshrl.u32 %v1249, 7
      %v1251 = vsub.s32 0, %v1250
      %v1252 = vrot.slane %v1248, %v1251
      %v1253 = vmul.f32 %v617, %v1252
      %v1254 = vmul.f32 %v563, %v1252
      %v1255 = vmul.f32 %v627, %v1252
      %v1256 = vmul.f32 %v618, %v1252
      %v1257 = vmul.f32 %v566, %v1252
      %v1258 = vmul.f32 %v628, %v1252
      %v1259 = vmul.f32 %v619, %v1252
      %v1260 = vmul.f32 %v569, %v1252
      %v1261 = vmul.f32 %v629, %v1252
      %v1262 = vmul.f32 %v620, %v1252
      %v1263 = vmul.f32 %v572, %v1252
      %v1264 = vmul.f32 %v630, %v1252
      %v1265 = vmul.f32 %v621, %v1252
      %v1266 = vmul.f32 %v575, %v1252
      %v1267 = vmul.f32 %v631, %v1252
      %v1268 = vmul.f32 %v622, %v1252
      %v1269 = vmul.f32 %v578, %v1252
      %v1270 = vmul.f32 %v632, %v1252
      %v1271 = vmul.f32 %v623, %v1252
      %v1272 = vmul.f32 %v581, %v1252
      %v1273 = vmul.f32 %v633, %v1252
      %v1274 = vmul.f32 %v624, %v1252
      %v1275 = vmul.f32 %v584, %v1252
      %v1276 = vmul.f32 %v634, %v1252
      %v1301 = vrot.slane %v1253, 1
      %v1302 = vrot.slane %v1254, 1
      %v1303 = vsel %vm725, %v1301, %v1302
      %v1304 = vrot.slane %v1255, 1
      %v1305 = vsel %vm725, %v1302, %v1304
      %v1306 = vrot.slane %v1256, 1
      %v1307 = vrot.slane %v1257, 1
      %v1308 = vsel %vm725, %v1306, %v1307
      %v1309 = vrot.slane %v1258, 1
      %v1310 = vsel %vm725, %v1307, %v1309
      %v1311 = vrot.slane %v1259, 1
      %v1312 = vrot.slane %v1260, 1
      %v1313 = vsel %vm725, %v1311, %v1312
      %v1314 = vrot.slane %v1261, 1
      %v1315 = vsel %vm725, %v1312, %v1314
      %v1316 = vrot.slane %v1262, 1
      %v1317 = vrot.slane %v1263, 1
      %v1318 = vsel %vm725, %v1316, %v1317
      %v1319 = vrot.slane %v1264, 1
      %v1320 = vsel %vm725, %v1317, %v1319
      %v1321 = vrot.slane %v1265, 1
      %v1322 = vrot.slane %v1266, 1
      %v1323 = vsel %vm725, %v1321, %v1322
      %v1324 = vrot.slane %v1267, 1
      %v1325 = vsel %vm725, %v1322, %v1324
      %v1326 = vrot.slane %v1268, 1
      %v1327 = vrot.slane %v1269, 1
      %v1328 = vsel %vm725, %v1326, %v1327
      %v1329 = vrot.slane %v1270, 1
      %v1330 = vsel %vm725, %v1327, %v1329
      %v1331 = vrot.slane %v1271, 1
      %v1332 = vrot.slane %v1272, 1
      %v1333 = vsel %vm725, %v1331, %v1332
      %v1334 = vrot.slane %v1273, 1
      %v1335 = vsel %vm725, %v1332, %v1334
      %v1336 = vrot.slane %v1274, 1
      %v1337 = vrot.slane %v1275, 1
      %v1338 = vsel %vm725, %v1336, %v1337
      %v1339 = vrot.slane %v1276, 1
      %v1340 = vsel %vm725, %v1337, %v1339
      %v1357 = vadd.f32 %v1232, %v1303
      %v1358 = vadd.f32 %v1233, %v1305
      %v1359 = vadd.f32 %v1234, %v1308
      %v1360 = vadd.f32 %v1235, %v1310
      %v1361 = vadd.f32 %v1236, %v1313
      %v1362 = vadd.f32 %v1237, %v1315
      %v1363 = vadd.f32 %v1238, %v1318
      %v1364 = vadd.f32 %v1239, %v1320
      %v1365 = vadd.f32 %v1240, %v1323
      %v1366 = vadd.f32 %v1241, %v1325
      %v1367 = vadd.f32 %v1242, %v1328
      %v1368 = vadd.f32 %v1243, %v1330
      %v1369 = vadd.f32 %v1244, %v1333
      %v1370 = vadd.f32 %v1245, %v1335
      %v1371 = vadd.f32 %v1246, %v1338
      %v1372 = vadd.f32 %v1247, %v1340
      %v1373 = vld [vmem:[%s3 + $0x8] sm:$0x1]
      %v1374 = vlaneseq
      %v1375 = vshrl.u32 %v1374, 7
      %v1376 = vsub.s32 0, %v1375
      %v1377 = vrot.slane %v1373, %v1376
      %v1378 = vmul.f32 %v617, %v1377
      %v1379 = vmul.f32 %v563, %v1377
      %v1380 = vmul.f32 %v627, %v1377
      %v1381 = vmul.f32 %v618, %v1377
      %v1382 = vmul.f32 %v566, %v1377
      %v1383 = vmul.f32 %v628, %v1377
      %v1384 = vmul.f32 %v619, %v1377
      %v1385 = vmul.f32 %v569, %v1377
      %v1386 = vmul.f32 %v629, %v1377
      %v1387 = vmul.f32 %v620, %v1377
      %v1388 = vmul.f32 %v572, %v1377
      %v1389 = vmul.f32 %v630, %v1377
      %v1390 = vmul.f32 %v621, %v1377
      %v1391 = vmul.f32 %v575, %v1377
      %v1392 = vmul.f32 %v631, %v1377
      %v1393 = vmul.f32 %v622, %v1377
      %v1394 = vmul.f32 %v578, %v1377
      %v1395 = vmul.f32 %v632, %v1377
      %v1396 = vmul.f32 %v623, %v1377
      %v1397 = vmul.f32 %v581, %v1377
      %v1398 = vmul.f32 %v633, %v1377
      %v1399 = vmul.f32 %v624, %v1377
      %v1400 = vmul.f32 %v584, %v1377
      %v1401 = vmul.f32 %v634, %v1377
      %v1426 = vrot.slane %v1378, 2
      %v1427 = vrot.slane %v1379, 2
      %v1428 = vsel %vm851, %v1426, %v1427
      %v1429 = vrot.slane %v1380, 2
      %v1430 = vsel %vm851, %v1427, %v1429
      %v1431 = vrot.slane %v1381, 2
      %v1432 = vrot.slane %v1382, 2
      %v1433 = vsel %vm851, %v1431, %v1432
      %v1434 = vrot.slane %v1383, 2
      %v1435 = vsel %vm851, %v1432, %v1434
      %v1436 = vrot.slane %v1384, 2
      %v1437 = vrot.slane %v1385, 2
      %v1438 = vsel %vm851, %v1436, %v1437
      %v1439 = vrot.slane %v1386, 2
      %v1440 = vsel %vm851, %v1437, %v1439
      %v1441 = vrot.slane %v1387, 2
      %v1442 = vrot.slane %v1388, 2
      %v1443 = vsel %vm851, %v1441, %v1442
      %v1444 = vrot.slane %v1389, 2
      %v1445 = vsel %vm851, %v1442, %v1444
      %v1446 = vrot.slane %v1390, 2
      %v1447 = vrot.slane %v1391, 2
      %v1448 = vsel %vm851, %v1446, %v1447
      %v1449 = vrot.slane %v1392, 2
      %v1450 = vsel %vm851, %v1447, %v1449
      %v1451 = vrot.slane %v1393, 2
      %v1452 = vrot.slane %v1394, 2
      %v1453 = vsel %vm851, %v1451, %v1452
      %v1454 = vrot.slane %v1395, 2
      %v1455 = vsel %vm851, %v1452, %v1454
      %v1456 = vrot.slane %v1396, 2
      %v1457 = vrot.slane %v1397, 2
      %v1458 = vsel %vm851, %v1456, %v1457
      %v1459 = vrot.slane %v1398, 2
      %v1460 = vsel %vm851, %v1457, %v1459
      %v1461 = vrot.slane %v1399, 2
      %v1462 = vrot.slane %v1400, 2
      %v1463 = vsel %vm851, %v1461, %v1462
      %v1464 = vrot.slane %v1401, 2
      %v1465 = vsel %vm851, %v1462, %v1464
      %v1482 = vadd.f32 %v1357, %v1428
      %v1483 = vadd.f32 %v1358, %v1430
      %v1484 = vadd.f32 %v1359, %v1433
      %v1485 = vadd.f32 %v1360, %v1435
      %v1486 = vadd.f32 %v1361, %v1438
      %v1487 = vadd.f32 %v1362, %v1440
      %v1488 = vadd.f32 %v1363, %v1443
      %v1489 = vadd.f32 %v1364, %v1445
      %v1490 = vadd.f32 %v1365, %v1448
      %v1491 = vadd.f32 %v1366, %v1450
      %v1492 = vadd.f32 %v1367, %v1453
      %v1493 = vadd.f32 %v1368, %v1455
      %v1494 = vadd.f32 %v1369, %v1458
      %v1495 = vadd.f32 %v1370, %v1460
      %v1496 = vadd.f32 %v1371, %v1463
      %v1497 = vadd.f32 %v1372, %v1465
      %v1498 = vld [vmem:[%s4] sm:$0x1]
      %v1500 = vlaneseq
      %v1501 = vshrl.u32 %v1500, 7
      %v1502 = vsub.s32 0, %v1501
      %v1503 = vrot.slane %v1498, %v1502
      %v1505 = vmul.f32 %v1482, %v1503
      %v1506 = vmul.f32 %v1483, %v1503
      %v1507 = vmul.f32 %v1484, %v1503
      %v1508 = vmul.f32 %v1485, %v1503
      %v1509 = vmul.f32 %v1486, %v1503
      %v1510 = vmul.f32 %v1487, %v1503
      %v1511 = vmul.f32 %v1488, %v1503
      %v1512 = vmul.f32 %v1489, %v1503
      %v1513 = vmul.f32 %v1490, %v1503
      %v1514 = vmul.f32 %v1491, %v1503
      %v1515 = vmul.f32 %v1492, %v1503
      %v1516 = vmul.f32 %v1493, %v1503
      %v1517 = vmul.f32 %v1494, %v1503
      %v1518 = vmul.f32 %v1495, %v1503
      %v1519 = vmul.f32 %v1496, %v1503
      %v1520 = vmul.f32 %v1497, %v1503
      %v1521 = vld [vmem:[%s5] sm:$0x1]
      %v1523 = vlaneseq
      %v1524 = vshrl.u32 %v1523, 7
      %v1525 = vsub.s32 0, %v1524
      %v1526 = vrot.slane %v1521, %v1525
      %v1528 = vadd.f32 %v1505, %v1526
      %v1529 = vadd.f32 %v1506, %v1526
      %v1530 = vadd.f32 %v1507, %v1526
      %v1531 = vadd.f32 %v1508, %v1526
      %v1532 = vadd.f32 %v1509, %v1526
      %v1533 = vadd.f32 %v1510, %v1526
      %v1534 = vadd.f32 %v1511, %v1526
      %v1535 = vadd.f32 %v1512, %v1526
      %v1536 = vadd.f32 %v1513, %v1526
      %v1537 = vadd.f32 %v1514, %v1526
      %v1538 = vadd.f32 %v1515, %v1526
      %v1539 = vadd.f32 %v1516, %v1526
      %v1540 = vadd.f32 %v1517, %v1526
      %v1541 = vadd.f32 %v1518, %v1526
      %v1542 = vadd.f32 %v1519, %v1526
      %v1543 = vadd.f32 %v1520, %v1526
      %vm1544 = vcmp.gt.f32.partialorder %v1528, 0.0
      %vm1545 = vcmp.gt.f32.partialorder %v1529, 0.0
      %vm1546 = vcmp.gt.f32.partialorder %v1530, 0.0
      %vm1547 = vcmp.gt.f32.partialorder %v1531, 0.0
      %vm1548 = vcmp.gt.f32.partialorder %v1532, 0.0
      %vm1549 = vcmp.gt.f32.partialorder %v1533, 0.0
      %vm1550 = vcmp.gt.f32.partialorder %v1534, 0.0
      %vm1551 = vcmp.gt.f32.partialorder %v1535, 0.0
      %vm1552 = vcmp.gt.f32.partialorder %v1536, 0.0
      %vm1553 = vcmp.gt.f32.partialorder %v1537, 0.0
      %vm1554 = vcmp.gt.f32.partialorder %v1538, 0.0
      %vm1555 = vcmp.gt.f32.partialorder %v1539, 0.0
      %vm1556 = vcmp.gt.f32.partialorder %v1540, 0.0
      %vm1557 = vcmp.gt.f32.partialorder %v1541, 0.0
      %vm1558 = vcmp.gt.f32.partialorder %v1542, 0.0
      %vm1559 = vcmp.gt.f32.partialorder %v1543, 0.0
      %v1560 = vmul.f32 %v1528, 0.01
      %v1561 = vmul.f32 %v1529, 0.01
      %v1562 = vmul.f32 %v1530, 0.01
      %v1563 = vmul.f32 %v1531, 0.01
      %v1564 = vmul.f32 %v1532, 0.01
      %v1565 = vmul.f32 %v1533, 0.01
      %v1566 = vmul.f32 %v1534, 0.01
      %v1567 = vmul.f32 %v1535, 0.01
      %v1568 = vmul.f32 %v1536, 0.01
      %v1569 = vmul.f32 %v1537, 0.01
      %v1570 = vmul.f32 %v1538, 0.01
      %v1571 = vmul.f32 %v1539, 0.01
      %v1572 = vmul.f32 %v1540, 0.01
      %v1573 = vmul.f32 %v1541, 0.01
      %v1574 = vmul.f32 %v1542, 0.01
      %v1575 = vmul.f32 %v1543, 0.01
      %v1576 = vsel %vm1544, %v1528, %v1560
      %v1577 = vsel %vm1545, %v1529, %v1561
      %v1578 = vsel %vm1546, %v1530, %v1562
      %v1579 = vsel %vm1547, %v1531, %v1563
      %v1580 = vsel %vm1548, %v1532, %v1564
      %v1581 = vsel %vm1549, %v1533, %v1565
      %v1582 = vsel %vm1550, %v1534, %v1566
      %v1583 = vsel %vm1551, %v1535, %v1567
      %v1584 = vsel %vm1552, %v1536, %v1568
      %v1585 = vsel %vm1553, %v1537, %v1569
      %v1586 = vsel %vm1554, %v1538, %v1570
      %v1587 = vsel %vm1555, %v1539, %v1571
      %v1588 = vsel %vm1556, %v1540, %v1572
      %v1589 = vsel %vm1557, %v1541, %v1573
      %v1590 = vsel %vm1558, %v1542, %v1574
      %v1591 = vsel %vm1559, %v1543, %v1575
      %v1592 = vpack.c.bf16 %v1577, %v1576
      %v1593 = vpack.c.bf16 %v1579, %v1578
      %v1594 = vpack.c.bf16 %v1581, %v1580
      %v1595 = vpack.c.bf16 %v1583, %v1582
      %v1596 = vpack.c.bf16 %v1585, %v1584
      %v1597 = vpack.c.bf16 %v1587, %v1586
      %v1598 = vpack.c.bf16 %v1589, %v1588
      %v1599 = vpack.c.bf16 %v1591, %v1590
      %v1600 = vld [vmem:[%s6] sm:$0x3]
      %vm1601 = vcmask 31744
      %v1603 = vsel %vm1601, %v1592, 0
      %v1606 = vsel %vm1601, %v1593, 0
      %v1609 = vsel %vm1601, %v1594, 0
      %v1612 = vsel %vm1601, %v1595, 0
      %v1615 = vsel %vm1601, %v1596, 0
      %v1618 = vsel %vm1601, %v1597, 0
      %v1621 = vsel %vm1601, %v1598, 0
      %v1624 = vsel %vm1601, %v1599, 0
      %vm1626 = vcmask 1041408
      %v1628 = vsel %vm1626, %v1600, 0
      %1630 = vmatprep.subr.bf16.mxu0 0
      %1631 = vmatpush1.bf16.msra.mxu0 %v1628
      %1632 = vmatprep.subr.bf16.mxu0 0
      %1633 = vmatpush1.bf16.msra.mxu0 0
      %1634 = vmatprep.subr.bf16.mxu0 0
      %1635 = vmatpush1.bf16.msra.mxu0 0
      %1636 = vmatprep.subr.bf16.mxu0 0
      %1637 = vmatpush1.bf16.msra.mxu0 0
      %1638 = vmatprep.subr.bf16.mxu0 0
      %1639 = vmatpush1.bf16.msra.mxu0 0
      %1640 = vmatprep.subr.bf16.mxu0 0
      %1641 = vmatpush1.bf16.msra.mxu0 0
      %1642 = vmatprep.subr.bf16.mxu0 0
      %1643 = vmatpush1.bf16.msra.mxu0 0
      %1644 = vmatprep.subr.bf16.mxu0 0
      %1645 = vmatpush1.bf16.msra.mxu0 0
      %1646 = vmatprep.subr.bf16.mxu0 0
      %1647 = vmatpush1.bf16.msra.mxu0 0
      %1648 = vmatprep.subr.bf16.mxu0 0
      %1649 = vmatpush1.bf16.msra.mxu0 0
      %1650 = vmatprep.subr.bf16.mxu0 0
      %1651 = vmatpush1.bf16.msra.mxu0 0
      %1652 = vmatprep.subr.bf16.mxu0 0
      %1653 = vmatpush1.bf16.msra.mxu0 0
      %1654 = vmatprep.subr.bf16.mxu0 0
      %1655 = vmatpush1.bf16.msra.mxu0 0
      %1656 = vmatprep.subr.bf16.mxu0 0
      %1657 = vmatpush1.bf16.msra.mxu0 0
      %1658 = vmatprep.subr.bf16.mxu0 0
      %1659 = vmatpush1.bf16.msra.mxu0 0
      %1660 = vmatprep.subr.bf16.mxu0 0
      %1661 = vmatpush1.bf16.msra.mxu0 0
      %1662 = vmatprep.mubr.bf16.mxu0 0
      %1663 = vmatmul.mubr.bf16.gmra.mrb[0].mxu0 %v1603
      %v1664 = vpop.f32.mrb[0].mxu0
      %v1665 = vadd.f32 0.0, %v1664
      %v1666 = vpop.f32.mrb[0].mxu0
      %v1667 = vpop.f32.mrb[0].mxu0
      %v1668 = vadd.f32 0.0, %v1667
      %v1669 = vpop.f32.mrb[0].mxu0
      %1670 = vmatprep.mubr.bf16.mxu0 0
      %1671 = vmatmul.mubr.bf16.gmra.mrb[0].mxu0 %v1606
      %v1672 = vpop.f32.mrb[0].mxu0
      %v1673 = vadd.f32 0.0, %v1672
      %v1674 = vpop.f32.mrb[0].mxu0
      %v1675 = vpop.f32.mrb[0].mxu0
      %v1676 = vadd.f32 0.0, %v1675
      %v1677 = vpop.f32.mrb[0].mxu0
      %1678 = vmatprep.mubr.bf16.mxu0 0
      %1679 = vmatmul.mubr.bf16.gmra.mrb[0].mxu0 %v1609
      %v1680 = vpop.f32.mrb[0].mxu0
      %v1681 = vadd.f32 0.0, %v1680
      %v1682 = vpop.f32.mrb[0].mxu0
      %v1683 = vpop.f32.mrb[0].mxu0
      %v1684 = vadd.f32 0.0, %v1683
      %v1685 = vpop.f32.mrb[0].mxu0
      %1686 = vmatprep.mubr.bf16.mxu0 0
      %1687 = vmatmul.mubr.bf16.gmra.mrb[0].mxu0 %v1612
      %v1688 = vpop.f32.mrb[0].mxu0
      %v1689 = vadd.f32 0.0, %v1688
      %v1690 = vpop.f32.mrb[0].mxu0
      %v1691 = vpop.f32.mrb[0].mxu0
      %v1692 = vadd.f32 0.0, %v1691
      %v1693 = vpop.f32.mrb[0].mxu0
      %1694 = vmatprep.mubr.bf16.mxu0 0
      %1695 = vmatmul.mubr.bf16.gmra.mrb[0].mxu0 %v1615
      %v1696 = vpop.f32.mrb[0].mxu0
      %v1697 = vadd.f32 0.0, %v1696
      %v1698 = vpop.f32.mrb[0].mxu0
      %v1699 = vpop.f32.mrb[0].mxu0
      %v1700 = vadd.f32 0.0, %v1699
      %v1701 = vpop.f32.mrb[0].mxu0
      %1702 = vmatprep.mubr.bf16.mxu0 0
      %1703 = vmatmul.mubr.bf16.gmra.mrb[0].mxu0 %v1618
      %v1704 = vpop.f32.mrb[0].mxu0
      %v1705 = vadd.f32 0.0, %v1704
      %v1706 = vpop.f32.mrb[0].mxu0
      %v1707 = vpop.f32.mrb[0].mxu0
      %v1708 = vadd.f32 0.0, %v1707
      %v1709 = vpop.f32.mrb[0].mxu0
      %1710 = vmatprep.mubr.bf16.mxu0 0
      %1711 = vmatmul.mubr.bf16.gmra.mrb[0].mxu0 %v1621
      %v1712 = vpop.f32.mrb[0].mxu0
      %v1713 = vadd.f32 0.0, %v1712
      %v1714 = vpop.f32.mrb[0].mxu0
      %v1715 = vpop.f32.mrb[0].mxu0
      %v1716 = vadd.f32 0.0, %v1715
      %v1717 = vpop.f32.mrb[0].mxu0
      %1718 = vmatprep.mubr.bf16.mxu0 0
      %1719 = vmatmul.mubr.bf16.gmra.mrb[0].mxu0 %v1624
      %v1720 = vpop.f32.mrb[0].mxu0
      %v1721 = vadd.f32 0.0, %v1720
      %v1722 = vpop.f32.mrb[0].mxu0
      %v1723 = vpop.f32.mrb[0].mxu0
      %v1724 = vadd.f32 0.0, %v1723
      %v1725 = vpop.f32.mrb[0].mxu0
      %1726 = vdwg.mxu0
      %v1727 = vld [vmem:[%s7] sm:$0x1]
      %v1729 = vlaneseq
      %v1730 = vshrl.u32 %v1729, 7
      %v1731 = vsub.s32 0, %v1730
      %v1732 = vrot.slane %v1727, %v1731
      %v1734 = vmul.f32 %v1665, %v1732
      %v1735 = vmul.f32 %v1668, %v1732
      %v1736 = vmul.f32 %v1673, %v1732
      %v1737 = vmul.f32 %v1676, %v1732
      %v1738 = vmul.f32 %v1681, %v1732
      %v1739 = vmul.f32 %v1684, %v1732
      %v1740 = vmul.f32 %v1689, %v1732
      %v1741 = vmul.f32 %v1692, %v1732
      %v1742 = vmul.f32 %v1697, %v1732
      %v1743 = vmul.f32 %v1700, %v1732
      %v1744 = vmul.f32 %v1705, %v1732
      %v1745 = vmul.f32 %v1708, %v1732
      %v1746 = vmul.f32 %v1713, %v1732
      %v1747 = vmul.f32 %v1716, %v1732
      %v1748 = vmul.f32 %v1721, %v1732
      %v1749 = vmul.f32 %v1724, %v1732
      %v1750 = vld [vmem:[%s8] sm:$0x1]
      %v1752 = vlaneseq
      %v1753 = vshrl.u32 %v1752, 7
      %v1754 = vsub.s32 0, %v1753
      %v1755 = vrot.slane %v1750, %v1754
      %v1757 = vadd.f32 %v1734, %v1755
      %v1758 = vadd.f32 %v1735, %v1755
      %v1759 = vadd.f32 %v1736, %v1755
      %v1760 = vadd.f32 %v1737, %v1755
      %v1761 = vadd.f32 %v1738, %v1755
      %v1762 = vadd.f32 %v1739, %v1755
      %v1763 = vadd.f32 %v1740, %v1755
      %v1764 = vadd.f32 %v1741, %v1755
      %v1765 = vadd.f32 %v1742, %v1755
      %v1766 = vadd.f32 %v1743, %v1755
      %v1767 = vadd.f32 %v1744, %v1755
      %v1768 = vadd.f32 %v1745, %v1755
      %v1769 = vadd.f32 %v1746, %v1755
      %v1770 = vadd.f32 %v1747, %v1755
      %v1771 = vadd.f32 %v1748, %v1755
      %v1772 = vadd.f32 %v1749, %v1755
      %vm1773 = vcmp.gt.f32.partialorder %v1757, 0.0
      %vm1774 = vcmp.gt.f32.partialorder %v1758, 0.0
      %vm1775 = vcmp.gt.f32.partialorder %v1759, 0.0
      %vm1776 = vcmp.gt.f32.partialorder %v1760, 0.0
      %vm1777 = vcmp.gt.f32.partialorder %v1761, 0.0
      %vm1778 = vcmp.gt.f32.partialorder %v1762, 0.0
      %vm1779 = vcmp.gt.f32.partialorder %v1763, 0.0
      %vm1780 = vcmp.gt.f32.partialorder %v1764, 0.0
      %vm1781 = vcmp.gt.f32.partialorder %v1765, 0.0
      %vm1782 = vcmp.gt.f32.partialorder %v1766, 0.0
      %vm1783 = vcmp.gt.f32.partialorder %v1767, 0.0
      %vm1784 = vcmp.gt.f32.partialorder %v1768, 0.0
      %vm1785 = vcmp.gt.f32.partialorder %v1769, 0.0
      %vm1786 = vcmp.gt.f32.partialorder %v1770, 0.0
      %vm1787 = vcmp.gt.f32.partialorder %v1771, 0.0
      %vm1788 = vcmp.gt.f32.partialorder %v1772, 0.0
      %v1789 = vmul.f32 %v1757, 0.01
      %v1790 = vmul.f32 %v1758, 0.01
      %v1791 = vmul.f32 %v1759, 0.01
      %v1792 = vmul.f32 %v1760, 0.01
      %v1793 = vmul.f32 %v1761, 0.01
      %v1794 = vmul.f32 %v1762, 0.01
      %v1795 = vmul.f32 %v1763, 0.01
      %v1796 = vmul.f32 %v1764, 0.01
      %v1797 = vmul.f32 %v1765, 0.01
      %v1798 = vmul.f32 %v1766, 0.01
      %v1799 = vmul.f32 %v1767, 0.01
      %v1800 = vmul.f32 %v1768, 0.01
      %v1801 = vmul.f32 %v1769, 0.01
      %v1802 = vmul.f32 %v1770, 0.01
      %v1803 = vmul.f32 %v1771, 0.01
      %v1804 = vmul.f32 %v1772, 0.01
      %v1805 = vsel %vm1773, %v1757, %v1789
      %v1806 = vsel %vm1774, %v1758, %v1790
      %v1807 = vsel %vm1775, %v1759, %v1791
      %v1808 = vsel %vm1776, %v1760, %v1792
      %v1809 = vsel %vm1777, %v1761, %v1793
      %v1810 = vsel %vm1778, %v1762, %v1794
      %v1811 = vsel %vm1779, %v1763, %v1795
      %v1812 = vsel %vm1780, %v1764, %v1796
      %v1813 = vsel %vm1781, %v1765, %v1797
      %v1814 = vsel %vm1782, %v1766, %v1798
      %v1815 = vsel %vm1783, %v1767, %v1799
      %v1816 = vsel %vm1784, %v1768, %v1800
      %v1817 = vsel %vm1785, %v1769, %v1801
      %v1818 = vsel %vm1786, %v1770, %v1802
      %v1819 = vsel %vm1787, %v1771, %v1803
      %v1820 = vsel %vm1788, %v1772, %v1804
      %vm1821 = vcmask 64512
      %1822 = vst.msk [vmem:[%s499] sm:$0xff] %vm1821, %v1805
      %1823 = vst.msk [vmem:[%s499 + $0x8] sm:$0xff] %vm1821, %v1806
      %1824 = vst.msk [vmem:[%s499 + $0x10] sm:$0xff] %vm1821, %v1807
      %1825 = vst.msk [vmem:[%s499 + $0x18] sm:$0xff] %vm1821, %v1808
      %1826 = vst.msk [vmem:[%s499 + $0x20] sm:$0xff] %vm1821, %v1809
      %1827 = vst.msk [vmem:[%s499 + $0x28] sm:$0xff] %vm1821, %v1810
      %1828 = vst.msk [vmem:[%s499 + $0x30] sm:$0xff] %vm1821, %v1811
      %1829 = vst.msk [vmem:[%s499 + $0x38] sm:$0xff] %vm1821, %v1812
      %1830 = vst.msk [vmem:[%s499 + $0x40] sm:$0xff] %vm1821, %v1813
      %1831 = vst.msk [vmem:[%s499 + $0x48] sm:$0xff] %vm1821, %v1814
      %1832 = vst.msk [vmem:[%s499 + $0x50] sm:$0xff] %vm1821, %v1815
      %1833 = vst.msk [vmem:[%s499 + $0x58] sm:$0xff] %vm1821, %v1816
      %1834 = vst.msk [vmem:[%s499 + $0x60] sm:$0xff] %vm1821, %v1817
      %1835 = vst.msk [vmem:[%s499 + $0x68] sm:$0xff] %vm1821, %v1818
      %1836 = vst.msk [vmem:[%s499 + $0x70] sm:$0xff] %vm1821, %v1819
      %1837 = vst.msk [vmem:[%s499 + $0x78] sm:$0xff] %vm1821, %v1820
      %s1838 = smul.u32 8, %s25
      %p1839 = scmp.lt.s32.totalorder %s24, 1
      %s1840 = scalar_select %p1839, %s24, 1
      %p1841 = scmp.lt.s32.totalorder %s1838, 15
      %s1842 = scalar_select %p1841, %s1838, 15
      %s1843 = smul.addr %s1842, 2
      %s1844 = smul.addr %s1840, 32
      %s1845 = sadd.s32 %s1843, %s1844
      %s1846 = smul.addr %s1845, 8
      %s1847 = scalar_lea.vmem %s9, %s1846
      // Predicated region
      $region57: #{_lambda_.3} parent=55 // pred_check
        %p1848 = pneg %p278
      $region58: #{_lambda_.3} parent=55 // pred_check_branch
        %1850 = sbr.rel (%p1848) target = $region60
      $region59: #{_lambda_.3} parent=55 // pred_region
        %s1851 = smul.u32 8, %s25
      $region60: #{_lambda_.3} parent=55 // pred_fallthru
        _
    $region56: #{_lambda_.3} parent=5 // pred_fallthru
      _
    %p1852 = scmp.le.s32.totalorder 2, %s15
    // Predicated region
    $region61: #{_lambda_.3} parent=5 // pred_check
      %p1853 = pneg %p1852
    $region62: #{_lambda_.3} parent=5 // pred_check_branch
      %1855 = sbr.rel (%p1853) target = $region64
    $region63: #{_lambda_.3} parent=5 // pred_region
      %s1856 = ssub.s32 %s15, 2
      // Predicated region
      $region65: #{_lambda_.3} parent=63 // pred_check
        %p1857 = pneg %p284
      $region66: #{_lambda_.3} parent=63 // pred_check_branch
        %1859 = sbr.rel (%p1857) target = $region68
      $region67: #{_lambda_.3} parent=63 // pred_region
        %s1860 = smul.u32 8, %s27
        %p1861 = scmp.lt.s32.totalorder %s26, 1
        %s1862 = scalar_select %p1861, %s26, 1
        %p1863 = scmp.lt.s32.totalorder %s1860, 15
        %s1864 = scalar_select %p1863, %s1860, 15
        %s1865 = smul.addr %s1864, 2
        %s1866 = smul.addr %s1862, 32
        %s1867 = sadd.s32 %s1865, %s1866
        %s1868 = smul.addr %s1867, 8
        %s1869 = scalar_lea.vmem %s9, %s1868
      $region68: #{_lambda_.3} parent=63 // pred_fallthru
        _
    $region64: #{_lambda_.3} parent=5 // pred_fallthru
      _
  $region6: #{_lambda_.3} parent=0 // loop_footer
    %s19 = sadd.s32 1, %s15
  $region7: #{_lambda_.3} parent=0 // loop_footer_branch
    %14 = sbr.rel target = $region3
  $region8: #{_lambda_.3} parent=0 // loop_exit
    _

// kernel: _lambda_.4
$region0: #{_lambda_.4}
  #allocation0 [shape = 'u32[]', space=smem, size = 0x4, offset = 0x4, fixed_abs, tag = 'smem constant byte address 0x4 - core index']
  #allocation1 [shape = 'u32[144,128]{1,0:T(1,128)}', space=vmem, size = 0x12000, scoped, tag = 'internal scratch']
  %s0 = inlined_call_operand.vmem [shape: f32[2,16,16,8], index: 0, kind: input, shape index: {}, may-alias: {0,1,2}]
  %s1 = inlined_call_operand.vmem [shape: f32[2,16,16,8], index: 1, kind: input, shape index: {}, may-alias: {0,1,2}]
  %s2 = inlined_call_operand.vmem [shape: f32[2,16,16,8], index: 2, kind: input, shape index: {}, may-alias: {0,1,2}]
  %s3 = inlined_call_operand.vmem [shape: f32[9,8], index: 3, kind: input, shape index: {}]
  %s4 = inlined_call_operand.vmem [shape: f32[1,8], index: 4, kind: input, shape index: {}]
  %s5 = inlined_call_operand.vmem [shape: f32[1,8], index: 5, kind: input, shape index: {}]
  %s6 = inlined_call_operand.vmem [shape: bf16[8,8], index: 6, kind: input, shape index: {}]
  %s7 = inlined_call_operand.vmem [shape: f32[1,8], index: 7, kind: input, shape index: {}]
  %s8 = inlined_call_operand.vmem [shape: f32[1,8], index: 8, kind: input, shape index: {}]
  %s9 = inlined_call_operand.vmem [shape: f32[2,16,16,8], index: 9, kind: output, shape index: {}]
  %s10 = sld [smem:[#allocation0]]
  $region69: #{_lambda_.4} parent=0
    _
  %s12 = ssub.s32 1, %s10
  %s13 = scalar_select 0, %s12, %s10
  loop: start=0, step=1, limit=6
  $region2: #{_lambda_.4} parent=0 // loop_pre_header
    _
  $region3: #{_lambda_.4} parent=0 // loop_header
    %s15 = sphi 0, %s19
    %p16 = scmp.ge.s32.totalorder %s15, 6
    %s22 = sphi 0, %s34
    %s23 = sphi 0, %s30
    %s24 = sphi 0, %s22
    %s25 = sphi 0, %s23
    %s26 = sphi 0, %s24
    %s27 = sphi 0, %s25
    %s47 = sphi 0, %s49
    %s50 = sphi 0, %s47
    %s51 = sphi 0, %s50
    %s67 = sphi 0, %s51
    %s75 = sphi 0, %s77
    %s78 = sphi 0, %s75
    %s79 = sphi 0, %s78
    %s95 = sphi 0, %s79
    %s111 = sphi 0, %s113
    %s114 = sphi 0, %s111
    %s115 = sphi 0, %s114
    %s131 = sphi 0, %s115
    %s135 = sphi 0, %s135
    %s137 = sphi 0, %s135
    %s138 = sphi 0, %s137
    %s152 = sphi 0, %s138
    %s156 = sphi 0, %s156
    %s158 = sphi 0, %s156
    %s159 = sphi 0, %s158
    %s173 = sphi 0, %s159
    %s177 = sphi 0, %s177
    %s179 = sphi 0, %s177
    %s180 = sphi 0, %s179
    %s194 = sphi 0, %s180
    %s198 = sphi 0, %s198
    %s200 = sphi 0, %s198
    %s201 = sphi 0, %s200
    %s215 = sphi 0, %s201
    %s219 = sphi 0, %s219
    %s221 = sphi 0, %s219
    %s222 = sphi 0, %s221
    %s236 = sphi 0, %s222
    %s240 = sphi 0, %s240
    %s242 = sphi 0, %s240
    %s243 = sphi 0, %s242
    %s257 = sphi 0, %s243
    %s265 = sphi 0, %s267
    %s268 = sphi 0, %s265
    %s269 = sphi 0, %s268
    %s285 = sphi 0, %s269
  $region4: #{_lambda_.4} parent=0 // loop_header_branch
    %18 = sbr.rel (%p16) target = $region8
  $region5: #{_lambda_.4} parent=0 // loop_body
    %s20 = ssub.s32 %s15, 1
    %s21 = ssub.s32 %s15, 2
    %s28 = sadd.s32 1, %s23
    %p29 = scmp.ge.s32.totalorder %s28, 2
    %s30 = scalar_select %p29, 0, %s28
    %s31 = sadd.s32 1, %s22
    %s32 = scalar_select %p29, %s31, %s22
    %p33 = scmp.ge.s32.totalorder %s32, 2
    %s34 = scalar_select %p33, 0, %s32
    %s35 = smul.u32 %s23, 8
    %s36 = ssub.s32 %s35, 1
    %p37 = scmp.gt.s32.totalorder %s36, 0
    %s38 = scalar_select %p37, %s36, 0
    %s39 = smul.u32 %s30, 8
    %s40 = ssub.s32 %s39, 1
    %p41 = scmp.gt.s32.totalorder %s40, 0
    %s42 = scalar_select %p41, %s40, 0
    %s43 = ssub.s32 %s22, %s34
    %s44 = ssub.s32 %s38, %s42
    %s45 = sor.u32 %s43, %s44
    %p46 = scmp.eq.s32.totalorder %s45, 0
    %s48 = sadd.s32 %s47, 1
    %s49 = scalar_select %p46, %s47, %s48
    %p52 = pneg %p46
    %p53 = scmp.eq.s32.totalorder %s15, 3
    %p54 = por %p52, %p53
    %p55 = scmp.ne.s32.totalorder %s47, %s50
    %p56 = scmp.eq.s32.totalorder %s15, 0
    %p57 = por %p55, %p56
    %p58 = scmp.ne.s32.totalorder %s47, %s50
    %p59 = scmp.eq.s32.totalorder %s20, 3
    %p60 = por %p58, %p59
    %p61 = scmp.ne.s32.totalorder %s50, %s51
    %p62 = scmp.eq.s32.totalorder %s20, 0
    %p63 = por %p61, %p62
    %p64 = scmp.ne.s32.totalorder %s50, %s51
    %p65 = scmp.eq.s32.totalorder %s21, 3
    %p66 = por %p64, %p65
    %p68 = scmp.ne.s32.totalorder %s51, %s67
    %p69 = scmp.eq.s32.totalorder %s21, 0
    %p70 = por %p68, %p69
    %s71 = ssub.s32 %s22, %s34
    %s72 = ssub.s32 %s23, %s30
    %s73 = sor.u32 %s71, %s72
    %p74 = scmp.eq.s32.totalorder %s73, 0
    %s76 = sadd.s32 %s75, 1
    %s77 = scalar_select %p74, %s75, %s76
    %p80 = pneg %p74
    %p81 = scmp.eq.s32.totalorder %s15, 3
    %p82 = por %p80, %p81
    %p83 = scmp.ne.s32.totalorder %s75, %s78
    %p84 = scmp.eq.s32.totalorder %s15, 0
    %p85 = por %p83, %p84
    %p86 = scmp.ne.s32.totalorder %s75, %s78
    %p87 = scmp.eq.s32.totalorder %s20, 3
    %p88 = por %p86, %p87
    %p89 = scmp.ne.s32.totalorder %s78, %s79
    %p90 = scmp.eq.s32.totalorder %s20, 0
    %p91 = por %p89, %p90
    %p92 = scmp.ne.s32.totalorder %s78, %s79
    %p93 = scmp.eq.s32.totalorder %s21, 3
    %p94 = por %p92, %p93
    %p96 = scmp.ne.s32.totalorder %s79, %s95
    %p97 = scmp.eq.s32.totalorder %s21, 0
    %p98 = por %p96, %p97
    %s99 = sadd.s32 %s23, 1
    %s100 = smul.u32 %s99, 8
    %p101 = scmp.lt.s32.totalorder %s100, 15
    %s102 = scalar_select %p101, %s100, 15
    %s103 = sadd.s32 %s30, 1
    %s104 = smul.u32 %s103, 8
    %p105 = scmp.lt.s32.totalorder %s104, 15
    %s106 = scalar_select %p105, %s104, 15
    %s107 = ssub.s32 %s22, %s34
    %s108 = ssub.s32 %s102, %s106
    %s109 = sor.u32 %s107, %s108
    %p110 = scmp.eq.s32.totalorder %s109, 0
    %s112 = sadd.s32 %s111, 1
    %s113 = scalar_select %p110, %s111, %s112
    %p116 = pneg %p110
    %p117 = scmp.eq.s32.totalorder %s15, 3
    %p118 = por %p116, %p117
    %p119 = scmp.ne.s32.totalorder %s111, %s114
    %p120 = scmp.eq.s32.totalorder %s15, 0
    %p121 = por %p119, %p120
    %p122 = scmp.ne.s32.totalorder %s111, %s114
    %p123 = scmp.eq.s32.totalorder %s20, 3
    %p124 = por %p122, %p123
    %p125 = scmp.ne.s32.totalorder %s114, %s115
    %p126 = scmp.eq.s32.totalorder %s20, 0
    %p127 = por %p125, %p126
    %p128 = scmp.ne.s32.totalorder %s114, %s115
    %p129 = scmp.eq.s32.totalorder %s21, 3
    %p130 = por %p128, %p129
    %p132 = scmp.ne.s32.totalorder %s115, %s131
    %p133 = scmp.eq.s32.totalorder %s21, 0
    %p134 = por %p132, %p133
    %s136 = sadd.s32 %s135, 1
    %p139 = scmp.eq.s32.totalorder %s15, 3
    %p140 = scmp.ne.s32.totalorder %s135, %s137
    %p141 = scmp.eq.s32.totalorder %s15, 0
    %p142 = por %p140, %p141
    %p143 = scmp.ne.s32.totalorder %s135, %s137
    %p144 = scmp.eq.s32.totalorder %s20, 3
    %p145 = por %p143, %p144
    %p146 = scmp.ne.s32.totalorder %s137, %s138
    %p147 = scmp.eq.s32.totalorder %s20, 0
    %p148 = por %p146, %p147
    %p149 = scmp.ne.s32.totalorder %s137, %s138
    %p150 = scmp.eq.s32.totalorder %s21, 3
    %p151 = por %p149, %p150
    %p153 = scmp.ne.s32.totalorder %s138, %s152
    %p154 = scmp.eq.s32.totalorder %s21, 0
    %p155 = por %p153, %p154
    %s157 = sadd.s32 %s156, 1
    %p160 = scmp.eq.s32.totalorder %s15, 3
    %p161 = scmp.ne.s32.totalorder %s156, %s158
    %p162 = scmp.eq.s32.totalorder %s15, 0
    %p163 = por %p161, %p162
    %p164 = scmp.ne.s32.totalorder %s156, %s158
    %p165 = scmp.eq.s32.totalorder %s20, 3
    %p166 = por %p164, %p165
    %p167 = scmp.ne.s32.totalorder %s158, %s159
    %p168 = scmp.eq.s32.totalorder %s20, 0
    %p169 = por %p167, %p168
    %p170 = scmp.ne.s32.totalorder %s158, %s159
    %p171 = scmp.eq.s32.totalorder %s21, 3
    %p172 = por %p170, %p171
    %p174 = scmp.ne.s32.totalorder %s159, %s173
    %p175 = scmp.eq.s32.totalorder %s21, 0
    %p176 = por %p174, %p175
    %s178 = sadd.s32 %s177, 1
    %p181 = scmp.eq.s32.totalorder %s15, 3
    %p182 = scmp.ne.s32.totalorder %s177, %s179
    %p183 = scmp.eq.s32.totalorder %s15, 0
    %p184 = por %p182, %p183
    %p185 = scmp.ne.s32.totalorder %s177, %s179
    %p186 = scmp.eq.s32.totalorder %s20, 3
    %p187 = por %p185, %p186
    %p188 = scmp.ne.s32.totalorder %s179, %s180
    %p189 = scmp.eq.s32.totalorder %s20, 0
    %p190 = por %p188, %p189
    %p191 = scmp.ne.s32.totalorder %s179, %s180
    %p192 = scmp.eq.s32.totalorder %s21, 3
    %p193 = por %p191, %p192
    %p195 = scmp.ne.s32.totalorder %s180, %s194
    %p196 = scmp.eq.s32.totalorder %s21, 0
    %p197 = por %p195, %p196
    %s199 = sadd.s32 %s198, 1
    %p202 = scmp.eq.s32.totalorder %s15, 3
    %p203 = scmp.ne.s32.totalorder %s198, %s200
    %p204 = scmp.eq.s32.totalorder %s15, 0
    %p205 = por %p203, %p204
    %p206 = scmp.ne.s32.totalorder %s198, %s200
    %p207 = scmp.eq.s32.totalorder %s20, 3
    %p208 = por %p206, %p207
    %p209 = scmp.ne.s32.totalorder %s200, %s201
    %p210 = scmp.eq.s32.totalorder %s20, 0
    %p211 = por %p209, %p210
    %p212 = scmp.ne.s32.totalorder %s200, %s201
    %p213 = scmp.eq.s32.totalorder %s21, 3
    %p214 = por %p212, %p213
    %p216 = scmp.ne.s32.totalorder %s201, %s215
    %p217 = scmp.eq.s32.totalorder %s21, 0
    %p218 = por %p216, %p217
    %s220 = sadd.s32 %s219, 1
    %p223 = scmp.eq.s32.totalorder %s15, 3
    %p224 = scmp.ne.s32.totalorder %s219, %s221
    %p225 = scmp.eq.s32.totalorder %s15, 0
    %p226 = por %p224, %p225
    %p227 = scmp.ne.s32.totalorder %s219, %s221
    %p228 = scmp.eq.s32.totalorder %s20, 3
    %p229 = por %p227, %p228
    %p230 = scmp.ne.s32.totalorder %s221, %s222
    %p231 = scmp.eq.s32.totalorder %s20, 0
    %p232 = por %p230, %p231
    %p233 = scmp.ne.s32.totalorder %s221, %s222
    %p234 = scmp.eq.s32.totalorder %s21, 3
    %p235 = por %p233, %p234
    %p237 = scmp.ne.s32.totalorder %s222, %s236
    %p238 = scmp.eq.s32.totalorder %s21, 0
    %p239 = por %p237, %p238
    %s241 = sadd.s32 %s240, 1
    %p244 = scmp.eq.s32.totalorder %s15, 3
    %p245 = scmp.ne.s32.totalorder %s240, %s242
    %p246 = scmp.eq.s32.totalorder %s15, 0
    %p247 = por %p245, %p246
    %p248 = scmp.ne.s32.totalorder %s240, %s242
    %p249 = scmp.eq.s32.totalorder %s20, 3
    %p250 = por %p248, %p249
    %p251 = scmp.ne.s32.totalorder %s242, %s243
    %p252 = scmp.eq.s32.totalorder %s20, 0
    %p253 = por %p251, %p252
    %p254 = scmp.ne.s32.totalorder %s242, %s243
    %p255 = scmp.eq.s32.totalorder %s21, 3
    %p256 = por %p254, %p255
    %p258 = scmp.ne.s32.totalorder %s243, %s257
    %p259 = scmp.eq.s32.totalorder %s21, 0
    %p260 = por %p258, %p259
    %s261 = ssub.s32 %s22, %s34
    %s262 = ssub.s32 %s23, %s30
    %s263 = sor.u32 %s261, %s262
    %p264 = scmp.eq.s32.totalorder %s263, 0
    %s266 = sadd.s32 %s265, 1
    %s267 = scalar_select %p264, %s265, %s266
    %p270 = pneg %p264
    %p271 = scmp.eq.s32.totalorder %s15, 3
    %p272 = por %p270, %p271
    %p273 = scmp.ne.s32.totalorder %s265, %s268
    %p274 = scmp.eq.s32.totalorder %s15, 0
    %p275 = por %p273, %p274
    %p276 = scmp.ne.s32.totalorder %s265, %s268
    %p277 = scmp.eq.s32.totalorder %s20, 3
    %p278 = por %p276, %p277
    %p279 = scmp.ne.s32.totalorder %s268, %s269
    %p280 = scmp.eq.s32.totalorder %s20, 0
    %p281 = por %p279, %p280
    %p282 = scmp.ne.s32.totalorder %s268, %s269
    %p283 = scmp.eq.s32.totalorder %s21, 3
    %p284 = por %p282, %p283
    %p286 = scmp.ne.s32.totalorder %s269, %s285
    %p287 = scmp.eq.s32.totalorder %s21, 0
    %p288 = por %p286, %p287
    %p289 = scmp.le.s32.totalorder 1, %s15
    %p290 = scmp.lt.s32.totalorder %s15, 5
    %p291 = pnand %p289, %p290
    %p292 = pneg %p291
    // Predicated region
    $region9: #{_lambda_.4} parent=5 // pred_check
      _
    $region10: #{_lambda_.4} parent=5 // pred_check_branch
      %294 = sbr.rel (%p291) target = $region12
    $region11: #{_lambda_.4} parent=5 // pred_region
      %s295 = ssub.s32 %s15, 1
      // Predicated region
      $region13: #{_lambda_.4} parent=11 // pred_check
        %p296 = pneg %p148
      $region14: #{_lambda_.4} parent=11 // pred_check_branch
        %298 = sbr.rel (%p296) target = $region16
      $region15: #{_lambda_.4} parent=11 // pred_region
        _
      $region16: #{_lambda_.4} parent=11 // pred_fallthru
        _
      // Predicated region
      $region17: #{_lambda_.4} parent=11 // pred_check
        %p299 = pneg %p169
      $region18: #{_lambda_.4} parent=11 // pred_check_branch
        %301 = sbr.rel (%p299) target = $region20
      $region19: #{_lambda_.4} parent=11 // pred_region
        _
      $region20: #{_lambda_.4} parent=11 // pred_fallthru
        _
      // Predicated region
      $region21: #{_lambda_.4} parent=11 // pred_check
        %p302 = pneg %p190
      $region22: #{_lambda_.4} parent=11 // pred_check_branch
        %304 = sbr.rel (%p302) target = $region24
      $region23: #{_lambda_.4} parent=11 // pred_region
        _
      $region24: #{_lambda_.4} parent=11 // pred_fallthru
        _
      // Predicated region
      $region25: #{_lambda_.4} parent=11 // pred_check
        %p305 = pneg %p211
      $region26: #{_lambda_.4} parent=11 // pred_check_branch
        %307 = sbr.rel (%p305) target = $region28
      $region27: #{_lambda_.4} parent=11 // pred_region
        _
      $region28: #{_lambda_.4} parent=11 // pred_fallthru
        _
      // Predicated region
      $region29: #{_lambda_.4} parent=11 // pred_check
        %p308 = pneg %p232
      $region30: #{_lambda_.4} parent=11 // pred_check_branch
        %310 = sbr.rel (%p308) target = $region32
      $region31: #{_lambda_.4} parent=11 // pred_region
        _
      $region32: #{_lambda_.4} parent=11 // pred_fallthru
        _
      // Predicated region
      $region33: #{_lambda_.4} parent=11 // pred_check
        %p311 = pneg %p253
      $region34: #{_lambda_.4} parent=11 // pred_check_branch
        %313 = sbr.rel (%p311) target = $region36
      $region35: #{_lambda_.4} parent=11 // pred_region
        _
      $region36: #{_lambda_.4} parent=11 // pred_fallthru
        _
    $region12: #{_lambda_.4} parent=5 // pred_fallthru
      _
    %p314 = scmp.lt.s32.totalorder %s15, 4
    // Predicated region
    $region37: #{_lambda_.4} parent=5 // pred_check
      %p315 = pneg %p314
    $region38: #{_lambda_.4} parent=5 // pred_check_branch
      %317 = sbr.rel (%p315) target = $region40
    $region39: #{_lambda_.4} parent=5 // pred_region
      // Predicated region
      $region41: #{_lambda_.4} parent=39 // pred_check
        %p318 = pneg %p57
      $region42: #{_lambda_.4} parent=39 // pred_check_branch
        %320 = sbr.rel (%p318) target = $region44
      $region43: #{_lambda_.4} parent=39 // pred_region
        %s321 = smul.u32 %s23, 8
        %s322 = ssub.s32 %s321, 1
        %p323 = scmp.gt.s32.totalorder %s322, 0
        %s324 = scalar_select %p323, %s322, 0
        %p325 = scmp.lt.s32.totalorder %s22, 1
        %s326 = scalar_select %p325, %s22, 1
        %p327 = scmp.lt.s32.totalorder %s324, 15
        %s328 = scalar_select %p327, %s324, 15
        %s329 = smul.addr %s328, 2
        %s330 = smul.addr %s326, 32
        %s331 = sadd.s32 %s329, %s330
        %s332 = smul.addr %s331, 8
        %s333 = scalar_lea.vmem %s0, %s332
        %s334 = smul.u32 %s23, 8
        %s335 = ssub.s32 %s334, 1
        %p336 = scmp.gt.s32.totalorder %s335, 0
        %s337 = scalar_select %p336, %s335, 0
      $region44: #{_lambda_.4} parent=39 // pred_fallthru
        _
      // Predicated region
      $region45: #{_lambda_.4} parent=39 // pred_check
        %p338 = pneg %p85
      $region46: #{_lambda_.4} parent=39 // pred_check_branch
        %340 = sbr.rel (%p338) target = $region48
      $region47: #{_lambda_.4} parent=39 // pred_region
        %s341 = smul.u32 8, %s23
        %p342 = scmp.lt.s32.totalorder %s22, 1
        %s343 = scalar_select %p342, %s22, 1
        %p344 = scmp.lt.s32.totalorder %s341, 15
        %s345 = scalar_select %p344, %s341, 15
        %s346 = smul.addr %s345, 2
        %s347 = smul.addr %s343, 32
        %s348 = sadd.s32 %s346, %s347
        %s349 = smul.addr %s348, 8
        %s350 = scalar_lea.vmem %s1, %s349
        %s351 = smul.u32 8, %s23
      $region48: #{_lambda_.4} parent=39 // pred_fallthru
        _
      // Predicated region
      $region49: #{_lambda_.4} parent=39 // pred_check
        %p352 = pneg %p121
      $region50: #{_lambda_.4} parent=39 // pred_check_branch
        %354 = sbr.rel (%p352) target = $region52
      $region51: #{_lambda_.4} parent=39 // pred_region
        %s355 = sadd.s32 %s23, 1
        %s356 = smul.u32 %s355, 8
        %p357 = scmp.lt.s32.totalorder %s356, 15
        %s358 = scalar_select %p357, %s356, 15
        %p359 = scmp.lt.s32.totalorder %s22, 1
        %s360 = scalar_select %p359, %s22, 1
        %p361 = scmp.lt.s32.totalorder %s358, 15
        %s362 = scalar_select %p361, %s358, 15
        %s363 = smul.addr %s362, 2
        %s364 = smul.addr %s360, 32
        %s365 = sadd.s32 %s363, %s364
        %s366 = smul.addr %s365, 8
        %s367 = scalar_lea.vmem %s2, %s366
        %s368 = sadd.s32 %s23, 1
        %s369 = smul.u32 %s368, 8
        %p370 = scmp.lt.s32.totalorder %s369, 15
        %s371 = scalar_select %p370, %s369, 15
      $region52: #{_lambda_.4} parent=39 // pred_fallthru
        _
    $region40: #{_lambda_.4} parent=5 // pred_fallthru
      _
    %p372 = scmp.le.s32.totalorder 1, %s15
    %p373 = scmp.lt.s32.totalorder %s15, 5
    %p374 = pnand %p372, %p373
    %p375 = pneg %p374
    // Predicated region
    $region53: #{_lambda_.4} parent=5 // pred_check
      _
    $region54: #{_lambda_.4} parent=5 // pred_check_branch
      %377 = sbr.rel (%p374) target = $region56
    $region55: #{_lambda_.4} parent=5 // pred_region
      %s378 = ssub.s32 %s15, 1
      %s379 = smul.u32 %s25, 8
      %s380 = ssub.s32 %s379, 1
      %p381 = scmp.gt.s32.totalorder %s380, 0
      %s382 = scalar_select %p381, %s380, 0
      %p383 = scmp.lt.s32.totalorder %s24, 1
      %s384 = scalar_select %p383, %s24, 1
      %p385 = scmp.lt.s32.totalorder %s382, 15
      %s386 = scalar_select %p385, %s382, 15
      %s387 = smul.addr %s386, 2
      %s388 = smul.addr %s384, 32
      %s389 = sadd.s32 %s387, %s388
      %s390 = smul.addr %s389, 8
      %s391 = scalar_lea.vmem %s0, %s390
      %p392 = pneg %p63
      %p393 = pneg %p60
      %s394 = smul.u32 8, %s25
      %p395 = scmp.lt.s32.totalorder %s24, 1
      %s396 = scalar_select %p395, %s24, 1
      %p397 = scmp.lt.s32.totalorder %s394, 15
      %s398 = scalar_select %p397, %s394, 15
      %s399 = smul.addr %s398, 2
      %s400 = smul.addr %s396, 32
      %s401 = sadd.s32 %s399, %s400
      %s402 = smul.addr %s401, 8
      %s403 = scalar_lea.vmem %s1, %s402
      %p404 = pneg %p91
      %p405 = pneg %p88
      %s406 = sadd.s32 %s25, 1
      %s407 = smul.u32 %s406, 8
      %p408 = scmp.lt.s32.totalorder %s407, 15
      %s409 = scalar_select %p408, %s407, 15
      %p410 = scmp.lt.s32.totalorder %s24, 1
      %s411 = scalar_select %p410, %s24, 1
      %p412 = scmp.lt.s32.totalorder %s409, 15
      %s413 = scalar_select %p412, %s409, 15
      %s414 = smul.addr %s413, 2
      %s415 = smul.addr %s411, 32
      %s416 = sadd.s32 %s414, %s415
      %s417 = smul.addr %s416, 8
      %s418 = scalar_lea.vmem %s2, %s417
      %p419 = pneg %p127
      %p420 = pneg %p124
      %p421 = pneg %p148
      %p422 = pneg %p145
      %p423 = pneg %p169
      %p424 = pneg %p166
      %p425 = pneg %p190
      %p426 = pneg %p187
      %p427 = pneg %p211
      %p428 = pneg %p208
      %p429 = pneg %p232
      %p430 = pneg %p229
      %p431 = pneg %p253
      %p432 = pneg %p250
      %p433 = pneg %p281
      %p434 = pneg %p278
      %s435 = smul.u32 8, %s25
      %p436 = scmp.lt.s32.totalorder %s24, 1
      %s437 = scalar_select %p436, %s24, 1
      %p438 = scmp.lt.s32.totalorder %s435, 15
      %s439 = scalar_select %p438, %s435, 15
      %s440 = smul.addr %s439, 2
      %s441 = smul.addr %s437, 32
      %s442 = sadd.s32 %s440, %s441
      %s443 = smul.addr %s442, 8
      %s444 = scalar_lea.vmem %s9, %s443
      %s445 = smul.u32 %s25, 8
      %s446 = ssub.s32 %s445, 1
      %p447 = scmp.gt.s32.totalorder %s446, 0
      %s448 = scalar_select %p447, %s446, 0
      %p449 = scmp.lt.s32.totalorder %s24, 1
      %s450 = scalar_select %p449, %s24, 1
      %p451 = scmp.lt.s32.totalorder %s448, 15
      %s452 = scalar_select %p451, %s448, 15
      %s453 = smul.addr %s452, 2
      %s454 = smul.addr %s450, 32
      %s455 = sadd.s32 %s453, %s454
      %s456 = smul.addr %s455, 8
      %s457 = scalar_lea.vmem %s0, %s456
      %s458 = smul.u32 %s25, 8
      %s459 = ssub.s32 %s458, 1
      %p460 = scmp.gt.s32.totalorder %s459, 0
      %s461 = scalar_select %p460, %s459, 0
      %s462 = smul.u32 8, %s25
      %p463 = scmp.lt.s32.totalorder %s24, 1
      %s464 = scalar_select %p463, %s24, 1
      %p465 = scmp.lt.s32.totalorder %s462, 15
      %s466 = scalar_select %p465, %s462, 15
      %s467 = smul.addr %s466, 2
      %s468 = smul.addr %s464, 32
      %s469 = sadd.s32 %s467, %s468
      %s470 = smul.addr %s469, 8
      %s471 = scalar_lea.vmem %s1, %s470
      %s472 = smul.u32 8, %s25
      %s473 = sadd.s32 %s25, 1
      %s474 = smul.u32 %s473, 8
      %p475 = scmp.lt.s32.totalorder %s474, 15
      %s476 = scalar_select %p475, %s474, 15
      %p477 = scmp.lt.s32.totalorder %s24, 1
      %s478 = scalar_select %p477, %s24, 1
      %p479 = scmp.lt.s32.totalorder %s476, 15
      %s480 = scalar_select %p479, %s476, 15
      %s481 = smul.addr %s480, 2
      %s482 = smul.addr %s478, 32
      %s483 = sadd.s32 %s481, %s482
      %s484 = smul.addr %s483, 8
      %s485 = scalar_lea.vmem %s2, %s484
      %s486 = sadd.s32 %s25, 1
      %s487 = smul.u32 %s486, 8
      %p488 = scmp.lt.s32.totalorder %s487, 15
      %s489 = scalar_select %p488, %s487, 15
      %s490 = smul.u32 8, %s25
      %p491 = scmp.lt.s32.totalorder %s24, 1
      %s492 = scalar_select %p491, %s24, 1
      %p493 = scmp.lt.s32.totalorder %s490, 15
      %s494 = scalar_select %p493, %s490, 15
      %s495 = smul.addr %s494, 2
      %s496 = smul.addr %s492, 32
      %s497 = sadd.s32 %s495, %s496
      %s498 = smul.addr %s497, 8
      %s499 = scalar_lea.vmem %s9, %s498
      %s500 = smul.u32 8, %s25
      %p502 = scmp.eq.s32.totalorder %s25, 0
      %v503 = vld [vmem:[%s457] sm:$0xff]
      %v504 = vld [vmem:[%s457 + $0x8] sm:$0xff]
      %s505 = scalar_select %p502, 1, 0
      %v506 = vstv %s505
      %vm507 = vcmp.eq.s32.totalorder %v506, 1
      %v508 = vsel %vm507, 0.0, %v503
      %v509 = vsel %vm507, 0.0, %v504
      %p510 = scmp.eq.s32.totalorder %s25, 1
      %v511 = vld [vmem:[%s485] sm:$0xff]
      %v512 = vld [vmem:[%s485 + $0x8] sm:$0xff]
      %s513 = scalar_select %p510, 1, 0
      %v514 = vstv %s513
      %vm515 = vcmp.eq.s32.totalorder %v514, 1
      %v516 = vsel %vm515, 0.0, %v511
      %v517 = vsel %vm515, 0.0, %v512
      %v518 = vld [vmem:[%s471] sm:$0xff]
      %v519 = vld [vmem:[%s471 + $0x8] sm:$0xff]
      %v520 = vld [vmem:[%s471 + $0x10] sm:$0xff]
      %v521 = vld [vmem:[%s471 + $0x18] sm:$0xff]
      %v522 = vld [vmem:[%s471 + $0x20] sm:$0xff]
      %v523 = vld [vmem:[%s471 + $0x28] sm:$0xff]
      %v524 = vld [vmem:[%s471 + $0x30] sm:$0xff]
      %v525 = vld [vmem:[%s471 + $0x38] sm:$0xff]
      %v526 = vld [vmem:[%s471 + $0x40] sm:$0xff]
      %v527 = vld [vmem:[%s471 + $0x48] sm:$0xff]
      %v528 = vld [vmem:[%s471 + $0x50] sm:$0xff]
      %v529 = vld [vmem:[%s471 + $0x58] sm:$0xff]
      %v530 = vld [vmem:[%s471 + $0x60] sm:$0xff]
      %v531 = vld [vmem:[%s471 + $0x68] sm:$0xff]
      %v532 = vld [vmem:[%s471 + $0x70] sm:$0xff]
      %v533 = vld [vmem:[%s471 + $0x78] sm:$0xff]
      %vm554 = vcmask 1040384
      %v555 = vrot.slane %v508, 7
      %v556 = vrot.slane %v509, 7
      %v557 = vsel %vm554, %v555, %v556
      %v558 = vrot.slane %v518, 7
      %v559 = vrot.slane %v519, 7
      %v560 = vsel %vm554, %v558, %v559
      %v561 = vrot.slane %v520, 7
      %v562 = vrot.slane %v521, 7
      %v563 = vsel %vm554, %v561, %v562
      %v564 = vrot.slane %v522, 7
      %v565 = vrot.slane %v523, 7
      %v566 = vsel %vm554, %v564, %v565
      %v567 = vrot.slane %v524, 7
      %v568 = vrot.slane %v525, 7
      %v569 = vsel %vm554, %v567, %v568
      %v570 = vrot.slane %v526, 7
      %v571 = vrot.slane %v527, 7
      %v572 = vsel %vm554, %v570, %v571
      %v573 = vrot.slane %v528, 7
      %v574 = vrot.slane %v529, 7
      %v575 = vsel %vm554, %v573, %v574
      %v576 = vrot.slane %v530, 7
      %v577 = vrot.slane %v531, 7
      %v578 = vsel %vm554, %v576, %v577
      %v579 = vrot.slane %v532, 7
      %v580 = vrot.slane %v533, 7
      %v581 = vsel %vm554, %v579, %v580
      %v582 = vrot.slane %v516, 7
      %v583 = vrot.slane %v517, 7
      %v584 = vsel %vm554, %v582, %v583
      %v615 = vsel %vm554, 0.0, %v555
      %v616 = vsel %vm554, 0.0, %v558
      %v617 = vsel %vm554, 0.0, %v561
      %v618 = vsel %vm554, 0.0, %v564
      %v619 = vsel %vm554, 0.0, %v567
      %v620 = vsel %vm554, 0.0, %v570
      %v621 = vsel %vm554, 0.0, %v573
      %v622 = vsel %vm554, 0.0, %v576
      %v623 = vsel %vm554, 0.0, %v579
      %v624 = vsel %vm554, 0.0, %v582
      %v625 = vsel %vm554, %v556, 0.0
      %v626 = vsel %vm554, %v559, 0.0
      %v627 = vsel %vm554, %v562, 0.0
      %v628 = vsel %vm554, %v565, 0.0
      %v629 = vsel %vm554, %v568, 0.0
      %v630 = vsel %vm554, %v571, 0.0
      %v631 = vsel %vm554, %v574, 0.0
      %v632 = vsel %vm554, %v577, 0.0
      %v633 = vsel %vm554, %v580, 0.0
      %v634 = vsel %vm554, %v583, 0.0
      %v635 = vld [vmem:[%s3] sm:$0x1]
      %v636 = vlaneseq
      %v637 = vshrl.u32 %v636, 7
      %v638 = vsub.s32 0, %v637
      %v639 = vrot.slane %v635, %v638
      %v640 = vmul.f32 %v615, %v639
      %v641 = vmul.f32 %v557, %v639
      %v642 = vmul.f32 %v616, %v639
      %v643 = vmul.f32 %v560, %v639
      %v644 = vmul.f32 %v617, %v639
      %v645 = vmul.f32 %v563, %v639
      %v646 = vmul.f32 %v618, %v639
      %v647 = vmul.f32 %v566, %v639
      %v648 = vmul.f32 %v619, %v639
      %v649 = vmul.f32 %v569, %v639
      %v650 = vmul.f32 %v620, %v639
      %v651 = vmul.f32 %v572, %v639
      %v652 = vmul.f32 %v621, %v639
      %v653 = vmul.f32 %v575, %v639
      %v654 = vmul.f32 %v622, %v639
      %v655 = vmul.f32 %v578, %v639
      %v656 = vadd.f32 %v640, 0.0
      %v657 = vadd.f32 %v641, 0.0
      %v658 = vadd.f32 %v642, 0.0
      %v659 = vadd.f32 %v643, 0.0
      %v660 = vadd.f32 %v644, 0.0
      %v661 = vadd.f32 %v645, 0.0
      %v662 = vadd.f32 %v646, 0.0
      %v663 = vadd.f32 %v647, 0.0
      %v664 = vadd.f32 %v648, 0.0
      %v665 = vadd.f32 %v649, 0.0
      %v666 = vadd.f32 %v650, 0.0
      %v667 = vadd.f32 %v651, 0.0
      %v668 = vadd.f32 %v652, 0.0
      %v669 = vadd.f32 %v653, 0.0
      %v670 = vadd.f32 %v654, 0.0
      %v671 = vadd.f32 %v655, 0.0
      %v672 = vld [vmem:[%s3 + $0x1] sm:$0x1]
      %v673 = vlaneseq
      %v674 = vshrl.u32 %v673, 7
      %v675 = vsub.s32 0, %v674
      %v676 = vrot.slane %v672, %v675
      %v677 = vmul.f32 %v615, %v676
      %v678 = vmul.f32 %v557, %v676
      %v679 = vmul.f32 %v625, %v676
      %v680 = vmul.f32 %v616, %v676
      %v681 = vmul.f32 %v560, %v676
      %v682 = vmul.f32 %v626, %v676
      %v683 = vmul.f32 %v617, %v676
      %v684 = vmul.f32 %v563, %v676
      %v685 = vmul.f32 %v627, %v676
      %v686 = vmul.f32 %v618, %v676
      %v687 = vmul.f32 %v566, %v676
      %v688 = vmul.f32 %v628, %v676
      %v689 = vmul.f32 %v619, %v676
      %v690 = vmul.f32 %v569, %v676
      %v691 = vmul.f32 %v629, %v676
      %v692 = vmul.f32 %v620, %v676
      %v693 = vmul.f32 %v572, %v676
      %v694 = vmul.f32 %v630, %v676
      %v695 = vmul.f32 %v621, %v676
      %v696 = vmul.f32 %v575, %v676
      %v697 = vmul.f32 %v631, %v676
      %v698 = vmul.f32 %v622, %v676
      %v699 = vmul.f32 %v578, %v676
      %v700 = vmul.f32 %v632, %v676
      %vm725 = vcmask 1046528
      %v726 = vrot.slane %v677, 1
      %v727 = vrot.slane %v678, 1
      %v728 = vsel %vm725, %v726, %v727
      %v729 = vrot.slane %v679, 1
      %v730 = vsel %vm725, %v727, %v729
      %v731 = vrot.slane %v680, 1
      %v732 = vrot.slane %v681, 1
      %v733 = vsel %vm725, %v731, %v732
      %v734 = vrot.slane %v682, 1
      %v735 = vsel %vm725, %v732, %v734
      %v736 = vrot.slane %v683, 1
      %v737 = vrot.slane %v684, 1
      %v738 = vsel %vm725, %v736, %v737
      %v739 = vrot.slane %v685, 1
      %v740 = vsel %vm725, %v737, %v739
      %v741 = vrot.slane %v686, 1
      %v742 = vrot.slane %v687, 1
      %v743 = vsel %vm725, %v741, %v742
      %v744 = vrot.slane %v688, 1
      %v745 = vsel %vm725, %v742, %v744
      %v746 = vrot.slane %v689, 1
      %v747 = vrot.slane %v690, 1
      %v748 = vsel %vm725, %v746, %v747
      %v749 = vrot.slane %v691, 1
      %v750 = vsel %vm725, %v747, %v749
      %v751 = vrot.slane %v692, 1
      %v752 = vrot.slane %v693, 1
      %v753 = vsel %vm725, %v751, %v752
      %v754 = vrot.slane %v694, 1
      %v755 = vsel %vm725, %v752, %v754
      %v756 = vrot.slane %v695, 1
      %v757 = vrot.slane %v696, 1
      %v758 = vsel %vm725, %v756, %v757
      %v759 = vrot.slane %v697, 1
      %v760 = vsel %vm725, %v757, %v759
      %v761 = vrot.slane %v698, 1
      %v762 = vrot.slane %v699, 1
      %v763 = vsel %vm725, %v761, %v762
      %v764 = vrot.slane %v700, 1
      %v765 = vsel %vm725, %v762, %v764
      %v782 = vadd.f32 %v656, %v728
      %v783 = vadd.f32 %v657, %v730
      %v784 = vadd.f32 %v658, %v733
      %v785 = vadd.f32 %v659, %v735
      %v786 = vadd.f32 %v660, %v738
      %v787 = vadd.f32 %v661, %v740
      %v788 = vadd.f32 %v662, %v743
      %v789 = vadd.f32 %v663, %v745
      %v790 = vadd.f32 %v664, %v748
      %v791 = vadd.f32 %v665, %v750
      %v792 = vadd.f32 %v666, %v753
      %v793 = vadd.f32 %v667, %v755
      %v794 = vadd.f32 %v668, %v758
      %v795 = vadd.f32 %v669, %v760
      %v796 = vadd.f32 %v670, %v763
      %v797 = vadd.f32 %v671, %v765
      %v798 = vld [vmem:[%s3 + $0x2] sm:$0x1]
      %v799 = vlaneseq
      %v800 = vshrl.u32 %v799, 7
      %v801 = vsub.s32 0, %v800
      %v802 = vrot.slane %v798, %v801
      %v803 = vmul.f32 %v615, %v802
      %v804 = vmul.f32 %v557, %v802
      %v805 = vmul.f32 %v625, %v802
      %v806 = vmul.f32 %v616, %v802
      %v807 = vmul.f32 %v560, %v802
      %v808 = vmul.f32 %v626, %v802
      %v809 = vmul.f32 %v617, %v802
      %v810 = vmul.f32 %v563, %v802
      %v811 = vmul.f32 %v627, %v802
      %v812 = vmul.f32 %v618, %v802
      %v813 = vmul.f32 %v566, %v802
      %v814 = vmul.f32 %v628, %v802
      %v815 = vmul.f32 %v619, %v802
      %v816 = vmul.f32 %v569, %v802
      %v817 = vmul.f32 %v629, %v802
      %v818 = vmul.f32 %v620, %v802
      %v819 = vmul.f32 %v572, %v802
      %v820 = vmul.f32 %v630, %v802
      %v821 = vmul.f32 %v621, %v802
      %v822 = vmul.f32 %v575, %v802
      %v823 = vmul.f32 %v631, %v802
      %v824 = vmul.f32 %v622, %v802
      %v825 = vmul.f32 %v578, %v802
      %v826 = vmul.f32 %v632, %v802
      %vm851 = vcmask 1045504
      %v852 = vrot.slane %v803, 2
      %v853 = vrot.slane %v804, 2
      %v854 = vsel %vm851, %v852, %v853
      %v855 = vrot.slane %v805, 2
      %v856 = vsel %vm851, %v853, %v855
      %v857 = vrot.slane %v806, 2
      %v858 = vrot.slane %v807, 2
      %v859 = vsel %vm851, %v857, %v858
      %v860 = vrot.slane %v808, 2
      %v861 = vsel %vm851, %v858, %v860
      %v862 = vrot.slane %v809, 2
      %v863 = vrot.slane %v810, 2
      %v864 = vsel %vm851, %v862, %v863
      %v865 = vrot.slane %v811, 2
      %v866 = vsel %vm851, %v863, %v865
      %v867 = vrot.slane %v812, 2
      %v868 = vrot.slane %v813, 2
      %v869 = vsel %vm851, %v867, %v868
      %v870 = vrot.slane %v814, 2
      %v871 = vsel %vm851, %v868, %v870
      %v872 = vrot.slane %v815, 2
      %v873 = vrot.slane %v816, 2
      %v874 = vsel %vm851, %v872, %v873
      %v875 = vrot.slane %v817, 2
      %v876 = vsel %vm851, %v873, %v875
      %v877 = vrot.slane %v818, 2
      %v878 = vrot.slane %v819, 2
      %v879 = vsel %vm851, %v877, %v878
      %v880 = vrot.slane %v820, 2
      %v881 = vsel %vm851, %v878, %v880
      %v882 = vrot.slane %v821, 2
      %v883 = vrot.slane %v822, 2
      %v884 = vsel %vm851, %v882, %v883
      %v885 = vrot.slane %v823, 2
      %v886 = vsel %vm851, %v883, %v885
      %v887 = vrot.slane %v824, 2
      %v888 = vrot.slane %v825, 2
      %v889 = vsel %vm851, %v887, %v888
      %v890 = vrot.slane %v826, 2
      %v891 = vsel %vm851, %v888, %v890
      %v908 = vadd.f32 %v782, %v854
      %v909 = vadd.f32 %v783, %v856
      %v910 = vadd.f32 %v784, %v859
      %v911 = vadd.f32 %v785, %v861
      %v912 = vadd.f32 %v786, %v864
      %v913 = vadd.f32 %v787, %v866
      %v914 = vadd.f32 %v788, %v869
      %v915 = vadd.f32 %v789, %v871
      %v916 = vadd.f32 %v790, %v874
      %v917 = vadd.f32 %v791, %v876
      %v918 = vadd.f32 %v792, %v879
      %v919 = vadd.f32 %v793, %v881
      %v920 = vadd.f32 %v794, %v884
      %v921 = vadd.f32 %v795, %v886
      %v922 = vadd.f32 %v796, %v889
      %v923 = vadd.f32 %v797, %v891
      %v924 = vld [vmem:[%s3 + $0x3] sm:$0x1]
      %v925 = vlaneseq
      %v926 = vshrl.u32 %v925, 7
      %v927 = vsub.s32 0, %v926
      %v928 = vrot.slane %v924, %v927
      %v929 = vmul.f32 %v616, %v928
      %v930 = vmul.f32 %v560, %v928
      %v931 = vmul.f32 %v617, %v928
      %v932 = vmul.f32 %v563, %v928
      %v933 = vmul.f32 %v618, %v928
      %v934 = vmul.f32 %v566, %v928
      %v935 = vmul.f32 %v619, %v928
      %v936 = vmul.f32 %v569, %v928
      %v937 = vmul.f32 %v620, %v928
      %v938 = vmul.f32 %v572, %v928
      %v939 = vmul.f32 %v621, %v928
      %v940 = vmul.f32 %v575, %v928
      %v941 = vmul.f32 %v622, %v928
      %v942 = vmul.f32 %v578, %v928
      %v943 = vmul.f32 %v623, %v928
      %v944 = vmul.f32 %v581, %v928
      %v945 = vadd.f32 %v908, %v929
      %v946 = vadd.f32 %v909, %v930
      %v947 = vadd.f32 %v910, %v931
      %v948 = vadd.f32 %v911, %v932
      %v949 = vadd.f32 %v912, %v933
      %v950 = vadd.f32 %v913, %v934
      %v951 = vadd.f32 %v914, %v935
      %v952 = vadd.f32 %v915, %v936
      %v953 = vadd.f32 %v916, %v937
      %v954 = vadd.f32 %v917, %v938
      %v955 = vadd.f32 %v918, %v939
      %v956 = vadd.f32 %v919, %v940
      %v957 = vadd.f32 %v920, %v941
      %v958 = vadd.f32 %v921, %v942
      %v959 = vadd.f32 %v922, %v943
      %v960 = vadd.f32 %v923, %v944
      %v961 = vld [vmem:[%s3 + $0x4] sm:$0x1]
      %v962 = vlaneseq
      %v963 = vshrl.u32 %v962, 7
      %v964 = vsub.s32 0, %v963
      %v965 = vrot.slane %v961, %v964
      %v966 = vmul.f32 %v616, %v965
      %v967 = vmul.f32 %v560, %v965
      %v968 = vmul.f32 %v626, %v965
      %v969 = vmul.f32 %v617, %v965
      %v970 = vmul.f32 %v563, %v965
      %v971 = vmul.f32 %v627, %v965
      %v972 = vmul.f32 %v618, %v965
      %v973 = vmul.f32 %v566, %v965
      %v974 = vmul.f32 %v628, %v965
      %v975 = vmul.f32 %v619, %v965
      %v976 = vmul.f32 %v569, %v965
      %v977 = vmul.f32 %v629, %v965
      %v978 = vmul.f32 %v620, %v965
      %v979 = vmul.f32 %v572, %v965
      %v980 = vmul.f32 %v630, %v965
      %v981 = vmul.f32 %v621, %v965
      %v982 = vmul.f32 %v575, %v965
      %v983 = vmul.f32 %v631, %v965
      %v984 = vmul.f32 %v622, %v965
      %v985 = vmul.f32 %v578, %v965
      %v986 = vmul.f32 %v632, %v965
      %v987 = vmul.f32 %v623, %v965
      %v988 = vmul.f32 %v581, %v965
      %v989 = vmul.f32 %v633, %v965
      %v1014 = vrot.slane %v966, 1
      %v1015 = vrot.slane %v967, 1
      %v1016 = vsel %vm725, %v1014, %v1015
      %v1017 = vrot.slane %v968, 1
      %v1018 = vsel %vm725, %v1015, %v1017
      %v1019 = vrot.slane %v969, 1
      %v1020 = vrot.slane %v970, 1
      %v1021 = vsel %vm725, %v1019, %v1020
      %v1022 = vrot.slane %v971, 1
      %v1023 = vsel %vm725, %v1020, %v1022
      %v1024 = vrot.slane %v972, 1
      %v1025 = vrot.slane %v973, 1
      %v1026 = vsel %vm725, %v1024, %v1025
      %v1027 = vrot.slane %v974, 1
      %v1028 = vsel %vm725, %v1025, %v1027
      %v1029 = vrot.slane %v975, 1
      %v1030 = vrot.slane %v976, 1
      %v1031 = vsel %vm725, %v1029, %v1030
      %v1032 = vrot.slane %v977, 1
      %v1033 = vsel %vm725, %v1030, %v1032
      %v1034 = vrot.slane %v978, 1
      %v1035 = vrot.slane %v979, 1
      %v1036 = vsel %vm725, %v1034, %v1035
      %v1037 = vrot.slane %v980, 1
      %v1038 = vsel %vm725, %v1035, %v1037
      %v1039 = vrot.slane %v981, 1
      %v1040 = vrot.slane %v982, 1
      %v1041 = vsel %vm725, %v1039, %v1040
      %v1042 = vrot.slane %v983, 1
      %v1043 = vsel %vm725, %v1040, %v1042
      %v1044 = vrot.slane %v984, 1
      %v1045 = vrot.slane %v985, 1
      %v1046 = vsel %vm725, %v1044, %v1045
      %v1047 = vrot.slane %v986, 1
      %v1048 = vsel %vm725, %v1045, %v1047
      %v1049 = vrot.slane %v987, 1
      %v1050 = vrot.slane %v988, 1
      %v1051 = vsel %vm725, %v1049, %v1050
      %v1052 = vrot.slane %v989, 1
      %v1053 = vsel %vm725, %v1050, %v1052
      %v1070 = vadd.f32 %v945, %v1016
      %v1071 = vadd.f32 %v946, %v1018
      %v1072 = vadd.f32 %v947, %v1021
      %v1073 = vadd.f32 %v948, %v1023
      %v1074 = vadd.f32 %v949, %v1026
      %v1075 = vadd.f32 %v950, %v1028
      %v1076 = vadd.f32 %v951, %v1031
      %v1077 = vadd.f32 %v952, %v1033
      %v1078 = vadd.f32 %v953, %v1036
      %v1079 = vadd.f32 %v954, %v1038
      %v1080 = vadd.f32 %v955, %v1041
      %v1081 = vadd.f32 %v956, %v1043
      %v1082 = vadd.f32 %v957, %v1046
      %v1083 = vadd.f32 %v958, %v1048
      %v1084 = vadd.f32 %v959, %v1051
      %v1085 = vadd.f32 %v960, %v1053
      %v1086 = vld [vmem:[%s3 + $0x5] sm:$0x1]
      %v1087 = vlaneseq
      %v1088 = vshrl.u32 %v1087, 7
      %v1089 = vsub.s32 0, %v1088
      %v1090 = vrot.slane %v1086, %v1089
      %v1091 = vmul.f32 %v616, %v1090
      %v1092 = vmul.f32 %v560, %v1090
      %v1093 = vmul.f32 %v626, %v1090
      %v1094 = vmul.f32 %v617, %v1090
      %v1095 = vmul.f32 %v563, %v1090
      %v1096 = vmul.f32 %v627, %v1090
      %v1097 = vmul.f32 %v618, %v1090
      %v1098 = vmul.f32 %v566, %v1090
      %v1099 = vmul.f32 %v628, %v1090
      %v1100 = vmul.f32 %v619, %v1090
      %v1101 = vmul.f32 %v569, %v1090
      %v1102 = vmul.f32 %v629, %v1090
      %v1103 = vmul.f32 %v620, %v1090
      %v1104 = vmul.f32 %v572, %v1090
      %v1105 = vmul.f32 %v630, %v1090
      %v1106 = vmul.f32 %v621, %v1090
      %v1107 = vmul.f32 %v575, %v1090
      %v1108 = vmul.f32 %v631, %v1090
      %v1109 = vmul.f32 %v622, %v1090
      %v1110 = vmul.f32 %v578, %v1090
      %v1111 = vmul.f32 %v632, %v1090
      %v1112 = vmul.f32 %v623, %v1090
      %v1113 = vmul.f32 %v581, %v1090
      %v1114 = vmul.f32 %v633, %v1090
      %v1139 = vrot.slane %v1091, 2
      %v1140 = vrot.slane %v1092, 2
      %v1141 = vsel %vm851, %v1139, %v1140
      %v1142 = vrot.slane %v1093, 2
      %v1143 = vsel %vm851, %v1140, %v1142
      %v1144 = vrot.slane %v1094, 2
      %v1145 = vrot.slane %v1095, 2
      %v1146 = vsel %vm851, %v1144, %v1145
      %v1147 = vrot.slane %v1096, 2
      %v1148 = vsel %vm851, %v1145, %v1147
      %v1149 = vrot.slane %v1097, 2
      %v1150 = vrot.slane %v1098, 2
      %v1151 = vsel %vm851, %v1149, %v1150
      %v1152 = vrot.slane %v1099, 2
      %v1153 = vsel %vm851, %v1150, %v1152
      %v1154 = vrot.slane %v1100, 2
      %v1155 = vrot.slane %v1101, 2
      %v1156 = vsel %vm851, %v1154, %v1155
      %v1157 = vrot.slane %v1102, 2
      %v1158 = vsel %vm851, %v1155, %v1157
      %v1159 = vrot.slane %v1103, 2
      %v1160 = vrot.slane %v1104, 2
      %v1161 = vsel %vm851, %v1159, %v1160
      %v1162 = vrot.slane %v1105, 2
      %v1163 = vsel %vm851, %v1160, %v1162
      %v1164 = vrot.slane %v1106, 2
      %v1165 = vrot.slane %v1107, 2
      %v1166 = vsel %vm851, %v1164, %v1165
      %v1167 = vrot.slane %v1108, 2
      %v1168 = vsel %vm851, %v1165, %v1167
      %v1169 = vrot.slane %v1109, 2
      %v1170 = vrot.slane %v1110, 2
      %v1171 = vsel %vm851, %v1169, %v1170
      %v1172 = vrot.slane %v1111, 2
      %v1173 = vsel %vm851, %v1170, %v1172
      %v1174 = vrot.slane %v1112, 2
      %v1175 = vrot.slane %v1113, 2
      %v1176 = vsel %vm851, %v1174, %v1175
      %v1177 = vrot.slane %v1114, 2
      %v1178 = vsel %vm851, %v1175, %v1177
      %v1195 = vadd.f32 %v1070, %v1141
      %v1196 = vadd.f32 %v1071, %v1143
      %v1197 = vadd.f32 %v1072, %v1146
      %v1198 = vadd.f32 %v1073, %v1148
      %v1199 = vadd.f32 %v1074, %v1151
      %v1200 = vadd.f32 %v1075, %v1153
      %v1201 = vadd.f32 %v1076, %v1156
      %v1202 = vadd.f32 %v1077, %v1158
      %v1203 = vadd.f32 %v1078, %v1161
      %v1204 = vadd.f32 %v1079, %v1163
      %v1205 = vadd.f32 %v1080, %v1166
      %v1206 = vadd.f32 %v1081, %v1168
      %v1207 = vadd.f32 %v1082, %v1171
      %v1208 = vadd.f32 %v1083, %v1173
      %v1209 = vadd.f32 %v1084, %v1176
      %v1210 = vadd.f32 %v1085, %v1178
      %v1211 = vld [vmem:[%s3 + $0x6] sm:$0x1]
      %v1212 = vlaneseq
      %v1213 = vshrl.u32 %v1212, 7
      %v1214 = vsub.s32 0, %v1213
      %v1215 = vrot.slane %v1211, %v1214
      %v1216 = vmul.f32 %v617, %v1215
      %v1217 = vmul.f32 %v563, %v1215
      %v1218 = vmul.f32 %v618, %v1215
      %v1219 = vmul.f32 %v566, %v1215
      %v1220 = vmul.f32 %v619, %v1215
      %v1221 = vmul.f32 %v569, %v1215
      %v1222 = vmul.f32 %v620, %v1215
      %v1223 = vmul.f32 %v572, %v1215
      %v1224 = vmul.f32 %v621, %v1215
      %v1225 = vmul.f32 %v575, %v1215
      %v1226 = vmul.f32 %v622, %v1215
      %v1227 = vmul.f32 %v578, %v1215
      %v1228 = vmul.f32 %v623, %v1215
      %v1229 = vmul.f32 %v581, %v1215
      %v1230 = vmul.f32 %v624, %v1215
      %v1231 = vmul.f32 %v584, %v1215
      %v1232 = vadd.f32 %v1195, %v1216
      %v1233 = vadd.f32 %v1196, %v1217
      %v1234 = vadd.f32 %v1197, %v1218
      %v1235 = vadd.f32 %v1198, %v1219
      %v1236 = vadd.f32 %v1199, %v1220
      %v1237 = vadd.f32 %v1200, %v1221
      %v1238 = vadd.f32 %v1201, %v1222
      %v1239 = vadd.f32 %v1202, %v1223
      %v1240 = vadd.f32 %v1203, %v1224
      %v1241 = vadd.f32 %v1204, %v1225
      %v1242 = vadd.f32 %v1205, %v1226
      %v1243 = vadd.f32 %v1206, %v1227
      %v1244 = vadd.f32 %v1207, %v1228
      %v1245 = vadd.f32 %v1208, %v1229
      %v1246 = vadd.f32 %v1209, %v1230
      %v1247 = vadd.f32 %v1210, %v1231
      %v1248 = vld [vmem:[%s3 + $0x7] sm:$0x1]
      %v1249 = vlaneseq
      %v1250 = vshrl.u32 %v1249, 7
      %v1251 = vsub.s32 0, %v1250
      %v1252 = vrot.slane %v1248, %v1251
      %v1253 = vmul.f32 %v617, %v1252
      %v1254 = vmul.f32 %v563, %v1252
      %v1255 = vmul.f32 %v627, %v1252
      %v1256 = vmul.f32 %v618, %v1252
      %v1257 = vmul.f32 %v566, %v1252
      %v1258 = vmul.f32 %v628, %v1252
      %v1259 = vmul.f32 %v619, %v1252
      %v1260 = vmul.f32 %v569, %v1252
      %v1261 = vmul.f32 %v629, %v1252
      %v1262 = vmul.f32 %v620, %v1252
      %v1263 = vmul.f32 %v572, %v1252
      %v1264 = vmul.f32 %v630, %v1252
      %v1265 = vmul.f32 %v621, %v1252
      %v1266 = vmul.f32 %v575, %v1252
      %v1267 = vmul.f32 %v631, %v1252
      %v1268 = vmul.f32 %v622, %v1252
      %v1269 = vmul.f32 %v578, %v1252
      %v1270 = vmul.f32 %v632, %v1252
      %v1271 = vmul.f32 %v623, %v1252
      %v1272 = vmul.f32 %v581, %v1252
      %v1273 = vmul.f32 %v633, %v1252
      %v1274 = vmul.f32 %v624, %v1252
      %v1275 = vmul.f32 %v584, %v1252
      %v1276 = vmul.f32 %v634, %v1252
      %v1301 = vrot.slane %v1253, 1
      %v1302 = vrot.slane %v1254, 1
      %v1303 = vsel %vm725, %v1301, %v1302
      %v1304 = vrot.slane %v1255, 1
      %v1305 = vsel %vm725, %v1302, %v1304
      %v1306 = vrot.slane %v1256, 1
      %v1307 = vrot.slane %v1257, 1
      %v1308 = vsel %vm725, %v1306, %v1307
      %v1309 = vrot.slane %v1258, 1
      %v1310 = vsel %vm725, %v1307, %v1309
      %v1311 = vrot.slane %v1259, 1
      %v1312 = vrot.slane %v1260, 1
      %v1313 = vsel %vm725, %v1311, %v1312
      %v1314 = vrot.slane %v1261, 1
      %v1315 = vsel %vm725, %v1312, %v1314
      %v1316 = vrot.slane %v1262, 1
      %v1317 = vrot.slane %v1263, 1
      %v1318 = vsel %vm725, %v1316, %v1317
      %v1319 = vrot.slane %v1264, 1
      %v1320 = vsel %vm725, %v1317, %v1319
      %v1321 = vrot.slane %v1265, 1
      %v1322 = vrot.slane %v1266, 1
      %v1323 = vsel %vm725, %v1321, %v1322
      %v1324 = vrot.slane %v1267, 1
      %v1325 = vsel %vm725, %v1322, %v1324
      %v1326 = vrot.slane %v1268, 1
      %v1327 = vrot.slane %v1269, 1
      %v1328 = vsel %vm725, %v1326, %v1327
      %v1329 = vrot.slane %v1270, 1
      %v1330 = vsel %vm725, %v1327, %v1329
      %v1331 = vrot.slane %v1271, 1
      %v1332 = vrot.slane %v1272, 1
      %v1333 = vsel %vm725, %v1331, %v1332
      %v1334 = vrot.slane %v1273, 1
      %v1335 = vsel %vm725, %v1332, %v1334
      %v1336 = vrot.slane %v1274, 1
      %v1337 = vrot.slane %v1275, 1
      %v1338 = vsel %vm725, %v1336, %v1337
      %v1339 = vrot.slane %v1276, 1
      %v1340 = vsel %vm725, %v1337, %v1339
      %v1357 = vadd.f32 %v1232, %v1303
      %v1358 = vadd.f32 %v1233, %v1305
      %v1359 = vadd.f32 %v1234, %v1308
      %v1360 = vadd.f32 %v1235, %v1310
      %v1361 = vadd.f32 %v1236, %v1313
      %v1362 = vadd.f32 %v1237, %v1315
      %v1363 = vadd.f32 %v1238, %v1318
      %v1364 = vadd.f32 %v1239, %v1320
      %v1365 = vadd.f32 %v1240, %v1323
      %v1366 = vadd.f32 %v1241, %v1325
      %v1367 = vadd.f32 %v1242, %v1328
      %v1368 = vadd.f32 %v1243, %v1330
      %v1369 = vadd.f32 %v1244, %v1333
      %v1370 = vadd.f32 %v1245, %v1335
      %v1371 = vadd.f32 %v1246, %v1338
      %v1372 = vadd.f32 %v1247, %v1340
      %v1373 = vld [vmem:[%s3 + $0x8] sm:$0x1]
      %v1374 = vlaneseq
      %v1375 = vshrl.u32 %v1374, 7
      %v1376 = vsub.s32 0, %v1375
      %v1377 = vrot.slane %v1373, %v1376
      %v1378 = vmul.f32 %v617, %v1377
      %v1379 = vmul.f32 %v563, %v1377
      %v1380 = vmul.f32 %v627, %v1377
      %v1381 = vmul.f32 %v618, %v1377
      %v1382 = vmul.f32 %v566, %v1377
      %v1383 = vmul.f32 %v628, %v1377
      %v1384 = vmul.f32 %v619, %v1377
      %v1385 = vmul.f32 %v569, %v1377
      %v1386 = vmul.f32 %v629, %v1377
      %v1387 = vmul.f32 %v620, %v1377
      %v1388 = vmul.f32 %v572, %v1377
      %v1389 = vmul.f32 %v630, %v1377
      %v1390 = vmul.f32 %v621, %v1377
      %v1391 = vmul.f32 %v575, %v1377
      %v1392 = vmul.f32 %v631, %v1377
      %v1393 = vmul.f32 %v622, %v1377
      %v1394 = vmul.f32 %v578, %v1377
      %v1395 = vmul.f32 %v632, %v1377
      %v1396 = vmul.f32 %v623, %v1377
      %v1397 = vmul.f32 %v581, %v1377
      %v1398 = vmul.f32 %v633, %v1377
      %v1399 = vmul.f32 %v624, %v1377
      %v1400 = vmul.f32 %v584, %v1377
      %v1401 = vmul.f32 %v634, %v1377
      %v1426 = vrot.slane %v1378, 2
      %v1427 = vrot.slane %v1379, 2
      %v1428 = vsel %vm851, %v1426, %v1427
      %v1429 = vrot.slane %v1380, 2
      %v1430 = vsel %vm851, %v1427, %v1429
      %v1431 = vrot.slane %v1381, 2
      %v1432 = vrot.slane %v1382, 2
      %v1433 = vsel %vm851, %v1431, %v1432
      %v1434 = vrot.slane %v1383, 2
      %v1435 = vsel %vm851, %v1432, %v1434
      %v1436 = vrot.slane %v1384, 2
      %v1437 = vrot.slane %v1385, 2
      %v1438 = vsel %vm851, %v1436, %v1437
      %v1439 = vrot.slane %v1386, 2
      %v1440 = vsel %vm851, %v1437, %v1439
      %v1441 = vrot.slane %v1387, 2
      %v1442 = vrot.slane %v1388, 2
      %v1443 = vsel %vm851, %v1441, %v1442
      %v1444 = vrot.slane %v1389, 2
      %v1445 = vsel %vm851, %v1442, %v1444
      %v1446 = vrot.slane %v1390, 2
      %v1447 = vrot.slane %v1391, 2
      %v1448 = vsel %vm851, %v1446, %v1447
      %v1449 = vrot.slane %v1392, 2
      %v1450 = vsel %vm851, %v1447, %v1449
      %v1451 = vrot.slane %v1393, 2
      %v1452 = vrot.slane %v1394, 2
      %v1453 = vsel %vm851, %v1451, %v1452
      %v1454 = vrot.slane %v1395, 2
      %v1455 = vsel %vm851, %v1452, %v1454
      %v1456 = vrot.slane %v1396, 2
      %v1457 = vrot.slane %v1397, 2
      %v1458 = vsel %vm851, %v1456, %v1457
      %v1459 = vrot.slane %v1398, 2
      %v1460 = vsel %vm851, %v1457, %v1459
      %v1461 = vrot.slane %v1399, 2
      %v1462 = vrot.slane %v1400, 2
      %v1463 = vsel %vm851, %v1461, %v1462
      %v1464 = vrot.slane %v1401, 2
      %v1465 = vsel %vm851, %v1462, %v1464
      %v1482 = vadd.f32 %v1357, %v1428
      %v1483 = vadd.f32 %v1358, %v1430
      %v1484 = vadd.f32 %v1359, %v1433
      %v1485 = vadd.f32 %v1360, %v1435
      %v1486 = vadd.f32 %v1361, %v1438
      %v1487 = vadd.f32 %v1362, %v1440
      %v1488 = vadd.f32 %v1363, %v1443
      %v1489 = vadd.f32 %v1364, %v1445
      %v1490 = vadd.f32 %v1365, %v1448
      %v1491 = vadd.f32 %v1366, %v1450
      %v1492 = vadd.f32 %v1367, %v1453
      %v1493 = vadd.f32 %v1368, %v1455
      %v1494 = vadd.f32 %v1369, %v1458
      %v1495 = vadd.f32 %v1370, %v1460
      %v1496 = vadd.f32 %v1371, %v1463
      %v1497 = vadd.f32 %v1372, %v1465
      %v1498 = vld [vmem:[%s4] sm:$0x1]
      %v1500 = vlaneseq
      %v1501 = vshrl.u32 %v1500, 7
      %v1502 = vsub.s32 0, %v1501
      %v1503 = vrot.slane %v1498, %v1502
      %v1505 = vmul.f32 %v1482, %v1503
      %v1506 = vmul.f32 %v1483, %v1503
      %v1507 = vmul.f32 %v1484, %v1503
      %v1508 = vmul.f32 %v1485, %v1503
      %v1509 = vmul.f32 %v1486, %v1503
      %v1510 = vmul.f32 %v1487, %v1503
      %v1511 = vmul.f32 %v1488, %v1503
      %v1512 = vmul.f32 %v1489, %v1503
      %v1513 = vmul.f32 %v1490, %v1503
      %v1514 = vmul.f32 %v1491, %v1503
      %v1515 = vmul.f32 %v1492, %v1503
      %v1516 = vmul.f32 %v1493, %v1503
      %v1517 = vmul.f32 %v1494, %v1503
      %v1518 = vmul.f32 %v1495, %v1503
      %v1519 = vmul.f32 %v1496, %v1503
      %v1520 = vmul.f32 %v1497, %v1503
      %v1521 = vld [vmem:[%s5] sm:$0x1]
      %v1523 = vlaneseq
      %v1524 = vshrl.u32 %v1523, 7
      %v1525 = vsub.s32 0, %v1524
      %v1526 = vrot.slane %v1521, %v1525
      %v1528 = vadd.f32 %v1505, %v1526
      %v1529 = vadd.f32 %v1506, %v1526
      %v1530 = vadd.f32 %v1507, %v1526
      %v1531 = vadd.f32 %v1508, %v1526
      %v1532 = vadd.f32 %v1509, %v1526
      %v1533 = vadd.f32 %v1510, %v1526
      %v1534 = vadd.f32 %v1511, %v1526
      %v1535 = vadd.f32 %v1512, %v1526
      %v1536 = vadd.f32 %v1513, %v1526
      %v1537 = vadd.f32 %v1514, %v1526
      %v1538 = vadd.f32 %v1515, %v1526
      %v1539 = vadd.f32 %v1516, %v1526
      %v1540 = vadd.f32 %v1517, %v1526
      %v1541 = vadd.f32 %v1518, %v1526
      %v1542 = vadd.f32 %v1519, %v1526
      %v1543 = vadd.f32 %v1520, %v1526
      %vm1544 = vcmp.gt.f32.partialorder %v1528, 0.0
      %vm1545 = vcmp.gt.f32.partialorder %v1529, 0.0
      %vm1546 = vcmp.gt.f32.partialorder %v1530, 0.0
      %vm1547 = vcmp.gt.f32.partialorder %v1531, 0.0
      %vm1548 = vcmp.gt.f32.partialorder %v1532, 0.0
      %vm1549 = vcmp.gt.f32.partialorder %v1533, 0.0
      %vm1550 = vcmp.gt.f32.partialorder %v1534, 0.0
      %vm1551 = vcmp.gt.f32.partialorder %v1535, 0.0
      %vm1552 = vcmp.gt.f32.partialorder %v1536, 0.0
      %vm1553 = vcmp.gt.f32.partialorder %v1537, 0.0
      %vm1554 = vcmp.gt.f32.partialorder %v1538, 0.0
      %vm1555 = vcmp.gt.f32.partialorder %v1539, 0.0
      %vm1556 = vcmp.gt.f32.partialorder %v1540, 0.0
      %vm1557 = vcmp.gt.f32.partialorder %v1541, 0.0
      %vm1558 = vcmp.gt.f32.partialorder %v1542, 0.0
      %vm1559 = vcmp.gt.f32.partialorder %v1543, 0.0
      %v1560 = vmul.f32 %v1528, 0.01
      %v1561 = vmul.f32 %v1529, 0.01
      %v1562 = vmul.f32 %v1530, 0.01
      %v1563 = vmul.f32 %v1531, 0.01
      %v1564 = vmul.f32 %v1532, 0.01
      %v1565 = vmul.f32 %v1533, 0.01
      %v1566 = vmul.f32 %v1534, 0.01
      %v1567 = vmul.f32 %v1535, 0.01
      %v1568 = vmul.f32 %v1536, 0.01
      %v1569 = vmul.f32 %v1537, 0.01
      %v1570 = vmul.f32 %v1538, 0.01
      %v1571 = vmul.f32 %v1539, 0.01
      %v1572 = vmul.f32 %v1540, 0.01
      %v1573 = vmul.f32 %v1541, 0.01
      %v1574 = vmul.f32 %v1542, 0.01
      %v1575 = vmul.f32 %v1543, 0.01
      %v1576 = vsel %vm1544, %v1528, %v1560
      %v1577 = vsel %vm1545, %v1529, %v1561
      %v1578 = vsel %vm1546, %v1530, %v1562
      %v1579 = vsel %vm1547, %v1531, %v1563
      %v1580 = vsel %vm1548, %v1532, %v1564
      %v1581 = vsel %vm1549, %v1533, %v1565
      %v1582 = vsel %vm1550, %v1534, %v1566
      %v1583 = vsel %vm1551, %v1535, %v1567
      %v1584 = vsel %vm1552, %v1536, %v1568
      %v1585 = vsel %vm1553, %v1537, %v1569
      %v1586 = vsel %vm1554, %v1538, %v1570
      %v1587 = vsel %vm1555, %v1539, %v1571
      %v1588 = vsel %vm1556, %v1540, %v1572
      %v1589 = vsel %vm1557, %v1541, %v1573
      %v1590 = vsel %vm1558, %v1542, %v1574
      %v1591 = vsel %vm1559, %v1543, %v1575
      %v1592 = vpack.c.bf16 %v1577, %v1576
      %v1593 = vpack.c.bf16 %v1579, %v1578
      %v1594 = vpack.c.bf16 %v1581, %v1580
      %v1595 = vpack.c.bf16 %v1583, %v1582
      %v1596 = vpack.c.bf16 %v1585, %v1584
      %v1597 = vpack.c.bf16 %v1587, %v1586
      %v1598 = vpack.c.bf16 %v1589, %v1588
      %v1599 = vpack.c.bf16 %v1591, %v1590
      %v1600 = vld [vmem:[%s6] sm:$0xf]
      %vm1601 = vcmask 64512
      %v1603 = vsel %vm1601, %v1592, 0
      %v1606 = vsel %vm1601, %v1593, 0
      %v1609 = vsel %vm1601, %v1594, 0
      %v1612 = vsel %vm1601, %v1595, 0
      %v1615 = vsel %vm1601, %v1596, 0
      %v1618 = vsel %vm1601, %v1597, 0
      %v1621 = vsel %vm1601, %v1598, 0
      %v1624 = vsel %vm1601, %v1599, 0
      %vm1626 = vcmask 1043456
      %v1628 = vsel %vm1626, %v1600, 0
      %1630 = vmatprep.subr.bf16.mxu0 0
      %1631 = vmatpush1.bf16.msra.mxu0 %v1628
      %1632 = vmatprep.subr.bf16.mxu0 0
      %1633 = vmatpush1.bf16.msra.mxu0 0
      %1634 = vmatprep.subr.bf16.mxu0 0
      %1635 = vmatpush1.bf16.msra.mxu0 0
      %1636 = vmatprep.subr.bf16.mxu0 0
      %1637 = vmatpush1.bf16.msra.mxu0 0
      %1638 = vmatprep.subr.bf16.mxu0 0
      %1639 = vmatpush1.bf16.msra.mxu0 0
      %1640 = vmatprep.subr.bf16.mxu0 0
      %1641 = vmatpush1.bf16.msra.mxu0 0
      %1642 = vmatprep.subr.bf16.mxu0 0
      %1643 = vmatpush1.bf16.msra.mxu0 0
      %1644 = vmatprep.subr.bf16.mxu0 0
      %1645 = vmatpush1.bf16.msra.mxu0 0
      %1646 = vmatprep.subr.bf16.mxu0 0
      %1647 = vmatpush1.bf16.msra.mxu0 0
      %1648 = vmatprep.subr.bf16.mxu0 0
      %1649 = vmatpush1.bf16.msra.mxu0 0
      %1650 = vmatprep.subr.bf16.mxu0 0
      %1651 = vmatpush1.bf16.msra.mxu0 0
      %1652 = vmatprep.subr.bf16.mxu0 0
      %1653 = vmatpush1.bf16.msra.mxu0 0
      %1654 = vmatprep.subr.bf16.mxu0 0
      %1655 = vmatpush1.bf16.msra.mxu0 0
      %1656 = vmatprep.subr.bf16.mxu0 0
      %1657 = vmatpush1.bf16.msra.mxu0 0
      %1658 = vmatprep.subr.bf16.mxu0 0
      %1659 = vmatpush1.bf16.msra.mxu0 0
      %1660 = vmatprep.subr.bf16.mxu0 0
      %1661 = vmatpush1.bf16.msra.mxu0 0
      %1662 = vmatprep.mubr.bf16.mxu0 0
      %1663 = vmatmul.mubr.bf16.gmra.mrb[0].mxu0 %v1603
      %v1664 = vpop.f32.mrb[0].mxu0
      %v1665 = vadd.f32 0.0, %v1664
      %v1666 = vpop.f32.mrb[0].mxu0
      %v1667 = vpop.f32.mrb[0].mxu0
      %v1668 = vadd.f32 0.0, %v1667
      %v1669 = vpop.f32.mrb[0].mxu0
      %1670 = vmatprep.mubr.bf16.mxu0 0
      %1671 = vmatmul.mubr.bf16.gmra.mrb[0].mxu0 %v1606
      %v1672 = vpop.f32.mrb[0].mxu0
      %v1673 = vadd.f32 0.0, %v1672
      %v1674 = vpop.f32.mrb[0].mxu0
      %v1675 = vpop.f32.mrb[0].mxu0
      %v1676 = vadd.f32 0.0, %v1675
      %v1677 = vpop.f32.mrb[0].mxu0
      %1678 = vmatprep.mubr.bf16.mxu0 0
      %1679 = vmatmul.mubr.bf16.gmra.mrb[0].mxu0 %v1609
      %v1680 = vpop.f32.mrb[0].mxu0
      %v1681 = vadd.f32 0.0, %v1680
      %v1682 = vpop.f32.mrb[0].mxu0
      %v1683 = vpop.f32.mrb[0].mxu0
      %v1684 = vadd.f32 0.0, %v1683
      %v1685 = vpop.f32.mrb[0].mxu0
      %1686 = vmatprep.mubr.bf16.mxu0 0
      %1687 = vmatmul.mubr.bf16.gmra.mrb[0].mxu0 %v1612
      %v1688 = vpop.f32.mrb[0].mxu0
      %v1689 = vadd.f32 0.0, %v1688
      %v1690 = vpop.f32.mrb[0].mxu0
      %v1691 = vpop.f32.mrb[0].mxu0
      %v1692 = vadd.f32 0.0, %v1691
      %v1693 = vpop.f32.mrb[0].mxu0
      %1694 = vmatprep.mubr.bf16.mxu0 0
      %1695 = vmatmul.mubr.bf16.gmra.mrb[0].mxu0 %v1615
      %v1696 = vpop.f32.mrb[0].mxu0
      %v1697 = vadd.f32 0.0, %v1696
      %v1698 = vpop.f32.mrb[0].mxu0
      %v1699 = vpop.f32.mrb[0].mxu0
      %v1700 = vadd.f32 0.0, %v1699
      %v1701 = vpop.f32.mrb[0].mxu0
      %1702 = vmatprep.mubr.bf16.mxu0 0
      %1703 = vmatmul.mubr.bf16.gmra.mrb[0].mxu0 %v1618
      %v1704 = vpop.f32.mrb[0].mxu0
      %v1705 = vadd.f32 0.0, %v1704
      %v1706 = vpop.f32.mrb[0].mxu0
      %v1707 = vpop.f32.mrb[0].mxu0
      %v1708 = vadd.f32 0.0, %v1707
      %v1709 = vpop.f32.mrb[0].mxu0
      %1710 = vmatprep.mubr.bf16.mxu0 0
      %1711 = vmatmul.mubr.bf16.gmra.mrb[0].mxu0 %v1621
      %v1712 = vpop.f32.mrb[0].mxu0
      %v1713 = vadd.f32 0.0, %v1712
      %v1714 = vpop.f32.mrb[0].mxu0
      %v1715 = vpop.f32.mrb[0].mxu0
      %v1716 = vadd.f32 0.0, %v1715
      %v1717 = vpop.f32.mrb[0].mxu0
      %1718 = vmatprep.mubr.bf16.mxu0 0
      %1719 = vmatmul.mubr.bf16.gmra.mrb[0].mxu0 %v1624
      %v1720 = vpop.f32.mrb[0].mxu0
      %v1721 = vadd.f32 0.0, %v1720
      %v1722 = vpop.f32.mrb[0].mxu0
      %v1723 = vpop.f32.mrb[0].mxu0
      %v1724 = vadd.f32 0.0, %v1723
      %v1725 = vpop.f32.mrb[0].mxu0
      %1726 = vdwg.mxu0
      %v1727 = vld [vmem:[%s7] sm:$0x1]
      %v1729 = vlaneseq
      %v1730 = vshrl.u32 %v1729, 7
      %v1731 = vsub.s32 0, %v1730
      %v1732 = vrot.slane %v1727, %v1731
      %v1734 = vmul.f32 %v1665, %v1732
      %v1735 = vmul.f32 %v1668, %v1732
      %v1736 = vmul.f32 %v1673, %v1732
      %v1737 = vmul.f32 %v1676, %v1732
      %v1738 = vmul.f32 %v1681, %v1732
      %v1739 = vmul.f32 %v1684, %v1732
      %v1740 = vmul.f32 %v1689, %v1732
      %v1741 = vmul.f32 %v1692, %v1732
      %v1742 = vmul.f32 %v1697, %v1732
      %v1743 = vmul.f32 %v1700, %v1732
      %v1744 = vmul.f32 %v1705, %v1732
      %v1745 = vmul.f32 %v1708, %v1732
      %v1746 = vmul.f32 %v1713, %v1732
      %v1747 = vmul.f32 %v1716, %v1732
      %v1748 = vmul.f32 %v1721, %v1732
      %v1749 = vmul.f32 %v1724, %v1732
      %v1750 = vld [vmem:[%s8] sm:$0x1]
      %v1752 = vlaneseq
      %v1753 = vshrl.u32 %v1752, 7
      %v1754 = vsub.s32 0, %v1753
      %v1755 = vrot.slane %v1750, %v1754
      %v1757 = vadd.f32 %v1734, %v1755
      %v1758 = vadd.f32 %v1735, %v1755
      %v1759 = vadd.f32 %v1736, %v1755
      %v1760 = vadd.f32 %v1737, %v1755
      %v1761 = vadd.f32 %v1738, %v1755
      %v1762 = vadd.f32 %v1739, %v1755
      %v1763 = vadd.f32 %v1740, %v1755
      %v1764 = vadd.f32 %v1741, %v1755
      %v1765 = vadd.f32 %v1742, %v1755
      %v1766 = vadd.f32 %v1743, %v1755
      %v1767 = vadd.f32 %v1744, %v1755
      %v1768 = vadd.f32 %v1745, %v1755
      %v1769 = vadd.f32 %v1746, %v1755
      %v1770 = vadd.f32 %v1747, %v1755
      %v1771 = vadd.f32 %v1748, %v1755
      %v1772 = vadd.f32 %v1749, %v1755
      %vm1773 = vcmp.gt.f32.partialorder %v1757, 0.0
      %vm1774 = vcmp.gt.f32.partialorder %v1758, 0.0
      %vm1775 = vcmp.gt.f32.partialorder %v1759, 0.0
      %vm1776 = vcmp.gt.f32.partialorder %v1760, 0.0
      %vm1777 = vcmp.gt.f32.partialorder %v1761, 0.0
      %vm1778 = vcmp.gt.f32.partialorder %v1762, 0.0
      %vm1779 = vcmp.gt.f32.partialorder %v1763, 0.0
      %vm1780 = vcmp.gt.f32.partialorder %v1764, 0.0
      %vm1781 = vcmp.gt.f32.partialorder %v1765, 0.0
      %vm1782 = vcmp.gt.f32.partialorder %v1766, 0.0
      %vm1783 = vcmp.gt.f32.partialorder %v1767, 0.0
      %vm1784 = vcmp.gt.f32.partialorder %v1768, 0.0
      %vm1785 = vcmp.gt.f32.partialorder %v1769, 0.0
      %vm1786 = vcmp.gt.f32.partialorder %v1770, 0.0
      %vm1787 = vcmp.gt.f32.partialorder %v1771, 0.0
      %vm1788 = vcmp.gt.f32.partialorder %v1772, 0.0
      %v1789 = vmul.f32 %v1757, 0.01
      %v1790 = vmul.f32 %v1758, 0.01
      %v1791 = vmul.f32 %v1759, 0.01
      %v1792 = vmul.f32 %v1760, 0.01
      %v1793 = vmul.f32 %v1761, 0.01
      %v1794 = vmul.f32 %v1762, 0.01
      %v1795 = vmul.f32 %v1763, 0.01
      %v1796 = vmul.f32 %v1764, 0.01
      %v1797 = vmul.f32 %v1765, 0.01
      %v1798 = vmul.f32 %v1766, 0.01
      %v1799 = vmul.f32 %v1767, 0.01
      %v1800 = vmul.f32 %v1768, 0.01
      %v1801 = vmul.f32 %v1769, 0.01
      %v1802 = vmul.f32 %v1770, 0.01
      %v1803 = vmul.f32 %v1771, 0.01
      %v1804 = vmul.f32 %v1772, 0.01
      %v1805 = vsel %vm1773, %v1757, %v1789
      %v1806 = vsel %vm1774, %v1758, %v1790
      %v1807 = vsel %vm1775, %v1759, %v1791
      %v1808 = vsel %vm1776, %v1760, %v1792
      %v1809 = vsel %vm1777, %v1761, %v1793
      %v1810 = vsel %vm1778, %v1762, %v1794
      %v1811 = vsel %vm1779, %v1763, %v1795
      %v1812 = vsel %vm1780, %v1764, %v1796
      %v1813 = vsel %vm1781, %v1765, %v1797
      %v1814 = vsel %vm1782, %v1766, %v1798
      %v1815 = vsel %vm1783, %v1767, %v1799
      %v1816 = vsel %vm1784, %v1768, %v1800
      %v1817 = vsel %vm1785, %v1769, %v1801
      %v1818 = vsel %vm1786, %v1770, %v1802
      %v1819 = vsel %vm1787, %v1771, %v1803
      %v1820 = vsel %vm1788, %v1772, %v1804
      %1821 = vst.msk [vmem:[%s499] sm:$0xff] %vm1601, %v1805
      %1822 = vst.msk [vmem:[%s499 + $0x8] sm:$0xff] %vm1601, %v1806
      %1823 = vst.msk [vmem:[%s499 + $0x10] sm:$0xff] %vm1601, %v1807
      %1824 = vst.msk [vmem:[%s499 + $0x18] sm:$0xff] %vm1601, %v1808
      %1825 = vst.msk [vmem:[%s499 + $0x20] sm:$0xff] %vm1601, %v1809
      %1826 = vst.msk [vmem:[%s499 + $0x28] sm:$0xff] %vm1601, %v1810
      %1827 = vst.msk [vmem:[%s499 + $0x30] sm:$0xff] %vm1601, %v1811
      %1828 = vst.msk [vmem:[%s499 + $0x38] sm:$0xff] %vm1601, %v1812
      %1829 = vst.msk [vmem:[%s499 + $0x40] sm:$0xff] %vm1601, %v1813
      %1830 = vst.msk [vmem:[%s499 + $0x48] sm:$0xff] %vm1601, %v1814
      %1831 = vst.msk [vmem:[%s499 + $0x50] sm:$0xff] %vm1601, %v1815
      %1832 = vst.msk [vmem:[%s499 + $0x58] sm:$0xff] %vm1601, %v1816
      %1833 = vst.msk [vmem:[%s499 + $0x60] sm:$0xff] %vm1601, %v1817
      %1834 = vst.msk [vmem:[%s499 + $0x68] sm:$0xff] %vm1601, %v1818
      %1835 = vst.msk [vmem:[%s499 + $0x70] sm:$0xff] %vm1601, %v1819
      %1836 = vst.msk [vmem:[%s499 + $0x78] sm:$0xff] %vm1601, %v1820
      %s1837 = smul.u32 8, %s25
      %p1838 = scmp.lt.s32.totalorder %s24, 1
      %s1839 = scalar_select %p1838, %s24, 1
      %p1840 = scmp.lt.s32.totalorder %s1837, 15
      %s1841 = scalar_select %p1840, %s1837, 15
      %s1842 = smul.addr %s1841, 2
      %s1843 = smul.addr %s1839, 32
      %s1844 = sadd.s32 %s1842, %s1843
      %s1845 = smul.addr %s1844, 8
      %s1846 = scalar_lea.vmem %s9, %s1845
      // Predicated region
      $region57: #{_lambda_.4} parent=55 // pred_check
        %p1847 = pneg %p278
      $region58: #{_lambda_.4} parent=55 // pred_check_branch
        %1849 = sbr.rel (%p1847) target = $region60
      $region59: #{_lambda_.4} parent=55 // pred_region
        %s1850 = smul.u32 8, %s25
      $region60: #{_lambda_.4} parent=55 // pred_fallthru
        _
    $region56: #{_lambda_.4} parent=5 // pred_fallthru
      _
    %p1851 = scmp.le.s32.totalorder 2, %s15
    // Predicated region
    $region61: #{_lambda_.4} parent=5 // pred_check
      %p1852 = pneg %p1851
    $region62: #{_lambda_.4} parent=5 // pred_check_branch
      %1854 = sbr.rel (%p1852) target = $region64
    $region63: #{_lambda_.4} parent=5 // pred_region
      %s1855 = ssub.s32 %s15, 2
      // Predicated region
      $region65: #{_lambda_.4} parent=63 // pred_check
        %p1856 = pneg %p284
      $region66: #{_lambda_.4} parent=63 // pred_check_branch
        %1858 = sbr.rel (%p1856) target = $region68
      $region67: #{_lambda_.4} parent=63 // pred_region
        %s1859 = smul.u32 8, %s27
        %p1860 = scmp.lt.s32.totalorder %s26, 1
        %s1861 = scalar_select %p1860, %s26, 1
        %p1862 = scmp.lt.s32.totalorder %s1859, 15
        %s1863 = scalar_select %p1862, %s1859, 15
        %s1864 = smul.addr %s1863, 2
        %s1865 = smul.addr %s1861, 32
        %s1866 = sadd.s32 %s1864, %s1865
        %s1867 = smul.addr %s1866, 8
        %s1868 = scalar_lea.vmem %s9, %s1867
      $region68: #{_lambda_.4} parent=63 // pred_fallthru
        _
    $region64: #{_lambda_.4} parent=5 // pred_fallthru
      _
  $region6: #{_lambda_.4} parent=0 // loop_footer
    %s19 = sadd.s32 1, %s15
  $region7: #{_lambda_.4} parent=0 // loop_footer_branch
    %14 = sbr.rel target = $region3
  $region8: #{_lambda_.4} parent=0 // loop_exit
    _

</llo_original>
